<compile_context>
chip_gen: v7x
topology: tpu7x:2x2x1
jax: 0.10.0
libtpu: 0.0.40
codegen_flags: <defaults>
</compile_context>

<pallas_src>
import functools

import jax
import jax.numpy as jnp
from jax.experimental import pallas as pl
from jax.experimental.pallas import tpu as pltpu


def _round_up(x, m):
    return ((x + m - 1) // m) * m


def _mosaic_params(**kwargs):
    # Small compatibility shim (newer jax: CompilerParams; older: TPUCompilerParams).
    cls = getattr(pltpu, "CompilerParams", None) or getattr(pltpu, "TPUCompilerParams")
    return cls(**kwargs)


# ---------------------------------------------------------------------------
# Pallas kernels
# ---------------------------------------------------------------------------
def _conv_relu_pool_kernel(p_ref, w_ref, b_ref, o_ref, *, tm):
    """Fused conv-as-matmul + 2x2 max-pool + bias + ReLU for one M-tile.

    p_ref: (4*tm, K) bf16 im2col patches; rows [p*tm:(p+1)*tm] hold pool phase p
           for the same tm pool windows.
    w_ref: (K, Cout) bf16.  b_ref: (1, Cout) f32.  o_ref: (tm, Cout) f32.
    """
    # One long MXU push for all 4 phases of this tile.
    y = jnp.dot(p_ref[...], w_ref[...], preferred_element_type=jnp.float32)
    # Max over the 4 pool phases (aligned, contiguous row blocks), then bias+ReLU once.
    m = jnp.maximum(
        jnp.maximum(y[0 * tm:1 * tm], y[1 * tm:2 * tm]),
        jnp.maximum(y[2 * tm:3 * tm], y[3 * tm:4 * tm]),
    )
    o_ref[...] = jnp.maximum(m + b_ref[...], 0.0).astype(o_ref.dtype)


def _linear_kernel(x_ref, w_ref, b_ref, o_ref):
    """o = x @ w + b (fc layer), f32."""
    o_ref[...] = (
        jnp.dot(x_ref[...], w_ref[...], preferred_element_type=jnp.float32)
        + b_ref[...]
    ).astype(o_ref.dtype)


# ---------------------------------------------------------------------------
# Layer wrappers
# ---------------------------------------------------------------------------
def conv_relu_pool(x_nhwc, w_oihw, b, *, tile_m=256):
    """x_nhwc: (B,H,W,Cin); w_oihw: (Cout,Cin,3,3) torch layout; b: (Cout,)."""
    B, H, W, Cin = x_nhwc.shape
    Cout = w_oihw.shape[0]
    Ho, Wo = H // 2, W // 2
    K = Cin * 9
    M = B * Ho * Wo

    # im2col (wrapper-side XLA; see TODO at top of file).
    xp = jnp.pad(x_nhwc, ((0, 0), (1, 1), (1, 1), (0, 0)))
    cols = jnp.stack(
        [xp[:, ky:ky + H, kx:kx + W, :] for ky in range(3) for kx in range(3)],
        axis=-1,
    ).reshape(B, H, W, K)  # feature index = ci*9 + ky*3 + kx (matches torch flatten)

    # 4 pool-window phases, each (M, K) with identical row order m = b*Ho*Wo + ho*Wo + wo.
    phases = jnp.stack(
        [cols[:, py::2, px::2, :].reshape(M, K) for py in range(2) for px in range(2)],
        axis=0,
    )  # (4, M, K)

    # M-tiling: TM multiple of 8, M padded to whole tiles (review correctness note).
    tm = min(tile_m, _round_up(M, 8))
    nt = pl.cdiv(M, tm)
    mp = nt * tm
    phases = jnp.pad(phases, ((0, 0), (0, mp - M), (0, 0)))
    # Tile-interleave so each grid step sees all 4 phases of its tm pool windows:
    # row index = t*(4*tm) + phase*tm + r.
    patches = (
        jnp.transpose(phases.reshape(4, nt, tm, K), (1, 0, 2, 3))
        .reshape(nt * 4 * tm, K)
        .astype(jnp.bfloat16)
    )

    w_mat = w_oihw.reshape(Cout, K).T.astype(jnp.bfloat16)  # (K, Cout)
    b_mat = b.reshape(1, Cout).astype(jnp.float32)

    kernel = functools.partial(_conv_relu_pool_kernel, tm=tm)
    out = pl.pallas_call(
        kernel,
        grid=(nt,),
        in_specs=[
            pl.BlockSpec((4 * tm, K), lambda i: (i, 0)),   # per-tile patches
            pl.BlockSpec((K, Cout), lambda i: (0, 0)),     # weights (resident)
            pl.BlockSpec((1, Cout), lambda i: (0, 0)),     # bias (resident)
        ],
        out_specs=pl.BlockSpec((tm, Cout), lambda i: (i, 0)),
        out_shape=jax.ShapeDtypeStruct((mp, Cout), jnp.float32),
        compiler_params=_mosaic_params(dimension_semantics=("parallel",)),
    )(patches, w_mat, b_mat)

    return out[:M].reshape(B, Ho, Wo, Cout)


def linear(x, w_t, b, *, tile_b=512):
    """x: (B,F) f32, w_t: (F,N) f32, b: (N,)."""
    B, F = x.shape
    N = w_t.shape[1]
    tb = min(tile_b, _round_up(B, 8))
    nb = pl.cdiv(B, tb)
    Bp = nb * tb
    xpad = jnp.pad(x, ((0, Bp - B), (0, 0)))
    out = pl.pallas_call(
        _linear_kernel,
        grid=(nb,),
        in_specs=[
            pl.BlockSpec((tb, F), lambda i: (i, 0)),
            pl.BlockSpec((F, N), lambda i: (0, 0)),
            pl.BlockSpec((1, N), lambda i: (0, 0)),
        ],
        out_specs=pl.BlockSpec((tb, N), lambda i: (i, 0)),
        out_shape=jax.ShapeDtypeStruct((Bp, N), jnp.float32),
        compiler_params=_mosaic_params(dimension_semantics=("parallel",)),
    )(xpad, w_t, b.reshape(1, N))
    return out[:B]


def cnn_forward(x_nchw, params):
    x = jnp.transpose(x_nchw, (0, 2, 3, 1))                      # NCHW -> NHWC
    h1 = conv_relu_pool(x, params["w1"], params["b1"])           # (B,14,14,32)
    h2 = conv_relu_pool(h1, params["w2"], params["b2"])          # (B, 7, 7,64)
    # No activation-side transpose: flatten NHWC directly and permute the FC
    # weight (weight-side, one-time) to match torch's NCHW flatten order.
    B = h2.shape[0]
    flat = h2.reshape(B, -1)                                     # (B, 7*7*64) in (h,w,c) order
    wfc_nhwc = (
        params["wfc"].reshape(10, 64, 7, 7)                      # (n, c, h, w)
        .transpose(2, 3, 1, 0)                                   # (h, w, c, n)
        .reshape(7 * 7 * 64, 10)
    )
    return linear(flat, wfc_nhwc, params["bfc"])                 # (B, 10)


# ---------------------------------------------------------------------------
# Pure-JAX reference (correctness check only)
# ---------------------------------------------------------------------------
def reference_forward(x_nchw, params):
    def conv_block(x, w, b):
        y = jax.lax.conv_general_dilated(
            x, w, window_strides=(1, 1), padding=((1, 1), (1, 1)),
            dimension_numbers=("NCHW", "OIHW", "NCHW"))
        y = jax.nn.relu(y + b[None, :, None, None])
        return jax.lax.reduce_window(
            y, -jnp.inf, jax.lax.max, (1, 1, 2, 2), (1, 1, 2, 2), "VALID")

    h = conv_block(x_nchw, params["w1"], params["b1"])
    h = conv_block(h, params["w2"], params["b2"])
    flat = h.reshape(h.shape[0], -1)
    return flat @ params["wfc"].T + params["bfc"]


# ---------------------------------------------------------------------------
if __name__ == "__main__":
    key = jax.random.PRNGKey(0)
    kx, k1, k2, k3, k4, k5, k6 = jax.random.split(key, 7)

    # Deterministic synthetic parameters (shapes follow the torch module).
    params = {
        "w1": jax.random.normal(k1, (32, 1, 3, 3), jnp.float32) / 3.0,
        "b1": jax.random.normal(k2, (32,), jnp.float32) * 0.1,
        "w2": jax.random.normal(k3, (64, 32, 3, 3), jnp.float32) / jnp.sqrt(32.0 * 9.0),
        "b2": jax.random.normal(k4, (64,), jnp.float32) * 0.1,
        "wfc": jax.random.normal(k5, (10, 7 * 7 * 64), jnp.float32)
               * jnp.sqrt(2.0 / (7 * 7 * 64 + 10)),
        "bfc": jax.random.normal(k6, (10,), jnp.float32) * 0.1,
    }

    # Input implied by the forward pass (fc expects 7*7*64 -> 28x28 spatial, Cin=1).
    x = jax.random.normal(kx, (2, 1, 28, 28), jnp.float32)

    fwd = jax.jit(cnn_forward)
    out = jax.block_until_ready(fwd(x, params))
    assert out.shape == (2, 10) and out.dtype == jnp.float32

    ref = jax.block_until_ready(reference_forward(x, params))
    max_err = float(jnp.max(jnp.abs(out - ref)))
    # bf16 MXU inputs (f32 accumulate) in the conv layers => slightly looser
    # tolerance than a pure-f32 comparison.
    assert max_err < 5e-2, f"mismatch vs reference: {max_err}"

    print("KERNEL_OK")
</pallas_src>

<mosaic_0001>
module attributes {stable_mosaic.version = 11 : i64} {
  func.func @_conv_relu_pool_kernel(%arg0: i32, %arg1: memref<1024x9xbf16, #tpu.memory_space<vmem>>, %arg2: memref<9x32xbf16, #tpu.memory_space<vmem>>, %arg3: memref<1x32xf32, #tpu.memory_space<vmem>>, %arg4: memref<256x32xf32, #tpu.memory_space<vmem>>) attributes {dimension_semantics = [#tpu.dimension_semantics<parallel>], iteration_bounds = array<i64: 2>, scalar_prefetch = 0 : i64, scratch_operands = 0 : i64, tpu.core_type = #tpu.core_type<tc>, window_params = [{transform_indices = @transform_0, window_bounds = array<i64: 1024, 9>}, {pipeline_mode = #tpu.pipeline_mode<synchronous>, transform_indices = @transform_1, window_bounds = array<i64: 9, 32>}, {pipeline_mode = #tpu.pipeline_mode<synchronous>, transform_indices = @transform_2, window_bounds = array<i64: 1, 32>}, {transform_indices = @transform_3, window_bounds = array<i64: 256, 32>}]} {
    %c0 = arith.constant 0 : index
    %c0_0 = arith.constant 0 : index
    %0 = vector.load %arg1[%c0, %c0_0] : memref<1024x9xbf16, #tpu.memory_space<vmem>>, vector<1024x9xbf16>
    %c0_1 = arith.constant 0 : index
    %c0_2 = arith.constant 0 : index
    %1 = vector.load %arg2[%c0_1, %c0_2] : memref<9x32xbf16, #tpu.memory_space<vmem>>, vector<9x32xbf16>
    %cst = arith.constant dense<0.000000e+00> : vector<1024x32xf32>
    %2 = tpu.matmul %0, %1, %cst {dimension_numbers = #tpu.dot_dimension_numbers<[1], [0], [0], [1], [0, 0, 1, 1], [], []>} : vector<1024x9xbf16>, vector<9x32xbf16>, vector<1024x32xf32> -> vector<1024x32xf32>
    %3 = vector.extract_strided_slice %2 {offsets = [0, 0], sizes = [256, 32], strides = [1, 1]} : vector<1024x32xf32> to vector<256x32xf32>
    %4 = vector.extract_strided_slice %2 {offsets = [256, 0], sizes = [256, 32], strides = [1, 1]} : vector<1024x32xf32> to vector<256x32xf32>
    %5 = arith.maximumf %3, %4 : vector<256x32xf32>
    %6 = vector.extract_strided_slice %2 {offsets = [512, 0], sizes = [256, 32], strides = [1, 1]} : vector<1024x32xf32> to vector<256x32xf32>
    %7 = vector.extract_strided_slice %2 {offsets = [768, 0], sizes = [256, 32], strides = [1, 1]} : vector<1024x32xf32> to vector<256x32xf32>
    %8 = arith.maximumf %6, %7 : vector<256x32xf32>
    %9 = arith.maximumf %5, %8 : vector<256x32xf32>
    %c0_3 = arith.constant 0 : index
    %c0_4 = arith.constant 0 : index
    %10 = vector.load %arg3[%c0_3, %c0_4] : memref<1x32xf32, #tpu.memory_space<vmem>>, vector<1x32xf32>
    %11 = vector.broadcast %10 : vector<1x32xf32> to vector<256x32xf32>
    %12 = arith.addf %9, %11 : vector<256x32xf32>
    %cst_5 = arith.constant 0.000000e+00 : f32
    %13 = vector.broadcast %cst_5 : f32 to vector<256x32xf32>
    %14 = arith.maximumf %12, %13 : vector<256x32xf32>
    %c0_6 = arith.constant 0 : index
    %c0_7 = arith.constant 0 : index
    %15 = vector.load %arg4[%c0_6, %c0_7] : memref<256x32xf32, #tpu.memory_space<vmem>>, vector<256x32xf32>
    tpu.vector_store %arg4[%c0_6, %c0_7], %14 {strides = array<i32>} : memref<256x32xf32, #tpu.memory_space<vmem>>, vector<256x32xf32>,
    return
  }
  func.func @transform_0(%arg0: i32) -> (i32, i32) {
    %c0_i32 = arith.constant 0 : i32
    %c0_i32_0 = arith.constant 0 : i32
    return %arg0, %c0_i32 : i32, i32
  }
  func.func @transform_1(%arg0: i32) -> (i32, i32) {
    %c0_i32 = arith.constant 0 : i32
    %c0_i32_0 = arith.constant 0 : i32
    %c0_i32_1 = arith.constant 0 : i32
    return %c0_i32, %c0_i32_0 : i32, i32
  }
  func.func @transform_2(%arg0: i32) -> (i32, i32) {
    %c0_i32 = arith.constant 0 : i32
    %c0_i32_0 = arith.constant 0 : i32
    %c0_i32_1 = arith.constant 0 : i32
    return %c0_i32, %c0_i32_0 : i32, i32
  }
  func.func @transform_3(%arg0: i32) -> (i32, i32) {
    %c0_i32 = arith.constant 0 : i32
    %c0_i32_0 = arith.constant 0 : i32
    return %arg0, %c0_i32 : i32, i32
  }
}

module attributes {stable_mosaic.version = 11 : i64} {
  func.func @_conv_relu_pool_kernel(%arg0: i32, %arg1: memref<416x288xbf16, #tpu.memory_space<vmem>>, %arg2: memref<288x64xbf16, #tpu.memory_space<vmem>>, %arg3: memref<1x64xf32, #tpu.memory_space<vmem>>, %arg4: memref<104x64xf32, #tpu.memory_space<vmem>>) attributes {dimension_semantics = [#tpu.dimension_semantics<parallel>], iteration_bounds = array<i64: 1>, scalar_prefetch = 0 : i64, scratch_operands = 0 : i64, tpu.core_type = #tpu.core_type<tc>, window_params = [{transform_indices = @transform_0, window_bounds = array<i64: 416, 288>}, {pipeline_mode = #tpu.pipeline_mode<synchronous>, transform_indices = @transform_1, window_bounds = array<i64: 288, 64>}, {pipeline_mode = #tpu.pipeline_mode<synchronous>, transform_indices = @transform_2, window_bounds = array<i64: 1, 64>}, {transform_indices = @transform_3, window_bounds = array<i64: 104, 64>}]} {
    %c0 = arith.constant 0 : index
    %c0_0 = arith.constant 0 : index
    %0 = vector.load %arg1[%c0, %c0_0] : memref<416x288xbf16, #tpu.memory_space<vmem>>, vector<416x288xbf16>
    %c0_1 = arith.constant 0 : index
    %c0_2 = arith.constant 0 : index
    %1 = vector.load %arg2[%c0_1, %c0_2] : memref<288x64xbf16, #tpu.memory_space<vmem>>, vector<288x64xbf16>
    %cst = arith.constant dense<0.000000e+00> : vector<416x64xf32>
    %2 = tpu.matmul %0, %1, %cst {dimension_numbers = #tpu.dot_dimension_numbers<[1], [0], [0], [1], [0, 0, 1, 1], [], []>} : vector<416x288xbf16>, vector<288x64xbf16>, vector<416x64xf32> -> vector<416x64xf32>
    %3 = vector.extract_strided_slice %2 {offsets = [0, 0], sizes = [104, 64], strides = [1, 1]} : vector<416x64xf32> to vector<104x64xf32>
    %4 = vector.extract_strided_slice %2 {offsets = [104, 0], sizes = [104, 64], strides = [1, 1]} : vector<416x64xf32> to vector<104x64xf32>
    %5 = arith.maximumf %3, %4 : vector<104x64xf32>
    %6 = vector.extract_strided_slice %2 {offsets = [208, 0], sizes = [104, 64], strides = [1, 1]} : vector<416x64xf32> to vector<104x64xf32>
    %7 = vector.extract_strided_slice %2 {offsets = [312, 0], sizes = [104, 64], strides = [1, 1]} : vector<416x64xf32> to vector<104x64xf32>
    %8 = arith.maximumf %6, %7 : vector<104x64xf32>
    %9 = arith.maximumf %5, %8 : vector<104x64xf32>
    %c0_3 = arith.constant 0 : index
    %c0_4 = arith.constant 0 : index
    %10 = vector.load %arg3[%c0_3, %c0_4] : memref<1x64xf32, #tpu.memory_space<vmem>>, vector<1x64xf32>
    %11 = vector.broadcast %10 : vector<1x64xf32> to vector<104x64xf32>
    %12 = arith.addf %9, %11 : vector<104x64xf32>
    %cst_5 = arith.constant 0.000000e+00 : f32
    %13 = vector.broadcast %cst_5 : f32 to vector<104x64xf32>
    %14 = arith.maximumf %12, %13 : vector<104x64xf32>
    %c0_6 = arith.constant 0 : index
    %c0_7 = arith.constant 0 : index
    %15 = vector.load %arg4[%c0_6, %c0_7] : memref<104x64xf32, #tpu.memory_space<vmem>>, vector<104x64xf32>
    tpu.vector_store %arg4[%c0_6, %c0_7], %14 {strides = array<i32>} : memref<104x64xf32, #tpu.memory_space<vmem>>, vector<104x64xf32>,
    return
  }
  func.func @transform_0(%arg0: i32) -> (i32, i32) {
    %c0_i32 = arith.constant 0 : i32
    %c0_i32_0 = arith.constant 0 : i32
    return %arg0, %c0_i32 : i32, i32
  }
  func.func @transform_1(%arg0: i32) -> (i32, i32) {
    %c0_i32 = arith.constant 0 : i32
    %c0_i32_0 = arith.constant 0 : i32
    %c0_i32_1 = arith.constant 0 : i32
    return %c0_i32, %c0_i32_0 : i32, i32
  }
  func.func @transform_2(%arg0: i32) -> (i32, i32) {
    %c0_i32 = arith.constant 0 : i32
    %c0_i32_0 = arith.constant 0 : i32
    %c0_i32_1 = arith.constant 0 : i32
    return %c0_i32, %c0_i32_0 : i32, i32
  }
  func.func @transform_3(%arg0: i32) -> (i32, i32) {
    %c0_i32 = arith.constant 0 : i32
    %c0_i32_0 = arith.constant 0 : i32
    return %arg0, %c0_i32 : i32, i32
  }
}

module attributes {stable_mosaic.version = 11 : i64} {
  func.func @_linear_kernel(%arg0: i32, %arg1: memref<8x3136xf32, #tpu.memory_space<vmem>>, %arg2: memref<3136x10xf32, #tpu.memory_space<vmem>>, %arg3: memref<1x10xf32, #tpu.memory_space<vmem>>, %arg4: memref<8x10xf32, #tpu.memory_space<vmem>>) attributes {dimension_semantics = [#tpu.dimension_semantics<parallel>], iteration_bounds = array<i64: 1>, scalar_prefetch = 0 : i64, scratch_operands = 0 : i64, tpu.core_type = #tpu.core_type<tc>, window_params = [{transform_indices = @transform_0, window_bounds = array<i64: 8, 3136>}, {pipeline_mode = #tpu.pipeline_mode<synchronous>, transform_indices = @transform_1, window_bounds = array<i64: 3136, 10>}, {pipeline_mode = #tpu.pipeline_mode<synchronous>, transform_indices = @transform_2, window_bounds = array<i64: 1, 10>}, {transform_indices = @transform_3, window_bounds = array<i64: 8, 10>}]} {
    %c0 = arith.constant 0 : index
    %c0_0 = arith.constant 0 : index
    %0 = vector.load %arg1[%c0, %c0_0] : memref<8x3136xf32, #tpu.memory_space<vmem>>, vector<8x3136xf32>
    %c0_1 = arith.constant 0 : index
    %c0_2 = arith.constant 0 : index
    %1 = vector.load %arg2[%c0_1, %c0_2] : memref<3136x10xf32, #tpu.memory_space<vmem>>, vector<3136x10xf32>
    %cst = arith.constant dense<0.000000e+00> : vector<8x10xf32>
    %2 = tpu.matmul %0, %1, %cst {dimension_numbers = #tpu.dot_dimension_numbers<[1], [0], [0], [1], [0, 0, 1, 1], [], []>} : vector<8x3136xf32>, vector<3136x10xf32>, vector<8x10xf32> -> vector<8x10xf32>
    %c0_3 = arith.constant 0 : index
    %c0_4 = arith.constant 0 : index
    %3 = vector.load %arg3[%c0_3, %c0_4] : memref<1x10xf32, #tpu.memory_space<vmem>>, vector<1x10xf32>
    %4 = vector.broadcast %3 : vector<1x10xf32> to vector<8x10xf32>
    %5 = arith.addf %2, %4 : vector<8x10xf32>
    %c0_5 = arith.constant 0 : index
    %c0_6 = arith.constant 0 : index
    %6 = vector.load %arg4[%c0_5, %c0_6] : memref<8x10xf32, #tpu.memory_space<vmem>>, vector<8x10xf32>
    tpu.vector_store %arg4[%c0_5, %c0_6], %5 {strides = array<i32>} : memref<8x10xf32, #tpu.memory_space<vmem>>, vector<8x10xf32>,
    return
  }
  func.func @transform_0(%arg0: i32) -> (i32, i32) {
    %c0_i32 = arith.constant 0 : i32
    %c0_i32_0 = arith.constant 0 : i32
    return %arg0, %c0_i32 : i32, i32
  }
  func.func @transform_1(%arg0: i32) -> (i32, i32) {
    %c0_i32 = arith.constant 0 : i32
    %c0_i32_0 = arith.constant 0 : i32
    %c0_i32_1 = arith.constant 0 : i32
    return %c0_i32, %c0_i32_0 : i32, i32
  }
  func.func @transform_2(%arg0: i32) -> (i32, i32) {
    %c0_i32 = arith.constant 0 : i32
    %c0_i32_0 = arith.constant 0 : i32
    %c0_i32_1 = arith.constant 0 : i32
    return %c0_i32, %c0_i32_0 : i32, i32
  }
  func.func @transform_3(%arg0: i32) -> (i32, i32) {
    %c0_i32 = arith.constant 0 : i32
    %c0_i32_0 = arith.constant 0 : i32
    return %arg0, %c0_i32 : i32, i32
  }
}

</mosaic_0001>

<llo_original>
// kernel: cnn_forward.3
$region0: #{cnn_forward.3}
  #allocation0 [shape = 'u32[]', space=smem, size = 0x4, offset = 0x4, fixed_abs, tag = 'smem constant byte address 0x4 - core index']
  #allocation1 [shape = 'u32[144,128]{1,0:T(1,128)}', space=vmem, size = 0x12000, scoped, tag = 'internal scratch']
  %s0 = inlined_call_operand.vmem [shape: bf16[2048,9], index: 0, kind: input, shape index: {}]
  %s1 = inlined_call_operand.vmem [shape: bf16[9,32], index: 1, kind: input, shape index: {}]
  %s2 = inlined_call_operand.vmem [shape: f32[1,32], index: 2, kind: input, shape index: {}]
  %s3 = inlined_call_operand.vmem [shape: f32[512,32], index: 3, kind: output, shape index: {}]
  %s4 = sld [smem:[#allocation0]]
  $region45: #{cnn_forward.3} parent=0
    _
  %s6 = ssub.s32 1, %s4
  %s7 = scalar_select 0, %s6, %s4
  loop: start=0, step=1, limit=4
  $region2: #{cnn_forward.3} parent=0 // loop_pre_header
    _
  $region3: #{cnn_forward.3} parent=0 // loop_header
    %s9 = sphi 0, %s13
    %p10 = scmp.ge.s32.totalorder %s9, 4
    %s19 = sphi 0, %s21
    %s22 = sphi 0, %s19
    %s23 = sphi 0, %s22
    %s39 = sphi 0, %s23
    %s43 = sphi 0, %s43
    %s45 = sphi 0, %s43
    %s46 = sphi 0, %s45
    %s60 = sphi 0, %s46
    %s64 = sphi 0, %s64
    %s66 = sphi 0, %s64
    %s67 = sphi 0, %s66
    %s81 = sphi 0, %s67
    %s87 = sphi 0, %s89
    %s90 = sphi 0, %s87
    %s91 = sphi 0, %s90
    %s107 = sphi 0, %s91
  $region4: #{cnn_forward.3} parent=0 // loop_header_branch
    %12 = sbr.rel (%p10) target = $region8
  $region5: #{cnn_forward.3} parent=0 // loop_body
    %s14 = ssub.s32 %s9, 1
    %s15 = ssub.s32 %s9, 2
    %s16 = sadd.s32 %s9, 1
    %s17 = ssub.s32 %s9, %s16
    %p18 = scmp.eq.s32.totalorder %s17, 0
    %s20 = sadd.s32 %s19, 1
    %s21 = scalar_select %p18, %s19, %s20
    %p24 = pneg %p18
    %p25 = scmp.eq.s32.totalorder %s9, 1
    %p26 = por %p24, %p25
    %p27 = scmp.ne.s32.totalorder %s19, %s22
    %p28 = scmp.eq.s32.totalorder %s9, 0
    %p29 = por %p27, %p28
    %p30 = scmp.ne.s32.totalorder %s19, %s22
    %p31 = scmp.eq.s32.totalorder %s14, 1
    %p32 = por %p30, %p31
    %p33 = scmp.ne.s32.totalorder %s22, %s23
    %p34 = scmp.eq.s32.totalorder %s14, 0
    %p35 = por %p33, %p34
    %p36 = scmp.ne.s32.totalorder %s22, %s23
    %p37 = scmp.eq.s32.totalorder %s15, 1
    %p38 = por %p36, %p37
    %p40 = scmp.ne.s32.totalorder %s23, %s39
    %p41 = scmp.eq.s32.totalorder %s15, 0
    %p42 = por %p40, %p41
    %s44 = sadd.s32 %s43, 1
    %p47 = scmp.eq.s32.totalorder %s9, 1
    %p48 = scmp.ne.s32.totalorder %s43, %s45
    %p49 = scmp.eq.s32.totalorder %s9, 0
    %p50 = por %p48, %p49
    %p51 = scmp.ne.s32.totalorder %s43, %s45
    %p52 = scmp.eq.s32.totalorder %s14, 1
    %p53 = por %p51, %p52
    %p54 = scmp.ne.s32.totalorder %s45, %s46
    %p55 = scmp.eq.s32.totalorder %s14, 0
    %p56 = por %p54, %p55
    %p57 = scmp.ne.s32.totalorder %s45, %s46
    %p58 = scmp.eq.s32.totalorder %s15, 1
    %p59 = por %p57, %p58
    %p61 = scmp.ne.s32.totalorder %s46, %s60
    %p62 = scmp.eq.s32.totalorder %s15, 0
    %p63 = por %p61, %p62
    %s65 = sadd.s32 %s64, 1
    %p68 = scmp.eq.s32.totalorder %s9, 1
    %p69 = scmp.ne.s32.totalorder %s64, %s66
    %p70 = scmp.eq.s32.totalorder %s9, 0
    %p71 = por %p69, %p70
    %p72 = scmp.ne.s32.totalorder %s64, %s66
    %p73 = scmp.eq.s32.totalorder %s14, 1
    %p74 = por %p72, %p73
    %p75 = scmp.ne.s32.totalorder %s66, %s67
    %p76 = scmp.eq.s32.totalorder %s14, 0
    %p77 = por %p75, %p76
    %p78 = scmp.ne.s32.totalorder %s66, %s67
    %p79 = scmp.eq.s32.totalorder %s15, 1
    %p80 = por %p78, %p79
    %p82 = scmp.ne.s32.totalorder %s67, %s81
    %p83 = scmp.eq.s32.totalorder %s15, 0
    %p84 = por %p82, %p83
    %s85 = ssub.s32 %s9, %s16
    %p86 = scmp.eq.s32.totalorder %s85, 0
    %s88 = sadd.s32 %s87, 1
    %s89 = scalar_select %p86, %s87, %s88
    %p92 = pneg %p86
    %p93 = scmp.eq.s32.totalorder %s9, 1
    %p94 = por %p92, %p93
    %p95 = scmp.ne.s32.totalorder %s87, %s90
    %p96 = scmp.eq.s32.totalorder %s9, 0
    %p97 = por %p95, %p96
    %p98 = scmp.ne.s32.totalorder %s87, %s90
    %p99 = scmp.eq.s32.totalorder %s14, 1
    %p100 = por %p98, %p99
    %p101 = scmp.ne.s32.totalorder %s90, %s91
    %p102 = scmp.eq.s32.totalorder %s14, 0
    %p103 = por %p101, %p102
    %p104 = scmp.ne.s32.totalorder %s90, %s91
    %p105 = scmp.eq.s32.totalorder %s15, 1
    %p106 = por %p104, %p105
    %p108 = scmp.ne.s32.totalorder %s91, %s107
    %p109 = scmp.eq.s32.totalorder %s15, 0
    %p110 = por %p108, %p109
    %p111 = scmp.le.s32.totalorder 1, %s9
    %p112 = scmp.lt.s32.totalorder %s9, 3
    %p113 = pnand %p111, %p112
    %p114 = pneg %p113
    // Predicated region
    $region9: #{cnn_forward.3} parent=5 // pred_check
      _
    $region10: #{cnn_forward.3} parent=5 // pred_check_branch
      %116 = sbr.rel (%p113) target = $region12
    $region11: #{cnn_forward.3} parent=5 // pred_region
      %s117 = ssub.s32 %s9, 1
      // Predicated region
      $region13: #{cnn_forward.3} parent=11 // pred_check
        %p118 = pneg %p56
      $region14: #{cnn_forward.3} parent=11 // pred_check_branch
        %120 = sbr.rel (%p118) target = $region16
      $region15: #{cnn_forward.3} parent=11 // pred_region
        _
      $region16: #{cnn_forward.3} parent=11 // pred_fallthru
        _
      // Predicated region
      $region17: #{cnn_forward.3} parent=11 // pred_check
        %p121 = pneg %p77
      $region18: #{cnn_forward.3} parent=11 // pred_check_branch
        %123 = sbr.rel (%p121) target = $region20
      $region19: #{cnn_forward.3} parent=11 // pred_region
        _
      $region20: #{cnn_forward.3} parent=11 // pred_fallthru
        _
    $region12: #{cnn_forward.3} parent=5 // pred_fallthru
      _
    %p124 = scmp.lt.s32.totalorder %s9, 2
    // Predicated region
    $region21: #{cnn_forward.3} parent=5 // pred_check
      %p125 = pneg %p124
    $region22: #{cnn_forward.3} parent=5 // pred_check_branch
      %127 = sbr.rel (%p125) target = $region24
    $region23: #{cnn_forward.3} parent=5 // pred_region
      // Predicated region
      $region25: #{cnn_forward.3} parent=23 // pred_check
        %p128 = pneg %p29
      $region26: #{cnn_forward.3} parent=23 // pred_check_branch
        %130 = sbr.rel (%p128) target = $region28
      $region27: #{cnn_forward.3} parent=23 // pred_region
        %s131 = smul.u32 128, %s9
        %p132 = scmp.lt.s32.totalorder %s131, 255
        %s133 = scalar_select %p132, %s131, 255
        %s134 = smul.addr %s133, 4
        %s135 = scalar_lea.vmem %s0, %s134
        %s136 = smul.u32 128, %s9
      $region28: #{cnn_forward.3} parent=23 // pred_fallthru
        _
    $region24: #{cnn_forward.3} parent=5 // pred_fallthru
      _
    %p137 = scmp.le.s32.totalorder 1, %s9
    %p138 = scmp.lt.s32.totalorder %s9, 3
    %p139 = pnand %p137, %p138
    %p140 = pneg %p139
    // Predicated region
    $region29: #{cnn_forward.3} parent=5 // pred_check
      _
    $region30: #{cnn_forward.3} parent=5 // pred_check_branch
      %142 = sbr.rel (%p139) target = $region32
    $region31: #{cnn_forward.3} parent=5 // pred_region
      %s143 = ssub.s32 %s9, 1
      %s144 = smul.u32 128, %s14
      %p145 = scmp.lt.s32.totalorder %s144, 255
      %s146 = scalar_select %p145, %s144, 255
      %s147 = smul.addr %s146, 4
      %s148 = scalar_lea.vmem %s0, %s147
      %p149 = pneg %p35
      %p150 = pneg %p32
      %p151 = pneg %p56
      %p152 = pneg %p53
      %p153 = pneg %p77
      %p154 = pneg %p74
      %p155 = pneg %p103
      %p156 = pneg %p100
      %s157 = smul.u32 32, %s14
      %p158 = scmp.lt.s32.totalorder %s157, 63
      %s159 = scalar_select %p158, %s157, 63
      %s160 = smul.addr %s159, 8
      %s161 = scalar_lea.vmem %s3, %s160
      %s162 = smul.u32 128, %s14
      %p163 = scmp.lt.s32.totalorder %s162, 255
      %s164 = scalar_select %p163, %s162, 255
      %s165 = smul.addr %s164, 4
      %s166 = scalar_lea.vmem %s0, %s165
      %s167 = smul.u32 128, %s14
      %s168 = smul.u32 32, %s14
      %p169 = scmp.lt.s32.totalorder %s168, 63
      %s170 = scalar_select %p169, %s168, 63
      %s171 = smul.addr %s170, 8
      %s172 = scalar_lea.vmem %s3, %s171
      %s173 = smul.u32 32, %s14
      %v175 = vld [vmem:[%s166] sm:$0xf]
      %v176 = vld [vmem:[%s166 + $0x4] sm:$0xf]
      %v177 = vld [vmem:[%s166 + $0x8] sm:$0xf]
      %v178 = vld [vmem:[%s166 + $0xc] sm:$0xf]
      %v179 = vld [vmem:[%s166 + $0x10] sm:$0xf]
      %v180 = vld [vmem:[%s166 + $0x14] sm:$0xf]
      %v181 = vld [vmem:[%s166 + $0x18] sm:$0xf]
      %v182 = vld [vmem:[%s166 + $0x1c] sm:$0xf]
      %v183 = vld [vmem:[%s166 + $0x20] sm:$0xf]
      %v184 = vld [vmem:[%s166 + $0x24] sm:$0xf]
      %v185 = vld [vmem:[%s166 + $0x28] sm:$0xf]
      %v186 = vld [vmem:[%s166 + $0x2c] sm:$0xf]
      %v187 = vld [vmem:[%s166 + $0x30] sm:$0xf]
      %v188 = vld [vmem:[%s166 + $0x34] sm:$0xf]
      %v189 = vld [vmem:[%s166 + $0x38] sm:$0xf]
      %v190 = vld [vmem:[%s166 + $0x3c] sm:$0xf]
      %v191 = vld [vmem:[%s166 + $0x40] sm:$0xf]
      %v192 = vld [vmem:[%s166 + $0x44] sm:$0xf]
      %v193 = vld [vmem:[%s166 + $0x48] sm:$0xf]
      %v194 = vld [vmem:[%s166 + $0x4c] sm:$0xf]
      %v195 = vld [vmem:[%s166 + $0x50] sm:$0xf]
      %v196 = vld [vmem:[%s166 + $0x54] sm:$0xf]
      %v197 = vld [vmem:[%s166 + $0x58] sm:$0xf]
      %v198 = vld [vmem:[%s166 + $0x5c] sm:$0xf]
      %v199 = vld [vmem:[%s166 + $0x60] sm:$0xf]
      %v200 = vld [vmem:[%s166 + $0x64] sm:$0xf]
      %v201 = vld [vmem:[%s166 + $0x68] sm:$0xf]
      %v202 = vld [vmem:[%s166 + $0x6c] sm:$0xf]
      %v203 = vld [vmem:[%s166 + $0x70] sm:$0xf]
      %v204 = vld [vmem:[%s166 + $0x74] sm:$0xf]
      %v205 = vld [vmem:[%s166 + $0x78] sm:$0xf]
      %v206 = vld [vmem:[%s166 + $0x7c] sm:$0xf]
      %v207 = vld [vmem:[%s166 + $0x80] sm:$0xf]
      %v208 = vld [vmem:[%s166 + $0x84] sm:$0xf]
      %v209 = vld [vmem:[%s166 + $0x88] sm:$0xf]
      %v210 = vld [vmem:[%s166 + $0x8c] sm:$0xf]
      %v211 = vld [vmem:[%s166 + $0x90] sm:$0xf]
      %v212 = vld [vmem:[%s166 + $0x94] sm:$0xf]
      %v213 = vld [vmem:[%s166 + $0x98] sm:$0xf]
      %v214 = vld [vmem:[%s166 + $0x9c] sm:$0xf]
      %v215 = vld [vmem:[%s166 + $0xa0] sm:$0xf]
      %v216 = vld [vmem:[%s166 + $0xa4] sm:$0xf]
      %v217 = vld [vmem:[%s166 + $0xa8] sm:$0xf]
      %v218 = vld [vmem:[%s166 + $0xac] sm:$0xf]
      %v219 = vld [vmem:[%s166 + $0xb0] sm:$0xf]
      %v220 = vld [vmem:[%s166 + $0xb4] sm:$0xf]
      %v221 = vld [vmem:[%s166 + $0xb8] sm:$0xf]
      %v222 = vld [vmem:[%s166 + $0xbc] sm:$0xf]
      %v223 = vld [vmem:[%s166 + $0xc0] sm:$0xf]
      %v224 = vld [vmem:[%s166 + $0xc4] sm:$0xf]
      %v225 = vld [vmem:[%s166 + $0xc8] sm:$0xf]
      %v226 = vld [vmem:[%s166 + $0xcc] sm:$0xf]
      %v227 = vld [vmem:[%s166 + $0xd0] sm:$0xf]
      %v228 = vld [vmem:[%s166 + $0xd4] sm:$0xf]
      %v229 = vld [vmem:[%s166 + $0xd8] sm:$0xf]
      %v230 = vld [vmem:[%s166 + $0xdc] sm:$0xf]
      %v231 = vld [vmem:[%s166 + $0xe0] sm:$0xf]
      %v232 = vld [vmem:[%s166 + $0xe4] sm:$0xf]
      %v233 = vld [vmem:[%s166 + $0xe8] sm:$0xf]
      %v234 = vld [vmem:[%s166 + $0xec] sm:$0xf]
      %v235 = vld [vmem:[%s166 + $0xf0] sm:$0xf]
      %v236 = vld [vmem:[%s166 + $0xf4] sm:$0xf]
      %v237 = vld [vmem:[%s166 + $0xf8] sm:$0xf]
      %v238 = vld [vmem:[%s166 + $0xfc] sm:$0xf]
      %v239 = vld [vmem:[%s166 + $0x100] sm:$0xf]
      %v240 = vld [vmem:[%s166 + $0x104] sm:$0xf]
      %v241 = vld [vmem:[%s166 + $0x108] sm:$0xf]
      %v242 = vld [vmem:[%s166 + $0x10c] sm:$0xf]
      %v243 = vld [vmem:[%s166 + $0x110] sm:$0xf]
      %v244 = vld [vmem:[%s166 + $0x114] sm:$0xf]
      %v245 = vld [vmem:[%s166 + $0x118] sm:$0xf]
      %v246 = vld [vmem:[%s166 + $0x11c] sm:$0xf]
      %v247 = vld [vmem:[%s166 + $0x120] sm:$0xf]
      %v248 = vld [vmem:[%s166 + $0x124] sm:$0xf]
      %v249 = vld [vmem:[%s166 + $0x128] sm:$0xf]
      %v250 = vld [vmem:[%s166 + $0x12c] sm:$0xf]
      %v251 = vld [vmem:[%s166 + $0x130] sm:$0xf]
      %v252 = vld [vmem:[%s166 + $0x134] sm:$0xf]
      %v253 = vld [vmem:[%s166 + $0x138] sm:$0xf]
      %v254 = vld [vmem:[%s166 + $0x13c] sm:$0xf]
      %v255 = vld [vmem:[%s166 + $0x140] sm:$0xf]
      %v256 = vld [vmem:[%s166 + $0x144] sm:$0xf]
      %v257 = vld [vmem:[%s166 + $0x148] sm:$0xf]
      %v258 = vld [vmem:[%s166 + $0x14c] sm:$0xf]
      %v259 = vld [vmem:[%s166 + $0x150] sm:$0xf]
      %v260 = vld [vmem:[%s166 + $0x154] sm:$0xf]
      %v261 = vld [vmem:[%s166 + $0x158] sm:$0xf]
      %v262 = vld [vmem:[%s166 + $0x15c] sm:$0xf]
      %v263 = vld [vmem:[%s166 + $0x160] sm:$0xf]
      %v264 = vld [vmem:[%s166 + $0x164] sm:$0xf]
      %v265 = vld [vmem:[%s166 + $0x168] sm:$0xf]
      %v266 = vld [vmem:[%s166 + $0x16c] sm:$0xf]
      %v267 = vld [vmem:[%s166 + $0x170] sm:$0xf]
      %v268 = vld [vmem:[%s166 + $0x174] sm:$0xf]
      %v269 = vld [vmem:[%s166 + $0x178] sm:$0xf]
      %v270 = vld [vmem:[%s166 + $0x17c] sm:$0xf]
      %v271 = vld [vmem:[%s166 + $0x180] sm:$0xf]
      %v272 = vld [vmem:[%s166 + $0x184] sm:$0xf]
      %v273 = vld [vmem:[%s166 + $0x188] sm:$0xf]
      %v274 = vld [vmem:[%s166 + $0x18c] sm:$0xf]
      %v275 = vld [vmem:[%s166 + $0x190] sm:$0xf]
      %v276 = vld [vmem:[%s166 + $0x194] sm:$0xf]
      %v277 = vld [vmem:[%s166 + $0x198] sm:$0xf]
      %v278 = vld [vmem:[%s166 + $0x19c] sm:$0xf]
      %v279 = vld [vmem:[%s166 + $0x1a0] sm:$0xf]
      %v280 = vld [vmem:[%s166 + $0x1a4] sm:$0xf]
      %v281 = vld [vmem:[%s166 + $0x1a8] sm:$0xf]
      %v282 = vld [vmem:[%s166 + $0x1ac] sm:$0xf]
      %v283 = vld [vmem:[%s166 + $0x1b0] sm:$0xf]
      %v284 = vld [vmem:[%s166 + $0x1b4] sm:$0xf]
      %v285 = vld [vmem:[%s166 + $0x1b8] sm:$0xf]
      %v286 = vld [vmem:[%s166 + $0x1bc] sm:$0xf]
      %v287 = vld [vmem:[%s166 + $0x1c0] sm:$0xf]
      %v288 = vld [vmem:[%s166 + $0x1c4] sm:$0xf]
      %v289 = vld [vmem:[%s166 + $0x1c8] sm:$0xf]
      %v290 = vld [vmem:[%s166 + $0x1cc] sm:$0xf]
      %v291 = vld [vmem:[%s166 + $0x1d0] sm:$0xf]
      %v292 = vld [vmem:[%s166 + $0x1d4] sm:$0xf]
      %v293 = vld [vmem:[%s166 + $0x1d8] sm:$0xf]
      %v294 = vld [vmem:[%s166 + $0x1dc] sm:$0xf]
      %v295 = vld [vmem:[%s166 + $0x1e0] sm:$0xf]
      %v296 = vld [vmem:[%s166 + $0x1e4] sm:$0xf]
      %v297 = vld [vmem:[%s166 + $0x1e8] sm:$0xf]
      %v298 = vld [vmem:[%s166 + $0x1ec] sm:$0xf]
      %v299 = vld [vmem:[%s166 + $0x1f0] sm:$0xf]
      %v300 = vld [vmem:[%s166 + $0x1f4] sm:$0xf]
      %v301 = vld [vmem:[%s166 + $0x1f8] sm:$0xf]
      %v302 = vld [vmem:[%s166 + $0x1fc] sm:$0xf]
      %v303 = vld [vmem:[%s1] sm:$0xf]
      %v304 = vld [vmem:[%s1 + $0x4] sm:$0x1]
      %v433 = vunpack.c.l.b16 %v175
      %v434 = vunpack.c.l.b16 %v176
      %v435 = vunpack.c.l.b16 %v177
      %v436 = vunpack.c.l.b16 %v178
      %v437 = vunpack.c.l.b16 %v179
      %v438 = vunpack.c.l.b16 %v180
      %v439 = vunpack.c.l.b16 %v181
      %v440 = vunpack.c.l.b16 %v182
      %v441 = vunpack.c.l.b16 %v183
      %v442 = vunpack.c.l.b16 %v184
      %v443 = vunpack.c.l.b16 %v185
      %v444 = vunpack.c.l.b16 %v186
      %v445 = vunpack.c.l.b16 %v187
      %v446 = vunpack.c.l.b16 %v188
      %v447 = vunpack.c.l.b16 %v189
      %v448 = vunpack.c.l.b16 %v190
      %v449 = vunpack.c.l.b16 %v191
      %v450 = vunpack.c.l.b16 %v192
      %v451 = vunpack.c.l.b16 %v193
      %v452 = vunpack.c.l.b16 %v194
      %v453 = vunpack.c.l.b16 %v195
      %v454 = vunpack.c.l.b16 %v196
      %v455 = vunpack.c.l.b16 %v197
      %v456 = vunpack.c.l.b16 %v198
      %v457 = vunpack.c.l.b16 %v199
      %v458 = vunpack.c.l.b16 %v200
      %v459 = vunpack.c.l.b16 %v201
      %v460 = vunpack.c.l.b16 %v202
      %v461 = vunpack.c.l.b16 %v203
      %v462 = vunpack.c.l.b16 %v204
      %v463 = vunpack.c.l.b16 %v205
      %v464 = vunpack.c.l.b16 %v206
      %v465 = vunpack.c.l.b16 %v207
      %v466 = vunpack.c.l.b16 %v208
      %v467 = vunpack.c.l.b16 %v209
      %v468 = vunpack.c.l.b16 %v210
      %v469 = vunpack.c.l.b16 %v211
      %v470 = vunpack.c.l.b16 %v212
      %v471 = vunpack.c.l.b16 %v213
      %v472 = vunpack.c.l.b16 %v214
      %v473 = vunpack.c.l.b16 %v215
      %v474 = vunpack.c.l.b16 %v216
      %v475 = vunpack.c.l.b16 %v217
      %v476 = vunpack.c.l.b16 %v218
      %v477 = vunpack.c.l.b16 %v219
      %v478 = vunpack.c.l.b16 %v220
      %v479 = vunpack.c.l.b16 %v221
      %v480 = vunpack.c.l.b16 %v222
      %v481 = vunpack.c.l.b16 %v223
      %v482 = vunpack.c.l.b16 %v224
      %v483 = vunpack.c.l.b16 %v225
      %v484 = vunpack.c.l.b16 %v226
      %v485 = vunpack.c.l.b16 %v227
      %v486 = vunpack.c.l.b16 %v228
      %v487 = vunpack.c.l.b16 %v229
      %v488 = vunpack.c.l.b16 %v230
      %v489 = vunpack.c.l.b16 %v231
      %v490 = vunpack.c.l.b16 %v232
      %v491 = vunpack.c.l.b16 %v233
      %v492 = vunpack.c.l.b16 %v234
      %v493 = vunpack.c.l.b16 %v235
      %v494 = vunpack.c.l.b16 %v236
      %v495 = vunpack.c.l.b16 %v237
      %v496 = vunpack.c.l.b16 %v238
      %v497 = vunpack.c.l.b16 %v239
      %v498 = vunpack.c.l.b16 %v240
      %v499 = vunpack.c.l.b16 %v241
      %v500 = vunpack.c.l.b16 %v242
      %v501 = vunpack.c.l.b16 %v243
      %v502 = vunpack.c.l.b16 %v244
      %v503 = vunpack.c.l.b16 %v245
      %v504 = vunpack.c.l.b16 %v246
      %v505 = vunpack.c.l.b16 %v247
      %v506 = vunpack.c.l.b16 %v248
      %v507 = vunpack.c.l.b16 %v249
      %v508 = vunpack.c.l.b16 %v250
      %v509 = vunpack.c.l.b16 %v251
      %v510 = vunpack.c.l.b16 %v252
      %v511 = vunpack.c.l.b16 %v253
      %v512 = vunpack.c.l.b16 %v254
      %v513 = vunpack.c.l.b16 %v255
      %v514 = vunpack.c.l.b16 %v256
      %v515 = vunpack.c.l.b16 %v257
      %v516 = vunpack.c.l.b16 %v258
      %v517 = vunpack.c.l.b16 %v259
      %v518 = vunpack.c.l.b16 %v260
      %v519 = vunpack.c.l.b16 %v261
      %v520 = vunpack.c.l.b16 %v262
      %v521 = vunpack.c.l.b16 %v263
      %v522 = vunpack.c.l.b16 %v264
      %v523 = vunpack.c.l.b16 %v265
      %v524 = vunpack.c.l.b16 %v266
      %v525 = vunpack.c.l.b16 %v267
      %v526 = vunpack.c.l.b16 %v268
      %v527 = vunpack.c.l.b16 %v269
      %v528 = vunpack.c.l.b16 %v270
      %v529 = vunpack.c.l.b16 %v271
      %v530 = vunpack.c.l.b16 %v272
      %v531 = vunpack.c.l.b16 %v273
      %v532 = vunpack.c.l.b16 %v274
      %v533 = vunpack.c.l.b16 %v275
      %v534 = vunpack.c.l.b16 %v276
      %v535 = vunpack.c.l.b16 %v277
      %v536 = vunpack.c.l.b16 %v278
      %v537 = vunpack.c.l.b16 %v279
      %v538 = vunpack.c.l.b16 %v280
      %v539 = vunpack.c.l.b16 %v281
      %v540 = vunpack.c.l.b16 %v282
      %v541 = vunpack.c.l.b16 %v283
      %v542 = vunpack.c.l.b16 %v284
      %v543 = vunpack.c.l.b16 %v285
      %v544 = vunpack.c.l.b16 %v286
      %v545 = vunpack.c.l.b16 %v287
      %v546 = vunpack.c.l.b16 %v288
      %v547 = vunpack.c.l.b16 %v289
      %v548 = vunpack.c.l.b16 %v290
      %v549 = vunpack.c.l.b16 %v291
      %v550 = vunpack.c.l.b16 %v292
      %v551 = vunpack.c.l.b16 %v293
      %v552 = vunpack.c.l.b16 %v294
      %v553 = vunpack.c.l.b16 %v295
      %v554 = vunpack.c.l.b16 %v296
      %v555 = vunpack.c.l.b16 %v297
      %v556 = vunpack.c.l.b16 %v298
      %v557 = vunpack.c.l.b16 %v299
      %v558 = vunpack.c.l.b16 %v300
      %v559 = vunpack.c.l.b16 %v301
      %v560 = vunpack.c.l.b16 %v302
      %v561 = vpack.c.b16 %v434, %v433
      %v562 = vpack.c.b16 %v436, %v435
      %v563 = vpack.c.b16 %v438, %v437
      %v564 = vpack.c.b16 %v440, %v439
      %v565 = vpack.c.b16 %v442, %v441
      %v566 = vpack.c.b16 %v444, %v443
      %v567 = vpack.c.b16 %v446, %v445
      %v568 = vpack.c.b16 %v448, %v447
      %v569 = vpack.c.b16 %v450, %v449
      %v570 = vpack.c.b16 %v452, %v451
      %v571 = vpack.c.b16 %v454, %v453
      %v572 = vpack.c.b16 %v456, %v455
      %v573 = vpack.c.b16 %v458, %v457
      %v574 = vpack.c.b16 %v460, %v459
      %v575 = vpack.c.b16 %v462, %v461
      %v576 = vpack.c.b16 %v464, %v463
      %v577 = vpack.c.b16 %v466, %v465
      %v578 = vpack.c.b16 %v468, %v467
      %v579 = vpack.c.b16 %v470, %v469
      %v580 = vpack.c.b16 %v472, %v471
      %v581 = vpack.c.b16 %v474, %v473
      %v582 = vpack.c.b16 %v476, %v475
      %v583 = vpack.c.b16 %v478, %v477
      %v584 = vpack.c.b16 %v480, %v479
      %v585 = vpack.c.b16 %v482, %v481
      %v586 = vpack.c.b16 %v484, %v483
      %v587 = vpack.c.b16 %v486, %v485
      %v588 = vpack.c.b16 %v488, %v487
      %v589 = vpack.c.b16 %v490, %v489
      %v590 = vpack.c.b16 %v492, %v491
      %v591 = vpack.c.b16 %v494, %v493
      %v592 = vpack.c.b16 %v496, %v495
      %v593 = vpack.c.b16 %v498, %v497
      %v594 = vpack.c.b16 %v500, %v499
      %v595 = vpack.c.b16 %v502, %v501
      %v596 = vpack.c.b16 %v504, %v503
      %v597 = vpack.c.b16 %v506, %v505
      %v598 = vpack.c.b16 %v508, %v507
      %v599 = vpack.c.b16 %v510, %v509
      %v600 = vpack.c.b16 %v512, %v511
      %v601 = vpack.c.b16 %v514, %v513
      %v602 = vpack.c.b16 %v516, %v515
      %v603 = vpack.c.b16 %v518, %v517
      %v604 = vpack.c.b16 %v520, %v519
      %v605 = vpack.c.b16 %v522, %v521
      %v606 = vpack.c.b16 %v524, %v523
      %v607 = vpack.c.b16 %v526, %v525
      %v608 = vpack.c.b16 %v528, %v527
      %v609 = vpack.c.b16 %v530, %v529
      %v610 = vpack.c.b16 %v532, %v531
      %v611 = vpack.c.b16 %v534, %v533
      %v612 = vpack.c.b16 %v536, %v535
      %v613 = vpack.c.b16 %v538, %v537
      %v614 = vpack.c.b16 %v540, %v539
      %v615 = vpack.c.b16 %v542, %v541
      %v616 = vpack.c.b16 %v544, %v543
      %v617 = vpack.c.b16 %v546, %v545
      %v618 = vpack.c.b16 %v548, %v547
      %v619 = vpack.c.b16 %v550, %v549
      %v620 = vpack.c.b16 %v552, %v551
      %v621 = vpack.c.b16 %v554, %v553
      %v622 = vpack.c.b16 %v556, %v555
      %v623 = vpack.c.b16 %v558, %v557
      %v624 = vpack.c.b16 %v560, %v559
      %v627 = vunpack.c.l.b16 %v303
      %v628 = vunpack.c.l.b16 %v304
      %v629 = vpack.c.b16 %v628, %v627
      %vm630 = vcmask 72704
      %v632 = vsel %vm630, %v561, 0
      %v635 = vsel %vm630, %v562, 0
      %v638 = vsel %vm630, %v563, 0
      %v641 = vsel %vm630, %v564, 0
      %v644 = vsel %vm630, %v565, 0
      %v647 = vsel %vm630, %v566, 0
      %v650 = vsel %vm630, %v567, 0
      %v653 = vsel %vm630, %v568, 0
      %v656 = vsel %vm630, %v569, 0
      %v659 = vsel %vm630, %v570, 0
      %v662 = vsel %vm630, %v571, 0
      %v665 = vsel %vm630, %v572, 0
      %v668 = vsel %vm630, %v573, 0
      %v671 = vsel %vm630, %v574, 0
      %v674 = vsel %vm630, %v575, 0
      %v677 = vsel %vm630, %v576, 0
      %v680 = vsel %vm630, %v577, 0
      %v683 = vsel %vm630, %v578, 0
      %v686 = vsel %vm630, %v579, 0
      %v689 = vsel %vm630, %v580, 0
      %v692 = vsel %vm630, %v581, 0
      %v695 = vsel %vm630, %v582, 0
      %v698 = vsel %vm630, %v583, 0
      %v701 = vsel %vm630, %v584, 0
      %v704 = vsel %vm630, %v585, 0
      %v707 = vsel %vm630, %v586, 0
      %v710 = vsel %vm630, %v587, 0
      %v713 = vsel %vm630, %v588, 0
      %v716 = vsel %vm630, %v589, 0
      %v719 = vsel %vm630, %v590, 0
      %v722 = vsel %vm630, %v591, 0
      %v725 = vsel %vm630, %v592, 0
      %v728 = vsel %vm630, %v593, 0
      %v731 = vsel %vm630, %v594, 0
      %v734 = vsel %vm630, %v595, 0
      %v737 = vsel %vm630, %v596, 0
      %v740 = vsel %vm630, %v597, 0
      %v743 = vsel %vm630, %v598, 0
      %v746 = vsel %vm630, %v599, 0
      %v749 = vsel %vm630, %v600, 0
      %v752 = vsel %vm630, %v601, 0
      %v755 = vsel %vm630, %v602, 0
      %v758 = vsel %vm630, %v603, 0
      %v761 = vsel %vm630, %v604, 0
      %v764 = vsel %vm630, %v605, 0
      %v767 = vsel %vm630, %v606, 0
      %v770 = vsel %vm630, %v607, 0
      %v773 = vsel %vm630, %v608, 0
      %v776 = vsel %vm630, %v609, 0
      %v779 = vsel %vm630, %v610, 0
      %v782 = vsel %vm630, %v611, 0
      %v785 = vsel %vm630, %v612, 0
      %v788 = vsel %vm630, %v613, 0
      %v791 = vsel %vm630, %v614, 0
      %v794 = vsel %vm630, %v615, 0
      %v797 = vsel %vm630, %v616, 0
      %v800 = vsel %vm630, %v617, 0
      %v803 = vsel %vm630, %v618, 0
      %v806 = vsel %vm630, %v619, 0
      %v809 = vsel %vm630, %v620, 0
      %v812 = vsel %vm630, %v621, 0
      %v815 = vsel %vm630, %v622, 0
      %v818 = vsel %vm630, %v623, 0
      %v821 = vsel %vm630, %v624, 0
      %vm823 = vcmask 1043456
      %vm824 = vcmask 1044480
      %v825 = vsel %vm823, 4294967295, 65535
      %v826 = vsel %vm824, %v825, 0
      %v828 = vand.u32 %v629, %v826
      %830 = vmatprep.subr.bf16.mxu0 0
      %831 = vmatpush1.bf16.msra.mxu0 %v828
      %832 = vmatprep.subr.bf16.mxu0 0
      %833 = vmatpush1.bf16.msra.mxu0 0
      %834 = vmatprep.subr.bf16.mxu0 0
      %835 = vmatpush1.bf16.msra.mxu0 0
      %836 = vmatprep.subr.bf16.mxu0 0
      %837 = vmatpush1.bf16.msra.mxu0 0
      %838 = vmatprep.subr.bf16.mxu0 0
      %839 = vmatpush1.bf16.msra.mxu0 0
      %840 = vmatprep.subr.bf16.mxu0 0
      %841 = vmatpush1.bf16.msra.mxu0 0
      %842 = vmatprep.subr.bf16.mxu0 0
      %843 = vmatpush1.bf16.msra.mxu0 0
      %844 = vmatprep.subr.bf16.mxu0 0
      %845 = vmatpush1.bf16.msra.mxu0 0
      %846 = vmatprep.subr.bf16.mxu0 0
      %847 = vmatpush1.bf16.msra.mxu0 0
      %848 = vmatprep.subr.bf16.mxu0 0
      %849 = vmatpush1.bf16.msra.mxu0 0
      %850 = vmatprep.subr.bf16.mxu0 0
      %851 = vmatpush1.bf16.msra.mxu0 0
      %852 = vmatprep.subr.bf16.mxu0 0
      %853 = vmatpush1.bf16.msra.mxu0 0
      %854 = vmatprep.subr.bf16.mxu0 0
      %855 = vmatpush1.bf16.msra.mxu0 0
      %856 = vmatprep.subr.bf16.mxu0 0
      %857 = vmatpush1.bf16.msra.mxu0 0
      %858 = vmatprep.subr.bf16.mxu0 0
      %859 = vmatpush1.bf16.msra.mxu0 0
      %860 = vmatprep.subr.bf16.mxu0 0
      %861 = vmatpush1.bf16.msra.mxu0 0
      %862 = vmatprep.mubr.bf16.mxu0 0
      %863 = vmatmul.mubr.bf16.gmra.mrb[0].mxu0 %v632
      %v864 = vpop.f32.mrb[0].mxu0
      %v865 = vadd.f32 0.0, %v864
      %v866 = vpop.f32.mrb[0].mxu0
      %v867 = vpop.f32.mrb[0].mxu0
      %v868 = vadd.f32 0.0, %v867
      %v869 = vpop.f32.mrb[0].mxu0
      %870 = vmatprep.mubr.bf16.mxu0 0
      %871 = vmatmul.mubr.bf16.gmra.mrb[0].mxu0 %v635
      %v872 = vpop.f32.mrb[0].mxu0
      %v873 = vadd.f32 0.0, %v872
      %v874 = vpop.f32.mrb[0].mxu0
      %v875 = vpop.f32.mrb[0].mxu0
      %v876 = vadd.f32 0.0, %v875
      %v877 = vpop.f32.mrb[0].mxu0
      %878 = vmatprep.mubr.bf16.mxu0 0
      %879 = vmatmul.mubr.bf16.gmra.mrb[0].mxu0 %v638
      %v880 = vpop.f32.mrb[0].mxu0
      %v881 = vadd.f32 0.0, %v880
      %v882 = vpop.f32.mrb[0].mxu0
      %v883 = vpop.f32.mrb[0].mxu0
      %v884 = vadd.f32 0.0, %v883
      %v885 = vpop.f32.mrb[0].mxu0
      %886 = vmatprep.mubr.bf16.mxu0 0
      %887 = vmatmul.mubr.bf16.gmra.mrb[0].mxu0 %v641
      %v888 = vpop.f32.mrb[0].mxu0
      %v889 = vadd.f32 0.0, %v888
      %v890 = vpop.f32.mrb[0].mxu0
      %v891 = vpop.f32.mrb[0].mxu0
      %v892 = vadd.f32 0.0, %v891
      %v893 = vpop.f32.mrb[0].mxu0
      %894 = vmatprep.mubr.bf16.mxu0 0
      %895 = vmatmul.mubr.bf16.gmra.mrb[0].mxu0 %v644
      %v896 = vpop.f32.mrb[0].mxu0
      %v897 = vadd.f32 0.0, %v896
      %v898 = vpop.f32.mrb[0].mxu0
      %v899 = vpop.f32.mrb[0].mxu0
      %v900 = vadd.f32 0.0, %v899
      %v901 = vpop.f32.mrb[0].mxu0
      %902 = vmatprep.mubr.bf16.mxu0 0
      %903 = vmatmul.mubr.bf16.gmra.mrb[0].mxu0 %v647
      %v904 = vpop.f32.mrb[0].mxu0
      %v905 = vadd.f32 0.0, %v904
      %v906 = vpop.f32.mrb[0].mxu0
      %v907 = vpop.f32.mrb[0].mxu0
      %v908 = vadd.f32 0.0, %v907
      %v909 = vpop.f32.mrb[0].mxu0
      %910 = vmatprep.mubr.bf16.mxu0 0
      %911 = vmatmul.mubr.bf16.gmra.mrb[0].mxu0 %v650
      %v912 = vpop.f32.mrb[0].mxu0
      %v913 = vadd.f32 0.0, %v912
      %v914 = vpop.f32.mrb[0].mxu0
      %v915 = vpop.f32.mrb[0].mxu0
      %v916 = vadd.f32 0.0, %v915
      %v917 = vpop.f32.mrb[0].mxu0
      %918 = vmatprep.mubr.bf16.mxu0 0
      %919 = vmatmul.mubr.bf16.gmra.mrb[0].mxu0 %v653
      %v920 = vpop.f32.mrb[0].mxu0
      %v921 = vadd.f32 0.0, %v920
      %v922 = vpop.f32.mrb[0].mxu0
      %v923 = vpop.f32.mrb[0].mxu0
      %v924 = vadd.f32 0.0, %v923
      %v925 = vpop.f32.mrb[0].mxu0
      %926 = vmatprep.mubr.bf16.mxu0 0
      %927 = vmatmul.mubr.bf16.gmra.mrb[0].mxu0 %v656
      %v928 = vpop.f32.mrb[0].mxu0
      %v929 = vadd.f32 0.0, %v928
      %v930 = vpop.f32.mrb[0].mxu0
      %v931 = vpop.f32.mrb[0].mxu0
      %v932 = vadd.f32 0.0, %v931
      %v933 = vpop.f32.mrb[0].mxu0
      %934 = vmatprep.mubr.bf16.mxu0 0
      %935 = vmatmul.mubr.bf16.gmra.mrb[0].mxu0 %v659
      %v936 = vpop.f32.mrb[0].mxu0
      %v937 = vadd.f32 0.0, %v936
      %v938 = vpop.f32.mrb[0].mxu0
      %v939 = vpop.f32.mrb[0].mxu0
      %v940 = vadd.f32 0.0, %v939
      %v941 = vpop.f32.mrb[0].mxu0
      %942 = vmatprep.mubr.bf16.mxu0 0
      %943 = vmatmul.mubr.bf16.gmra.mrb[0].mxu0 %v662
      %v944 = vpop.f32.mrb[0].mxu0
      %v945 = vadd.f32 0.0, %v944
      %v946 = vpop.f32.mrb[0].mxu0
      %v947 = vpop.f32.mrb[0].mxu0
      %v948 = vadd.f32 0.0, %v947
      %v949 = vpop.f32.mrb[0].mxu0
      %950 = vmatprep.mubr.bf16.mxu0 0
      %951 = vmatmul.mubr.bf16.gmra.mrb[0].mxu0 %v665
      %v952 = vpop.f32.mrb[0].mxu0
      %v953 = vadd.f32 0.0, %v952
      %v954 = vpop.f32.mrb[0].mxu0
      %v955 = vpop.f32.mrb[0].mxu0
      %v956 = vadd.f32 0.0, %v955
      %v957 = vpop.f32.mrb[0].mxu0
      %958 = vmatprep.mubr.bf16.mxu0 0
      %959 = vmatmul.mubr.bf16.gmra.mrb[0].mxu0 %v668
      %v960 = vpop.f32.mrb[0].mxu0
      %v961 = vadd.f32 0.0, %v960
      %v962 = vpop.f32.mrb[0].mxu0
      %v963 = vpop.f32.mrb[0].mxu0
      %v964 = vadd.f32 0.0, %v963
      %v965 = vpop.f32.mrb[0].mxu0
      %966 = vmatprep.mubr.bf16.mxu0 0
      %967 = vmatmul.mubr.bf16.gmra.mrb[0].mxu0 %v671
      %v968 = vpop.f32.mrb[0].mxu0
      %v969 = vadd.f32 0.0, %v968
      %v970 = vpop.f32.mrb[0].mxu0
      %v971 = vpop.f32.mrb[0].mxu0
      %v972 = vadd.f32 0.0, %v971
      %v973 = vpop.f32.mrb[0].mxu0
      %974 = vmatprep.mubr.bf16.mxu0 0
      %975 = vmatmul.mubr.bf16.gmra.mrb[0].mxu0 %v674
      %v976 = vpop.f32.mrb[0].mxu0
      %v977 = vadd.f32 0.0, %v976
      %v978 = vpop.f32.mrb[0].mxu0
      %v979 = vpop.f32.mrb[0].mxu0
      %v980 = vadd.f32 0.0, %v979
      %v981 = vpop.f32.mrb[0].mxu0
      %982 = vmatprep.mubr.bf16.mxu0 0
      %983 = vmatmul.mubr.bf16.gmra.mrb[0].mxu0 %v677
      %v984 = vpop.f32.mrb[0].mxu0
      %v985 = vadd.f32 0.0, %v984
      %v986 = vpop.f32.mrb[0].mxu0
      %v987 = vpop.f32.mrb[0].mxu0
      %v988 = vadd.f32 0.0, %v987
      %v989 = vpop.f32.mrb[0].mxu0
      %990 = vmatprep.mubr.bf16.mxu0 0
      %991 = vmatmul.mubr.bf16.gmra.mrb[0].mxu0 %v680
      %v992 = vpop.f32.mrb[0].mxu0
      %v993 = vadd.f32 0.0, %v992
      %v994 = vpop.f32.mrb[0].mxu0
      %v995 = vpop.f32.mrb[0].mxu0
      %v996 = vadd.f32 0.0, %v995
      %v997 = vpop.f32.mrb[0].mxu0
      %998 = vmatprep.mubr.bf16.mxu0 0
      %999 = vmatmul.mubr.bf16.gmra.mrb[0].mxu0 %v683
      %v1000 = vpop.f32.mrb[0].mxu0
      %v1001 = vadd.f32 0.0, %v1000
      %v1002 = vpop.f32.mrb[0].mxu0
      %v1003 = vpop.f32.mrb[0].mxu0
      %v1004 = vadd.f32 0.0, %v1003
      %v1005 = vpop.f32.mrb[0].mxu0
      %1006 = vmatprep.mubr.bf16.mxu0 0
      %1007 = vmatmul.mubr.bf16.gmra.mrb[0].mxu0 %v686
      %v1008 = vpop.f32.mrb[0].mxu0
      %v1009 = vadd.f32 0.0, %v1008
      %v1010 = vpop.f32.mrb[0].mxu0
      %v1011 = vpop.f32.mrb[0].mxu0
      %v1012 = vadd.f32 0.0, %v1011
      %v1013 = vpop.f32.mrb[0].mxu0
      %1014 = vmatprep.mubr.bf16.mxu0 0
      %1015 = vmatmul.mubr.bf16.gmra.mrb[0].mxu0 %v689
      %v1016 = vpop.f32.mrb[0].mxu0
      %v1017 = vadd.f32 0.0, %v1016
      %v1018 = vpop.f32.mrb[0].mxu0
      %v1019 = vpop.f32.mrb[0].mxu0
      %v1020 = vadd.f32 0.0, %v1019
      %v1021 = vpop.f32.mrb[0].mxu0
      %1022 = vmatprep.mubr.bf16.mxu0 0
      %1023 = vmatmul.mubr.bf16.gmra.mrb[0].mxu0 %v692
      %v1024 = vpop.f32.mrb[0].mxu0
      %v1025 = vadd.f32 0.0, %v1024
      %v1026 = vpop.f32.mrb[0].mxu0
      %v1027 = vpop.f32.mrb[0].mxu0
      %v1028 = vadd.f32 0.0, %v1027
      %v1029 = vpop.f32.mrb[0].mxu0
      %1030 = vmatprep.mubr.bf16.mxu0 0
      %1031 = vmatmul.mubr.bf16.gmra.mrb[0].mxu0 %v695
      %v1032 = vpop.f32.mrb[0].mxu0
      %v1033 = vadd.f32 0.0, %v1032
      %v1034 = vpop.f32.mrb[0].mxu0
      %v1035 = vpop.f32.mrb[0].mxu0
      %v1036 = vadd.f32 0.0, %v1035
      %v1037 = vpop.f32.mrb[0].mxu0
      %1038 = vmatprep.mubr.bf16.mxu0 0
      %1039 = vmatmul.mubr.bf16.gmra.mrb[0].mxu0 %v698
      %v1040 = vpop.f32.mrb[0].mxu0
      %v1041 = vadd.f32 0.0, %v1040
      %v1042 = vpop.f32.mrb[0].mxu0
      %v1043 = vpop.f32.mrb[0].mxu0
      %v1044 = vadd.f32 0.0, %v1043
      %v1045 = vpop.f32.mrb[0].mxu0
      %1046 = vmatprep.mubr.bf16.mxu0 0
      %1047 = vmatmul.mubr.bf16.gmra.mrb[0].mxu0 %v701
      %v1048 = vpop.f32.mrb[0].mxu0
      %v1049 = vadd.f32 0.0, %v1048
      %v1050 = vpop.f32.mrb[0].mxu0
      %v1051 = vpop.f32.mrb[0].mxu0
      %v1052 = vadd.f32 0.0, %v1051
      %v1053 = vpop.f32.mrb[0].mxu0
      %1054 = vmatprep.mubr.bf16.mxu0 0
      %1055 = vmatmul.mubr.bf16.gmra.mrb[0].mxu0 %v704
      %v1056 = vpop.f32.mrb[0].mxu0
      %v1057 = vadd.f32 0.0, %v1056
      %v1058 = vpop.f32.mrb[0].mxu0
      %v1059 = vpop.f32.mrb[0].mxu0
      %v1060 = vadd.f32 0.0, %v1059
      %v1061 = vpop.f32.mrb[0].mxu0
      %1062 = vmatprep.mubr.bf16.mxu0 0
      %1063 = vmatmul.mubr.bf16.gmra.mrb[0].mxu0 %v707
      %v1064 = vpop.f32.mrb[0].mxu0
      %v1065 = vadd.f32 0.0, %v1064
      %v1066 = vpop.f32.mrb[0].mxu0
      %v1067 = vpop.f32.mrb[0].mxu0
      %v1068 = vadd.f32 0.0, %v1067
      %v1069 = vpop.f32.mrb[0].mxu0
      %1070 = vmatprep.mubr.bf16.mxu0 0
      %1071 = vmatmul.mubr.bf16.gmra.mrb[0].mxu0 %v710
      %v1072 = vpop.f32.mrb[0].mxu0
      %v1073 = vadd.f32 0.0, %v1072
      %v1074 = vpop.f32.mrb[0].mxu0
      %v1075 = vpop.f32.mrb[0].mxu0
      %v1076 = vadd.f32 0.0, %v1075
      %v1077 = vpop.f32.mrb[0].mxu0
      %1078 = vmatprep.mubr.bf16.mxu0 0
      %1079 = vmatmul.mubr.bf16.gmra.mrb[0].mxu0 %v713
      %v1080 = vpop.f32.mrb[0].mxu0
      %v1081 = vadd.f32 0.0, %v1080
      %v1082 = vpop.f32.mrb[0].mxu0
      %v1083 = vpop.f32.mrb[0].mxu0
      %v1084 = vadd.f32 0.0, %v1083
      %v1085 = vpop.f32.mrb[0].mxu0
      %1086 = vmatprep.mubr.bf16.mxu0 0
      %1087 = vmatmul.mubr.bf16.gmra.mrb[0].mxu0 %v716
      %v1088 = vpop.f32.mrb[0].mxu0
      %v1089 = vadd.f32 0.0, %v1088
      %v1090 = vpop.f32.mrb[0].mxu0
      %v1091 = vpop.f32.mrb[0].mxu0
      %v1092 = vadd.f32 0.0, %v1091
      %v1093 = vpop.f32.mrb[0].mxu0
      %1094 = vmatprep.mubr.bf16.mxu0 0
      %1095 = vmatmul.mubr.bf16.gmra.mrb[0].mxu0 %v719
      %v1096 = vpop.f32.mrb[0].mxu0
      %v1097 = vadd.f32 0.0, %v1096
      %v1098 = vpop.f32.mrb[0].mxu0
      %v1099 = vpop.f32.mrb[0].mxu0
      %v1100 = vadd.f32 0.0, %v1099
      %v1101 = vpop.f32.mrb[0].mxu0
      %1102 = vmatprep.mubr.bf16.mxu0 0
      %1103 = vmatmul.mubr.bf16.gmra.mrb[0].mxu0 %v722
      %v1104 = vpop.f32.mrb[0].mxu0
      %v1105 = vadd.f32 0.0, %v1104
      %v1106 = vpop.f32.mrb[0].mxu0
      %v1107 = vpop.f32.mrb[0].mxu0
      %v1108 = vadd.f32 0.0, %v1107
      %v1109 = vpop.f32.mrb[0].mxu0
      %1110 = vmatprep.mubr.bf16.mxu0 0
      %1111 = vmatmul.mubr.bf16.gmra.mrb[0].mxu0 %v725
      %v1112 = vpop.f32.mrb[0].mxu0
      %v1113 = vadd.f32 0.0, %v1112
      %v1114 = vpop.f32.mrb[0].mxu0
      %v1115 = vpop.f32.mrb[0].mxu0
      %v1116 = vadd.f32 0.0, %v1115
      %v1117 = vpop.f32.mrb[0].mxu0
      %1118 = vmatprep.mubr.bf16.mxu0 0
      %1119 = vmatmul.mubr.bf16.gmra.mrb[0].mxu0 %v728
      %v1120 = vpop.f32.mrb[0].mxu0
      %v1121 = vadd.f32 0.0, %v1120
      %v1122 = vpop.f32.mrb[0].mxu0
      %v1123 = vpop.f32.mrb[0].mxu0
      %v1124 = vadd.f32 0.0, %v1123
      %v1125 = vpop.f32.mrb[0].mxu0
      %1126 = vmatprep.mubr.bf16.mxu0 0
      %1127 = vmatmul.mubr.bf16.gmra.mrb[0].mxu0 %v731
      %v1128 = vpop.f32.mrb[0].mxu0
      %v1129 = vadd.f32 0.0, %v1128
      %v1130 = vpop.f32.mrb[0].mxu0
      %v1131 = vpop.f32.mrb[0].mxu0
      %v1132 = vadd.f32 0.0, %v1131
      %v1133 = vpop.f32.mrb[0].mxu0
      %1134 = vmatprep.mubr.bf16.mxu0 0
      %1135 = vmatmul.mubr.bf16.gmra.mrb[0].mxu0 %v734
      %v1136 = vpop.f32.mrb[0].mxu0
      %v1137 = vadd.f32 0.0, %v1136
      %v1138 = vpop.f32.mrb[0].mxu0
      %v1139 = vpop.f32.mrb[0].mxu0
      %v1140 = vadd.f32 0.0, %v1139
      %v1141 = vpop.f32.mrb[0].mxu0
      %1142 = vmatprep.mubr.bf16.mxu0 0
      %1143 = vmatmul.mubr.bf16.gmra.mrb[0].mxu0 %v737
      %v1144 = vpop.f32.mrb[0].mxu0
      %v1145 = vadd.f32 0.0, %v1144
      %v1146 = vpop.f32.mrb[0].mxu0
      %v1147 = vpop.f32.mrb[0].mxu0
      %v1148 = vadd.f32 0.0, %v1147
      %v1149 = vpop.f32.mrb[0].mxu0
      %1150 = vmatprep.mubr.bf16.mxu0 0
      %1151 = vmatmul.mubr.bf16.gmra.mrb[0].mxu0 %v740
      %v1152 = vpop.f32.mrb[0].mxu0
      %v1153 = vadd.f32 0.0, %v1152
      %v1154 = vpop.f32.mrb[0].mxu0
      %v1155 = vpop.f32.mrb[0].mxu0
      %v1156 = vadd.f32 0.0, %v1155
      %v1157 = vpop.f32.mrb[0].mxu0
      %1158 = vmatprep.mubr.bf16.mxu0 0
      %1159 = vmatmul.mubr.bf16.gmra.mrb[0].mxu0 %v743
      %v1160 = vpop.f32.mrb[0].mxu0
      %v1161 = vadd.f32 0.0, %v1160
      %v1162 = vpop.f32.mrb[0].mxu0
      %v1163 = vpop.f32.mrb[0].mxu0
      %v1164 = vadd.f32 0.0, %v1163
      %v1165 = vpop.f32.mrb[0].mxu0
      %1166 = vmatprep.mubr.bf16.mxu0 0
      %1167 = vmatmul.mubr.bf16.gmra.mrb[0].mxu0 %v746
      %v1168 = vpop.f32.mrb[0].mxu0
      %v1169 = vadd.f32 0.0, %v1168
      %v1170 = vpop.f32.mrb[0].mxu0
      %v1171 = vpop.f32.mrb[0].mxu0
      %v1172 = vadd.f32 0.0, %v1171
      %v1173 = vpop.f32.mrb[0].mxu0
      %1174 = vmatprep.mubr.bf16.mxu0 0
      %1175 = vmatmul.mubr.bf16.gmra.mrb[0].mxu0 %v749
      %v1176 = vpop.f32.mrb[0].mxu0
      %v1177 = vadd.f32 0.0, %v1176
      %v1178 = vpop.f32.mrb[0].mxu0
      %v1179 = vpop.f32.mrb[0].mxu0
      %v1180 = vadd.f32 0.0, %v1179
      %v1181 = vpop.f32.mrb[0].mxu0
      %1182 = vmatprep.mubr.bf16.mxu0 0
      %1183 = vmatmul.mubr.bf16.gmra.mrb[0].mxu0 %v752
      %v1184 = vpop.f32.mrb[0].mxu0
      %v1185 = vadd.f32 0.0, %v1184
      %v1186 = vpop.f32.mrb[0].mxu0
      %v1187 = vpop.f32.mrb[0].mxu0
      %v1188 = vadd.f32 0.0, %v1187
      %v1189 = vpop.f32.mrb[0].mxu0
      %1190 = vmatprep.mubr.bf16.mxu0 0
      %1191 = vmatmul.mubr.bf16.gmra.mrb[0].mxu0 %v755
      %v1192 = vpop.f32.mrb[0].mxu0
      %v1193 = vadd.f32 0.0, %v1192
      %v1194 = vpop.f32.mrb[0].mxu0
      %v1195 = vpop.f32.mrb[0].mxu0
      %v1196 = vadd.f32 0.0, %v1195
      %v1197 = vpop.f32.mrb[0].mxu0
      %1198 = vmatprep.mubr.bf16.mxu0 0
      %1199 = vmatmul.mubr.bf16.gmra.mrb[0].mxu0 %v758
      %v1200 = vpop.f32.mrb[0].mxu0
      %v1201 = vadd.f32 0.0, %v1200
      %v1202 = vpop.f32.mrb[0].mxu0
      %v1203 = vpop.f32.mrb[0].mxu0
      %v1204 = vadd.f32 0.0, %v1203
      %v1205 = vpop.f32.mrb[0].mxu0
      %1206 = vmatprep.mubr.bf16.mxu0 0
      %1207 = vmatmul.mubr.bf16.gmra.mrb[0].mxu0 %v761
      %v1208 = vpop.f32.mrb[0].mxu0
      %v1209 = vadd.f32 0.0, %v1208
      %v1210 = vpop.f32.mrb[0].mxu0
      %v1211 = vpop.f32.mrb[0].mxu0
      %v1212 = vadd.f32 0.0, %v1211
      %v1213 = vpop.f32.mrb[0].mxu0
      %1214 = vmatprep.mubr.bf16.mxu0 0
      %1215 = vmatmul.mubr.bf16.gmra.mrb[0].mxu0 %v764
      %v1216 = vpop.f32.mrb[0].mxu0
      %v1217 = vadd.f32 0.0, %v1216
      %v1218 = vpop.f32.mrb[0].mxu0
      %v1219 = vpop.f32.mrb[0].mxu0
      %v1220 = vadd.f32 0.0, %v1219
      %v1221 = vpop.f32.mrb[0].mxu0
      %1222 = vmatprep.mubr.bf16.mxu0 0
      %1223 = vmatmul.mubr.bf16.gmra.mrb[0].mxu0 %v767
      %v1224 = vpop.f32.mrb[0].mxu0
      %v1225 = vadd.f32 0.0, %v1224
      %v1226 = vpop.f32.mrb[0].mxu0
      %v1227 = vpop.f32.mrb[0].mxu0
      %v1228 = vadd.f32 0.0, %v1227
      %v1229 = vpop.f32.mrb[0].mxu0
      %1230 = vmatprep.mubr.bf16.mxu0 0
      %1231 = vmatmul.mubr.bf16.gmra.mrb[0].mxu0 %v770
      %v1232 = vpop.f32.mrb[0].mxu0
      %v1233 = vadd.f32 0.0, %v1232
      %v1234 = vpop.f32.mrb[0].mxu0
      %v1235 = vpop.f32.mrb[0].mxu0
      %v1236 = vadd.f32 0.0, %v1235
      %v1237 = vpop.f32.mrb[0].mxu0
      %1238 = vmatprep.mubr.bf16.mxu0 0
      %1239 = vmatmul.mubr.bf16.gmra.mrb[0].mxu0 %v773
      %v1240 = vpop.f32.mrb[0].mxu0
      %v1241 = vadd.f32 0.0, %v1240
      %v1242 = vpop.f32.mrb[0].mxu0
      %v1243 = vpop.f32.mrb[0].mxu0
      %v1244 = vadd.f32 0.0, %v1243
      %v1245 = vpop.f32.mrb[0].mxu0
      %1246 = vmatprep.mubr.bf16.mxu0 0
      %1247 = vmatmul.mubr.bf16.gmra.mrb[0].mxu0 %v776
      %v1248 = vpop.f32.mrb[0].mxu0
      %v1249 = vadd.f32 0.0, %v1248
      %v1250 = vpop.f32.mrb[0].mxu0
      %v1251 = vpop.f32.mrb[0].mxu0
      %v1252 = vadd.f32 0.0, %v1251
      %v1253 = vpop.f32.mrb[0].mxu0
      %1254 = vmatprep.mubr.bf16.mxu0 0
      %1255 = vmatmul.mubr.bf16.gmra.mrb[0].mxu0 %v779
      %v1256 = vpop.f32.mrb[0].mxu0
      %v1257 = vadd.f32 0.0, %v1256
      %v1258 = vpop.f32.mrb[0].mxu0
      %v1259 = vpop.f32.mrb[0].mxu0
      %v1260 = vadd.f32 0.0, %v1259
      %v1261 = vpop.f32.mrb[0].mxu0
      %1262 = vmatprep.mubr.bf16.mxu0 0
      %1263 = vmatmul.mubr.bf16.gmra.mrb[0].mxu0 %v782
      %v1264 = vpop.f32.mrb[0].mxu0
      %v1265 = vadd.f32 0.0, %v1264
      %v1266 = vpop.f32.mrb[0].mxu0
      %v1267 = vpop.f32.mrb[0].mxu0
      %v1268 = vadd.f32 0.0, %v1267
      %v1269 = vpop.f32.mrb[0].mxu0
      %1270 = vmatprep.mubr.bf16.mxu0 0
      %1271 = vmatmul.mubr.bf16.gmra.mrb[0].mxu0 %v785
      %v1272 = vpop.f32.mrb[0].mxu0
      %v1273 = vadd.f32 0.0, %v1272
      %v1274 = vpop.f32.mrb[0].mxu0
      %v1275 = vpop.f32.mrb[0].mxu0
      %v1276 = vadd.f32 0.0, %v1275
      %v1277 = vpop.f32.mrb[0].mxu0
      %1278 = vmatprep.mubr.bf16.mxu0 0
      %1279 = vmatmul.mubr.bf16.gmra.mrb[0].mxu0 %v788
      %v1280 = vpop.f32.mrb[0].mxu0
      %v1281 = vadd.f32 0.0, %v1280
      %v1282 = vpop.f32.mrb[0].mxu0
      %v1283 = vpop.f32.mrb[0].mxu0
      %v1284 = vadd.f32 0.0, %v1283
      %v1285 = vpop.f32.mrb[0].mxu0
      %1286 = vmatprep.mubr.bf16.mxu0 0
      %1287 = vmatmul.mubr.bf16.gmra.mrb[0].mxu0 %v791
      %v1288 = vpop.f32.mrb[0].mxu0
      %v1289 = vadd.f32 0.0, %v1288
      %v1290 = vpop.f32.mrb[0].mxu0
      %v1291 = vpop.f32.mrb[0].mxu0
      %v1292 = vadd.f32 0.0, %v1291
      %v1293 = vpop.f32.mrb[0].mxu0
      %1294 = vmatprep.mubr.bf16.mxu0 0
      %1295 = vmatmul.mubr.bf16.gmra.mrb[0].mxu0 %v794
      %v1296 = vpop.f32.mrb[0].mxu0
      %v1297 = vadd.f32 0.0, %v1296
      %v1298 = vpop.f32.mrb[0].mxu0
      %v1299 = vpop.f32.mrb[0].mxu0
      %v1300 = vadd.f32 0.0, %v1299
      %v1301 = vpop.f32.mrb[0].mxu0
      %1302 = vmatprep.mubr.bf16.mxu0 0
      %1303 = vmatmul.mubr.bf16.gmra.mrb[0].mxu0 %v797
      %v1304 = vpop.f32.mrb[0].mxu0
      %v1305 = vadd.f32 0.0, %v1304
      %v1306 = vpop.f32.mrb[0].mxu0
      %v1307 = vpop.f32.mrb[0].mxu0
      %v1308 = vadd.f32 0.0, %v1307
      %v1309 = vpop.f32.mrb[0].mxu0
      %1310 = vmatprep.mubr.bf16.mxu0 0
      %1311 = vmatmul.mubr.bf16.gmra.mrb[0].mxu0 %v800
      %v1312 = vpop.f32.mrb[0].mxu0
      %v1313 = vadd.f32 0.0, %v1312
      %v1314 = vpop.f32.mrb[0].mxu0
      %v1315 = vpop.f32.mrb[0].mxu0
      %v1316 = vadd.f32 0.0, %v1315
      %v1317 = vpop.f32.mrb[0].mxu0
      %1318 = vmatprep.mubr.bf16.mxu0 0
      %1319 = vmatmul.mubr.bf16.gmra.mrb[0].mxu0 %v803
      %v1320 = vpop.f32.mrb[0].mxu0
      %v1321 = vadd.f32 0.0, %v1320
      %v1322 = vpop.f32.mrb[0].mxu0
      %v1323 = vpop.f32.mrb[0].mxu0
      %v1324 = vadd.f32 0.0, %v1323
      %v1325 = vpop.f32.mrb[0].mxu0
      %1326 = vmatprep.mubr.bf16.mxu0 0
      %1327 = vmatmul.mubr.bf16.gmra.mrb[0].mxu0 %v806
      %v1328 = vpop.f32.mrb[0].mxu0
      %v1329 = vadd.f32 0.0, %v1328
      %v1330 = vpop.f32.mrb[0].mxu0
      %v1331 = vpop.f32.mrb[0].mxu0
      %v1332 = vadd.f32 0.0, %v1331
      %v1333 = vpop.f32.mrb[0].mxu0
      %1334 = vmatprep.mubr.bf16.mxu0 0
      %1335 = vmatmul.mubr.bf16.gmra.mrb[0].mxu0 %v809
      %v1336 = vpop.f32.mrb[0].mxu0
      %v1337 = vadd.f32 0.0, %v1336
      %v1338 = vpop.f32.mrb[0].mxu0
      %v1339 = vpop.f32.mrb[0].mxu0
      %v1340 = vadd.f32 0.0, %v1339
      %v1341 = vpop.f32.mrb[0].mxu0
      %1342 = vmatprep.mubr.bf16.mxu0 0
      %1343 = vmatmul.mubr.bf16.gmra.mrb[0].mxu0 %v812
      %v1344 = vpop.f32.mrb[0].mxu0
      %v1345 = vadd.f32 0.0, %v1344
      %v1346 = vpop.f32.mrb[0].mxu0
      %v1347 = vpop.f32.mrb[0].mxu0
      %v1348 = vadd.f32 0.0, %v1347
      %v1349 = vpop.f32.mrb[0].mxu0
      %1350 = vmatprep.mubr.bf16.mxu0 0
      %1351 = vmatmul.mubr.bf16.gmra.mrb[0].mxu0 %v815
      %v1352 = vpop.f32.mrb[0].mxu0
      %v1353 = vadd.f32 0.0, %v1352
      %v1354 = vpop.f32.mrb[0].mxu0
      %v1355 = vpop.f32.mrb[0].mxu0
      %v1356 = vadd.f32 0.0, %v1355
      %v1357 = vpop.f32.mrb[0].mxu0
      %1358 = vmatprep.mubr.bf16.mxu0 0
      %1359 = vmatmul.mubr.bf16.gmra.mrb[0].mxu0 %v818
      %v1360 = vpop.f32.mrb[0].mxu0
      %v1361 = vadd.f32 0.0, %v1360
      %v1362 = vpop.f32.mrb[0].mxu0
      %v1363 = vpop.f32.mrb[0].mxu0
      %v1364 = vadd.f32 0.0, %v1363
      %v1365 = vpop.f32.mrb[0].mxu0
      %1366 = vmatprep.mubr.bf16.mxu0 0
      %1367 = vmatmul.mubr.bf16.gmra.mrb[0].mxu0 %v821
      %v1368 = vpop.f32.mrb[0].mxu0
      %v1369 = vadd.f32 0.0, %v1368
      %v1370 = vpop.f32.mrb[0].mxu0
      %v1371 = vpop.f32.mrb[0].mxu0
      %v1372 = vadd.f32 0.0, %v1371
      %v1373 = vpop.f32.mrb[0].mxu0
      %1374 = vdwg.mxu0
      %v1375 = vmax.f32 %v865, %v993
      %v1376 = vmax.f32 %v868, %v996
      %v1377 = vmax.f32 %v873, %v1001
      %v1378 = vmax.f32 %v876, %v1004
      %v1379 = vmax.f32 %v881, %v1009
      %v1380 = vmax.f32 %v884, %v1012
      %v1381 = vmax.f32 %v889, %v1017
      %v1382 = vmax.f32 %v892, %v1020
      %v1383 = vmax.f32 %v897, %v1025
      %v1384 = vmax.f32 %v900, %v1028
      %v1385 = vmax.f32 %v905, %v1033
      %v1386 = vmax.f32 %v908, %v1036
      %v1387 = vmax.f32 %v913, %v1041
      %v1388 = vmax.f32 %v916, %v1044
      %v1389 = vmax.f32 %v921, %v1049
      %v1390 = vmax.f32 %v924, %v1052
      %v1391 = vmax.f32 %v929, %v1057
      %v1392 = vmax.f32 %v932, %v1060
      %v1393 = vmax.f32 %v937, %v1065
      %v1394 = vmax.f32 %v940, %v1068
      %v1395 = vmax.f32 %v945, %v1073
      %v1396 = vmax.f32 %v948, %v1076
      %v1397 = vmax.f32 %v953, %v1081
      %v1398 = vmax.f32 %v956, %v1084
      %v1399 = vmax.f32 %v961, %v1089
      %v1400 = vmax.f32 %v964, %v1092
      %v1401 = vmax.f32 %v969, %v1097
      %v1402 = vmax.f32 %v972, %v1100
      %v1403 = vmax.f32 %v977, %v1105
      %v1404 = vmax.f32 %v980, %v1108
      %v1405 = vmax.f32 %v985, %v1113
      %v1406 = vmax.f32 %v988, %v1116
      %v1407 = vmax.f32 %v1121, %v1249
      %v1408 = vmax.f32 %v1124, %v1252
      %v1409 = vmax.f32 %v1129, %v1257
      %v1410 = vmax.f32 %v1132, %v1260
      %v1411 = vmax.f32 %v1137, %v1265
      %v1412 = vmax.f32 %v1140, %v1268
      %v1413 = vmax.f32 %v1145, %v1273
      %v1414 = vmax.f32 %v1148, %v1276
      %v1415 = vmax.f32 %v1153, %v1281
      %v1416 = vmax.f32 %v1156, %v1284
      %v1417 = vmax.f32 %v1161, %v1289
      %v1418 = vmax.f32 %v1164, %v1292
      %v1419 = vmax.f32 %v1169, %v1297
      %v1420 = vmax.f32 %v1172, %v1300
      %v1421 = vmax.f32 %v1177, %v1305
      %v1422 = vmax.f32 %v1180, %v1308
      %v1423 = vmax.f32 %v1185, %v1313
      %v1424 = vmax.f32 %v1188, %v1316
      %v1425 = vmax.f32 %v1193, %v1321
      %v1426 = vmax.f32 %v1196, %v1324
      %v1427 = vmax.f32 %v1201, %v1329
      %v1428 = vmax.f32 %v1204, %v1332
      %v1429 = vmax.f32 %v1209, %v1337
      %v1430 = vmax.f32 %v1212, %v1340
      %v1431 = vmax.f32 %v1217, %v1345
      %v1432 = vmax.f32 %v1220, %v1348
      %v1433 = vmax.f32 %v1225, %v1353
      %v1434 = vmax.f32 %v1228, %v1356
      %v1435 = vmax.f32 %v1233, %v1361
      %v1436 = vmax.f32 %v1236, %v1364
      %v1437 = vmax.f32 %v1241, %v1369
      %v1438 = vmax.f32 %v1244, %v1372
      %v1439 = vmax.f32 %v1375, %v1407
      %v1440 = vmax.f32 %v1376, %v1408
      %v1441 = vmax.f32 %v1377, %v1409
      %v1442 = vmax.f32 %v1378, %v1410
      %v1443 = vmax.f32 %v1379, %v1411
      %v1444 = vmax.f32 %v1380, %v1412
      %v1445 = vmax.f32 %v1381, %v1413
      %v1446 = vmax.f32 %v1382, %v1414
      %v1447 = vmax.f32 %v1383, %v1415
      %v1448 = vmax.f32 %v1384, %v1416
      %v1449 = vmax.f32 %v1385, %v1417
      %v1450 = vmax.f32 %v1386, %v1418
      %v1451 = vmax.f32 %v1387, %v1419
      %v1452 = vmax.f32 %v1388, %v1420
      %v1453 = vmax.f32 %v1389, %v1421
      %v1454 = vmax.f32 %v1390, %v1422
      %v1455 = vmax.f32 %v1391, %v1423
      %v1456 = vmax.f32 %v1392, %v1424
      %v1457 = vmax.f32 %v1393, %v1425
      %v1458 = vmax.f32 %v1394, %v1426
      %v1459 = vmax.f32 %v1395, %v1427
      %v1460 = vmax.f32 %v1396, %v1428
      %v1461 = vmax.f32 %v1397, %v1429
      %v1462 = vmax.f32 %v1398, %v1430
      %v1463 = vmax.f32 %v1399, %v1431
      %v1464 = vmax.f32 %v1400, %v1432
      %v1465 = vmax.f32 %v1401, %v1433
      %v1466 = vmax.f32 %v1402, %v1434
      %v1467 = vmax.f32 %v1403, %v1435
      %v1468 = vmax.f32 %v1404, %v1436
      %v1469 = vmax.f32 %v1405, %v1437
      %v1470 = vmax.f32 %v1406, %v1438
      %v1471 = vld [vmem:[%s2] sm:$0x1]
      %v1473 = vlaneseq
      %v1474 = vshrl.u32 %v1473, 7
      %v1475 = vsub.s32 0, %v1474
      %v1476 = vrot.slane %v1471, %v1475
      %v1478 = vadd.f32 %v1439, %v1476
      %v1479 = vadd.f32 %v1440, %v1476
      %v1480 = vadd.f32 %v1441, %v1476
      %v1481 = vadd.f32 %v1442, %v1476
      %v1482 = vadd.f32 %v1443, %v1476
      %v1483 = vadd.f32 %v1444, %v1476
      %v1484 = vadd.f32 %v1445, %v1476
      %v1485 = vadd.f32 %v1446, %v1476
      %v1486 = vadd.f32 %v1447, %v1476
      %v1487 = vadd.f32 %v1448, %v1476
      %v1488 = vadd.f32 %v1449, %v1476
      %v1489 = vadd.f32 %v1450, %v1476
      %v1490 = vadd.f32 %v1451, %v1476
      %v1491 = vadd.f32 %v1452, %v1476
      %v1492 = vadd.f32 %v1453, %v1476
      %v1493 = vadd.f32 %v1454, %v1476
      %v1494 = vadd.f32 %v1455, %v1476
      %v1495 = vadd.f32 %v1456, %v1476
      %v1496 = vadd.f32 %v1457, %v1476
      %v1497 = vadd.f32 %v1458, %v1476
      %v1498 = vadd.f32 %v1459, %v1476
      %v1499 = vadd.f32 %v1460, %v1476
      %v1500 = vadd.f32 %v1461, %v1476
      %v1501 = vadd.f32 %v1462, %v1476
      %v1502 = vadd.f32 %v1463, %v1476
      %v1503 = vadd.f32 %v1464, %v1476
      %v1504 = vadd.f32 %v1465, %v1476
      %v1505 = vadd.f32 %v1466, %v1476
      %v1506 = vadd.f32 %v1467, %v1476
      %v1507 = vadd.f32 %v1468, %v1476
      %v1508 = vadd.f32 %v1469, %v1476
      %v1509 = vadd.f32 %v1470, %v1476
      %v1510 = vmax.f32 %v1478, 0.0
      %v1511 = vmax.f32 %v1479, 0.0
      %v1512 = vmax.f32 %v1480, 0.0
      %v1513 = vmax.f32 %v1481, 0.0
      %v1514 = vmax.f32 %v1482, 0.0
      %v1515 = vmax.f32 %v1483, 0.0
      %v1516 = vmax.f32 %v1484, 0.0
      %v1517 = vmax.f32 %v1485, 0.0
      %v1518 = vmax.f32 %v1486, 0.0
      %v1519 = vmax.f32 %v1487, 0.0
      %v1520 = vmax.f32 %v1488, 0.0
      %v1521 = vmax.f32 %v1489, 0.0
      %v1522 = vmax.f32 %v1490, 0.0
      %v1523 = vmax.f32 %v1491, 0.0
      %v1524 = vmax.f32 %v1492, 0.0
      %v1525 = vmax.f32 %v1493, 0.0
      %v1526 = vmax.f32 %v1494, 0.0
      %v1527 = vmax.f32 %v1495, 0.0
      %v1528 = vmax.f32 %v1496, 0.0
      %v1529 = vmax.f32 %v1497, 0.0
      %v1530 = vmax.f32 %v1498, 0.0
      %v1531 = vmax.f32 %v1499, 0.0
      %v1532 = vmax.f32 %v1500, 0.0
      %v1533 = vmax.f32 %v1501, 0.0
      %v1534 = vmax.f32 %v1502, 0.0
      %v1535 = vmax.f32 %v1503, 0.0
      %v1536 = vmax.f32 %v1504, 0.0
      %v1537 = vmax.f32 %v1505, 0.0
      %v1538 = vmax.f32 %v1506, 0.0
      %v1539 = vmax.f32 %v1507, 0.0
      %v1540 = vmax.f32 %v1508, 0.0
      %v1541 = vmax.f32 %v1509, 0.0
      %vm1542 = vcmask 261120
      %1543 = vst.msk [vmem:[%s172] sm:$0xff] %vm1542, %v1510
      %1544 = vst.msk [vmem:[%s172 + $0x8] sm:$0xff] %vm1542, %v1511
      %1545 = vst.msk [vmem:[%s172 + $0x10] sm:$0xff] %vm1542, %v1512
      %1546 = vst.msk [vmem:[%s172 + $0x18] sm:$0xff] %vm1542, %v1513
      %1547 = vst.msk [vmem:[%s172 + $0x20] sm:$0xff] %vm1542, %v1514
      %1548 = vst.msk [vmem:[%s172 + $0x28] sm:$0xff] %vm1542, %v1515
      %1549 = vst.msk [vmem:[%s172 + $0x30] sm:$0xff] %vm1542, %v1516
      %1550 = vst.msk [vmem:[%s172 + $0x38] sm:$0xff] %vm1542, %v1517
      %1551 = vst.msk [vmem:[%s172 + $0x40] sm:$0xff] %vm1542, %v1518
      %1552 = vst.msk [vmem:[%s172 + $0x48] sm:$0xff] %vm1542, %v1519
      %1553 = vst.msk [vmem:[%s172 + $0x50] sm:$0xff] %vm1542, %v1520
      %1554 = vst.msk [vmem:[%s172 + $0x58] sm:$0xff] %vm1542, %v1521
      %1555 = vst.msk [vmem:[%s172 + $0x60] sm:$0xff] %vm1542, %v1522
      %1556 = vst.msk [vmem:[%s172 + $0x68] sm:$0xff] %vm1542, %v1523
      %1557 = vst.msk [vmem:[%s172 + $0x70] sm:$0xff] %vm1542, %v1524
      %1558 = vst.msk [vmem:[%s172 + $0x78] sm:$0xff] %vm1542, %v1525
      %1559 = vst.msk [vmem:[%s172 + $0x80] sm:$0xff] %vm1542, %v1526
      %1560 = vst.msk [vmem:[%s172 + $0x88] sm:$0xff] %vm1542, %v1527
      %1561 = vst.msk [vmem:[%s172 + $0x90] sm:$0xff] %vm1542, %v1528
      %1562 = vst.msk [vmem:[%s172 + $0x98] sm:$0xff] %vm1542, %v1529
      %1563 = vst.msk [vmem:[%s172 + $0xa0] sm:$0xff] %vm1542, %v1530
      %1564 = vst.msk [vmem:[%s172 + $0xa8] sm:$0xff] %vm1542, %v1531
      %1565 = vst.msk [vmem:[%s172 + $0xb0] sm:$0xff] %vm1542, %v1532
      %1566 = vst.msk [vmem:[%s172 + $0xb8] sm:$0xff] %vm1542, %v1533
      %1567 = vst.msk [vmem:[%s172 + $0xc0] sm:$0xff] %vm1542, %v1534
      %1568 = vst.msk [vmem:[%s172 + $0xc8] sm:$0xff] %vm1542, %v1535
      %1569 = vst.msk [vmem:[%s172 + $0xd0] sm:$0xff] %vm1542, %v1536
      %1570 = vst.msk [vmem:[%s172 + $0xd8] sm:$0xff] %vm1542, %v1537
      %1571 = vst.msk [vmem:[%s172 + $0xe0] sm:$0xff] %vm1542, %v1538
      %1572 = vst.msk [vmem:[%s172 + $0xe8] sm:$0xff] %vm1542, %v1539
      %1573 = vst.msk [vmem:[%s172 + $0xf0] sm:$0xff] %vm1542, %v1540
      %1574 = vst.msk [vmem:[%s172 + $0xf8] sm:$0xff] %vm1542, %v1541
      %s1575 = smul.u32 32, %s14
      %p1576 = scmp.lt.s32.totalorder %s1575, 63
      %s1577 = scalar_select %p1576, %s1575, 63
      %s1578 = smul.addr %s1577, 8
      %s1579 = scalar_lea.vmem %s3, %s1578
      // Predicated region
      $region33: #{cnn_forward.3} parent=31 // pred_check
        %p1580 = pneg %p100
      $region34: #{cnn_forward.3} parent=31 // pred_check_branch
        %1582 = sbr.rel (%p1580) target = $region36
      $region35: #{cnn_forward.3} parent=31 // pred_region
        %s1583 = smul.u32 32, %s14
      $region36: #{cnn_forward.3} parent=31 // pred_fallthru
        _
    $region32: #{cnn_forward.3} parent=5 // pred_fallthru
      _
    %p1584 = scmp.le.s32.totalorder 2, %s9
    // Predicated region
    $region37: #{cnn_forward.3} parent=5 // pred_check
      %p1585 = pneg %p1584
    $region38: #{cnn_forward.3} parent=5 // pred_check_branch
      %1587 = sbr.rel (%p1585) target = $region40
    $region39: #{cnn_forward.3} parent=5 // pred_region
      %s1588 = ssub.s32 %s9, 2
      // Predicated region
      $region41: #{cnn_forward.3} parent=39 // pred_check
        %p1589 = pneg %p106
      $region42: #{cnn_forward.3} parent=39 // pred_check_branch
        %1591 = sbr.rel (%p1589) target = $region44
      $region43: #{cnn_forward.3} parent=39 // pred_region
        %s1592 = smul.u32 32, %s15
        %p1593 = scmp.lt.s32.totalorder %s1592, 63
        %s1594 = scalar_select %p1593, %s1592, 63
        %s1595 = smul.addr %s1594, 8
        %s1596 = scalar_lea.vmem %s3, %s1595
      $region44: #{cnn_forward.3} parent=39 // pred_fallthru
        _
    $region40: #{cnn_forward.3} parent=5 // pred_fallthru
      _
  $region6: #{cnn_forward.3} parent=0 // loop_footer
    %s13 = sadd.s32 1, %s9
  $region7: #{cnn_forward.3} parent=0 // loop_footer_branch
    %8 = sbr.rel target = $region3
  $region8: #{cnn_forward.3} parent=0 // loop_exit
    _

// kernel: cnn_forward.4
$region0: #{cnn_forward.4}
  #allocation0 [shape = 'u32[]', space=smem, size = 0x4, offset = 0x4, fixed_abs, tag = 'smem constant byte address 0x4 - core index']
  #allocation1 [shape = 'u32[144,128]{1,0:T(1,128)}', space=vmem, size = 0x12000, scoped, tag = 'internal scratch']
  %s0 = inlined_call_operand.vmem [shape: bf16[416,288], index: 0, kind: input, shape index: {}]
  %s1 = inlined_call_operand.vmem [shape: bf16[288,64], index: 1, kind: input, shape index: {}]
  %s2 = inlined_call_operand.vmem [shape: f32[1,64], index: 2, kind: input, shape index: {}]
  %s3 = inlined_call_operand.vmem [shape: f32[104,64], index: 3, kind: output, shape index: {}]
  %s4 = sld [smem:[#allocation0]]
  $region22: #{cnn_forward.4} parent=0
    _
  %s6 = ssub.s32 1, %s4
  %s7 = scalar_select 0, %s6, %s4
  // Predicated region
  $region2: #{cnn_forward.4} parent=0 // pred_check
    _
  $region3: #{cnn_forward.4} parent=0 // pred_check_branch
    %9 = sbr.rel (0) target = $region5
  $region4: #{cnn_forward.4} parent=0 // pred_region
    _
  $region5: #{cnn_forward.4} parent=0 // pred_fallthru
    _
  // Predicated region
  $region6: #{cnn_forward.4} parent=0 // pred_check
    _
  $region7: #{cnn_forward.4} parent=0 // pred_check_branch
    %11 = sbr.rel (0) target = $region9
  $region8: #{cnn_forward.4} parent=0 // pred_region
    _
  $region9: #{cnn_forward.4} parent=0 // pred_fallthru
    _
  // Predicated region
  $region10: #{cnn_forward.4} parent=0 // pred_check
    _
  $region11: #{cnn_forward.4} parent=0 // pred_check_branch
    %13 = sbr.rel (0) target = $region13
  $region12: #{cnn_forward.4} parent=0 // pred_region
    _
  $region13: #{cnn_forward.4} parent=0 // pred_fallthru
    _
  %v15 = vld [vmem:[%s0] sm:$0xff]
  %v16 = vld [vmem:[%s0 + $0x8] sm:$0xf]
  %v17 = vld [vmem:[%s0 + $0xc] sm:$0xff]
  %v18 = vld [vmem:[%s0 + $0x14] sm:$0xf]
  %v19 = vld [vmem:[%s0 + $0x18] sm:$0xff]
  %v20 = vld [vmem:[%s0 + $0x20] sm:$0xf]
  %v21 = vld [vmem:[%s0 + $0x24] sm:$0xff]
  %v22 = vld [vmem:[%s0 + $0x2c] sm:$0xf]
  %v23 = vld [vmem:[%s0 + $0x30] sm:$0xff]
  %v24 = vld [vmem:[%s0 + $0x38] sm:$0xf]
  %v25 = vld [vmem:[%s0 + $0x3c] sm:$0xff]
  %v26 = vld [vmem:[%s0 + $0x44] sm:$0xf]
  %v27 = vld [vmem:[%s0 + $0x48] sm:$0xff]
  %v28 = vld [vmem:[%s0 + $0x50] sm:$0xf]
  %v29 = vld [vmem:[%s0 + $0x54] sm:$0xff]
  %v30 = vld [vmem:[%s0 + $0x5c] sm:$0xf]
  %v31 = vld [vmem:[%s0 + $0x60] sm:$0xff]
  %v32 = vld [vmem:[%s0 + $0x68] sm:$0xf]
  %v33 = vld [vmem:[%s0 + $0x6c] sm:$0xff]
  %v34 = vld [vmem:[%s0 + $0x74] sm:$0xf]
  %v35 = vld [vmem:[%s0 + $0x78] sm:$0xff]
  %v36 = vld [vmem:[%s0 + $0x80] sm:$0xf]
  %v37 = vld [vmem:[%s0 + $0x84] sm:$0xff]
  %v38 = vld [vmem:[%s0 + $0x8c] sm:$0xf]
  %v39 = vld [vmem:[%s0 + $0x90] sm:$0xff]
  %v40 = vld [vmem:[%s0 + $0x98] sm:$0xf]
  %v41 = vld [vmem:[%s0 + $0x9c] sm:$0xff]
  %v42 = vld [vmem:[%s0 + $0xa4] sm:$0xf]
  %v43 = vld [vmem:[%s0 + $0xa8] sm:$0xff]
  %v44 = vld [vmem:[%s0 + $0xb0] sm:$0xf]
  %v45 = vld [vmem:[%s0 + $0xb4] sm:$0xff]
  %v46 = vld [vmem:[%s0 + $0xbc] sm:$0xf]
  %v47 = vld [vmem:[%s0 + $0xc0] sm:$0xff]
  %v48 = vld [vmem:[%s0 + $0xc8] sm:$0xf]
  %v49 = vld [vmem:[%s0 + $0xcc] sm:$0xff]
  %v50 = vld [vmem:[%s0 + $0xd4] sm:$0xf]
  %v51 = vld [vmem:[%s0 + $0xd8] sm:$0xff]
  %v52 = vld [vmem:[%s0 + $0xe0] sm:$0xf]
  %v53 = vld [vmem:[%s0 + $0xe4] sm:$0xff]
  %v54 = vld [vmem:[%s0 + $0xec] sm:$0xf]
  %v55 = vld [vmem:[%s0 + $0xf0] sm:$0xff]
  %v56 = vld [vmem:[%s0 + $0xf8] sm:$0xf]
  %v57 = vld [vmem:[%s0 + $0xfc] sm:$0xff]
  %v58 = vld [vmem:[%s0 + $0x104] sm:$0xf]
  %v59 = vld [vmem:[%s0 + $0x108] sm:$0xff]
  %v60 = vld [vmem:[%s0 + $0x110] sm:$0xf]
  %v61 = vld [vmem:[%s0 + $0x114] sm:$0xff]
  %v62 = vld [vmem:[%s0 + $0x11c] sm:$0xf]
  %v63 = vld [vmem:[%s0 + $0x120] sm:$0xff]
  %v64 = vld [vmem:[%s0 + $0x128] sm:$0xf]
  %v65 = vld [vmem:[%s0 + $0x12c] sm:$0xff]
  %v66 = vld [vmem:[%s0 + $0x134] sm:$0xf]
  %v67 = vld [vmem:[%s0 + $0x138] sm:$0xff]
  %v68 = vld [vmem:[%s0 + $0x140] sm:$0xf]
  %v69 = vld [vmem:[%s0 + $0x144] sm:$0xff]
  %v70 = vld [vmem:[%s0 + $0x14c] sm:$0xf]
  %v71 = vld [vmem:[%s0 + $0x150] sm:$0xff]
  %v72 = vld [vmem:[%s0 + $0x158] sm:$0xf]
  %v73 = vld [vmem:[%s0 + $0x15c] sm:$0xff]
  %v74 = vld [vmem:[%s0 + $0x164] sm:$0xf]
  %v75 = vld [vmem:[%s0 + $0x168] sm:$0xff]
  %v76 = vld [vmem:[%s0 + $0x170] sm:$0xf]
  %v77 = vld [vmem:[%s0 + $0x174] sm:$0xff]
  %v78 = vld [vmem:[%s0 + $0x17c] sm:$0xf]
  %v79 = vld [vmem:[%s0 + $0x180] sm:$0xff]
  %v80 = vld [vmem:[%s0 + $0x188] sm:$0xf]
  %v81 = vld [vmem:[%s0 + $0x18c] sm:$0xff]
  %v82 = vld [vmem:[%s0 + $0x194] sm:$0xf]
  %v83 = vld [vmem:[%s0 + $0x198] sm:$0xff]
  %v84 = vld [vmem:[%s0 + $0x1a0] sm:$0xf]
  %v85 = vld [vmem:[%s0 + $0x1a4] sm:$0xff]
  %v86 = vld [vmem:[%s0 + $0x1ac] sm:$0xf]
  %v87 = vld [vmem:[%s0 + $0x1b0] sm:$0xff]
  %v88 = vld [vmem:[%s0 + $0x1b8] sm:$0xf]
  %v89 = vld [vmem:[%s0 + $0x1bc] sm:$0xff]
  %v90 = vld [vmem:[%s0 + $0x1c4] sm:$0xf]
  %v91 = vld [vmem:[%s0 + $0x1c8] sm:$0xff]
  %v92 = vld [vmem:[%s0 + $0x1d0] sm:$0xf]
  %v93 = vld [vmem:[%s0 + $0x1d4] sm:$0xff]
  %v94 = vld [vmem:[%s0 + $0x1dc] sm:$0xf]
  %v95 = vld [vmem:[%s0 + $0x1e0] sm:$0xff]
  %v96 = vld [vmem:[%s0 + $0x1e8] sm:$0xf]
  %v97 = vld [vmem:[%s0 + $0x1ec] sm:$0xff]
  %v98 = vld [vmem:[%s0 + $0x1f4] sm:$0xf]
  %v99 = vld [vmem:[%s0 + $0x1f8] sm:$0xff]
  %v100 = vld [vmem:[%s0 + $0x200] sm:$0xf]
  %v101 = vld [vmem:[%s0 + $0x204] sm:$0xff]
  %v102 = vld [vmem:[%s0 + $0x20c] sm:$0xf]
  %v103 = vld [vmem:[%s0 + $0x210] sm:$0xff]
  %v104 = vld [vmem:[%s0 + $0x218] sm:$0xf]
  %v105 = vld [vmem:[%s0 + $0x21c] sm:$0xff]
  %v106 = vld [vmem:[%s0 + $0x224] sm:$0xf]
  %v107 = vld [vmem:[%s0 + $0x228] sm:$0xff]
  %v108 = vld [vmem:[%s0 + $0x230] sm:$0xf]
  %v109 = vld [vmem:[%s0 + $0x234] sm:$0xff]
  %v110 = vld [vmem:[%s0 + $0x23c] sm:$0xf]
  %v111 = vld [vmem:[%s0 + $0x240] sm:$0xff]
  %v112 = vld [vmem:[%s0 + $0x248] sm:$0xf]
  %v113 = vld [vmem:[%s0 + $0x24c] sm:$0xff]
  %v114 = vld [vmem:[%s0 + $0x254] sm:$0xf]
  %v115 = vld [vmem:[%s0 + $0x258] sm:$0xff]
  %v116 = vld [vmem:[%s0 + $0x260] sm:$0xf]
  %v117 = vld [vmem:[%s0 + $0x264] sm:$0xff]
  %v118 = vld [vmem:[%s0 + $0x26c] sm:$0xf]
  %v119 = vld [vmem:[%s1] sm:$0xf]
  %v120 = vld [vmem:[%s1 + $0x4] sm:$0xf]
  %v121 = vld [vmem:[%s1 + $0x8] sm:$0xf]
  %v122 = vld [vmem:[%s1 + $0xc] sm:$0xf]
  %v123 = vld [vmem:[%s1 + $0x10] sm:$0xf]
  %v124 = vld [vmem:[%s1 + $0x14] sm:$0xf]
  %v125 = vld [vmem:[%s1 + $0x18] sm:$0xf]
  %v126 = vld [vmem:[%s1 + $0x1c] sm:$0xf]
  %v127 = vld [vmem:[%s1 + $0x20] sm:$0xf]
  %v128 = vld [vmem:[%s1 + $0x24] sm:$0xf]
  %v129 = vld [vmem:[%s1 + $0x28] sm:$0xf]
  %v130 = vld [vmem:[%s1 + $0x2c] sm:$0xf]
  %v131 = vld [vmem:[%s1 + $0x30] sm:$0xf]
  %v132 = vld [vmem:[%s1 + $0x34] sm:$0xf]
  %v133 = vld [vmem:[%s1 + $0x38] sm:$0xf]
  %v134 = vld [vmem:[%s1 + $0x3c] sm:$0xf]
  %v135 = vld [vmem:[%s1 + $0x40] sm:$0xf]
  %v136 = vld [vmem:[%s1 + $0x44] sm:$0xf]
  %v137 = vld [vmem:[%s1 + $0x48] sm:$0xf]
  %v138 = vld [vmem:[%s1 + $0x4c] sm:$0xf]
  %v139 = vld [vmem:[%s1 + $0x50] sm:$0xf]
  %v140 = vld [vmem:[%s1 + $0x54] sm:$0xf]
  %v141 = vld [vmem:[%s1 + $0x58] sm:$0xf]
  %v142 = vld [vmem:[%s1 + $0x5c] sm:$0xf]
  %v143 = vld [vmem:[%s1 + $0x60] sm:$0xf]
  %v144 = vld [vmem:[%s1 + $0x64] sm:$0xf]
  %v145 = vld [vmem:[%s1 + $0x68] sm:$0xf]
  %v146 = vld [vmem:[%s1 + $0x6c] sm:$0xf]
  %v147 = vld [vmem:[%s1 + $0x70] sm:$0xf]
  %v148 = vld [vmem:[%s1 + $0x74] sm:$0xf]
  %v149 = vld [vmem:[%s1 + $0x78] sm:$0xf]
  %v150 = vld [vmem:[%s1 + $0x7c] sm:$0xf]
  %v151 = vld [vmem:[%s1 + $0x80] sm:$0xf]
  %v152 = vld [vmem:[%s1 + $0x84] sm:$0xf]
  %v153 = vld [vmem:[%s1 + $0x88] sm:$0xf]
  %v154 = vld [vmem:[%s1 + $0x8c] sm:$0xf]
  %v259 = vunpack.c.l.b16 %v15
  %v260 = vunpack.c.h.b16 %v15
  %v261 = vunpack.c.l.b16 %v16
  %v262 = vunpack.c.l.b16 %v17
  %v263 = vunpack.c.h.b16 %v17
  %v264 = vunpack.c.l.b16 %v18
  %v265 = vunpack.c.l.b16 %v19
  %v266 = vunpack.c.h.b16 %v19
  %v267 = vunpack.c.l.b16 %v20
  %v268 = vunpack.c.l.b16 %v21
  %v269 = vunpack.c.h.b16 %v21
  %v270 = vunpack.c.l.b16 %v22
  %v271 = vunpack.c.l.b16 %v23
  %v272 = vunpack.c.h.b16 %v23
  %v273 = vunpack.c.l.b16 %v24
  %v274 = vunpack.c.l.b16 %v25
  %v275 = vunpack.c.h.b16 %v25
  %v276 = vunpack.c.l.b16 %v26
  %v277 = vunpack.c.l.b16 %v27
  %v278 = vunpack.c.h.b16 %v27
  %v279 = vunpack.c.l.b16 %v28
  %v280 = vunpack.c.l.b16 %v29
  %v281 = vunpack.c.h.b16 %v29
  %v282 = vunpack.c.l.b16 %v30
  %v283 = vunpack.c.l.b16 %v31
  %v284 = vunpack.c.h.b16 %v31
  %v285 = vunpack.c.l.b16 %v32
  %v286 = vunpack.c.l.b16 %v33
  %v287 = vunpack.c.h.b16 %v33
  %v288 = vunpack.c.l.b16 %v34
  %v289 = vunpack.c.l.b16 %v35
  %v290 = vunpack.c.h.b16 %v35
  %v291 = vunpack.c.l.b16 %v36
  %v292 = vunpack.c.l.b16 %v37
  %v293 = vunpack.c.h.b16 %v37
  %v294 = vunpack.c.l.b16 %v38
  %v295 = vunpack.c.l.b16 %v39
  %v296 = vunpack.c.h.b16 %v39
  %v297 = vunpack.c.l.b16 %v40
  %v298 = vunpack.c.l.b16 %v41
  %v299 = vunpack.c.h.b16 %v41
  %v300 = vunpack.c.l.b16 %v42
  %v301 = vunpack.c.l.b16 %v43
  %v302 = vunpack.c.h.b16 %v43
  %v303 = vunpack.c.l.b16 %v44
  %v304 = vunpack.c.l.b16 %v45
  %v305 = vunpack.c.h.b16 %v45
  %v306 = vunpack.c.l.b16 %v46
  %v307 = vunpack.c.l.b16 %v47
  %v308 = vunpack.c.h.b16 %v47
  %v309 = vunpack.c.l.b16 %v48
  %v310 = vunpack.c.l.b16 %v49
  %v311 = vunpack.c.h.b16 %v49
  %v312 = vunpack.c.l.b16 %v50
  %v313 = vunpack.c.l.b16 %v51
  %v314 = vunpack.c.h.b16 %v51
  %v315 = vunpack.c.l.b16 %v52
  %v316 = vunpack.c.l.b16 %v53
  %v317 = vunpack.c.h.b16 %v53
  %v318 = vunpack.c.l.b16 %v54
  %v319 = vunpack.c.l.b16 %v55
  %v320 = vunpack.c.h.b16 %v55
  %v321 = vunpack.c.l.b16 %v56
  %v322 = vunpack.c.l.b16 %v57
  %v323 = vunpack.c.h.b16 %v57
  %v324 = vunpack.c.l.b16 %v58
  %v325 = vunpack.c.l.b16 %v59
  %v326 = vunpack.c.h.b16 %v59
  %v327 = vunpack.c.l.b16 %v60
  %v328 = vunpack.c.l.b16 %v61
  %v329 = vunpack.c.h.b16 %v61
  %v330 = vunpack.c.l.b16 %v62
  %v331 = vunpack.c.l.b16 %v63
  %v332 = vunpack.c.h.b16 %v63
  %v333 = vunpack.c.l.b16 %v64
  %v334 = vunpack.c.l.b16 %v65
  %v335 = vunpack.c.h.b16 %v65
  %v336 = vunpack.c.l.b16 %v66
  %v337 = vunpack.c.l.b16 %v67
  %v338 = vunpack.c.h.b16 %v67
  %v339 = vunpack.c.l.b16 %v68
  %v340 = vunpack.c.l.b16 %v69
  %v341 = vunpack.c.h.b16 %v69
  %v342 = vunpack.c.l.b16 %v70
  %v343 = vunpack.c.l.b16 %v71
  %v344 = vunpack.c.h.b16 %v71
  %v345 = vunpack.c.l.b16 %v72
  %v346 = vunpack.c.l.b16 %v73
  %v347 = vunpack.c.h.b16 %v73
  %v348 = vunpack.c.l.b16 %v74
  %v349 = vunpack.c.l.b16 %v75
  %v350 = vunpack.c.h.b16 %v75
  %v351 = vunpack.c.l.b16 %v76
  %v352 = vunpack.c.l.b16 %v77
  %v353 = vunpack.c.h.b16 %v77
  %v354 = vunpack.c.l.b16 %v78
  %v355 = vunpack.c.l.b16 %v79
  %v356 = vunpack.c.h.b16 %v79
  %v357 = vunpack.c.l.b16 %v80
  %v358 = vunpack.c.l.b16 %v81
  %v359 = vunpack.c.h.b16 %v81
  %v360 = vunpack.c.l.b16 %v82
  %v361 = vunpack.c.l.b16 %v83
  %v362 = vunpack.c.h.b16 %v83
  %v363 = vunpack.c.l.b16 %v84
  %v364 = vunpack.c.l.b16 %v85
  %v365 = vunpack.c.h.b16 %v85
  %v366 = vunpack.c.l.b16 %v86
  %v367 = vunpack.c.l.b16 %v87
  %v368 = vunpack.c.h.b16 %v87
  %v369 = vunpack.c.l.b16 %v88
  %v370 = vunpack.c.l.b16 %v89
  %v371 = vunpack.c.h.b16 %v89
  %v372 = vunpack.c.l.b16 %v90
  %v373 = vunpack.c.l.b16 %v91
  %v374 = vunpack.c.h.b16 %v91
  %v375 = vunpack.c.l.b16 %v92
  %v376 = vunpack.c.l.b16 %v93
  %v377 = vunpack.c.h.b16 %v93
  %v378 = vunpack.c.l.b16 %v94
  %v379 = vunpack.c.l.b16 %v95
  %v380 = vunpack.c.h.b16 %v95
  %v381 = vunpack.c.l.b16 %v96
  %v382 = vunpack.c.l.b16 %v97
  %v383 = vunpack.c.h.b16 %v97
  %v384 = vunpack.c.l.b16 %v98
  %v385 = vunpack.c.l.b16 %v99
  %v386 = vunpack.c.h.b16 %v99
  %v387 = vunpack.c.l.b16 %v100
  %v388 = vunpack.c.l.b16 %v101
  %v389 = vunpack.c.h.b16 %v101
  %v390 = vunpack.c.l.b16 %v102
  %v391 = vunpack.c.l.b16 %v103
  %v392 = vunpack.c.h.b16 %v103
  %v393 = vunpack.c.l.b16 %v104
  %v394 = vunpack.c.l.b16 %v105
  %v395 = vunpack.c.h.b16 %v105
  %v396 = vunpack.c.l.b16 %v106
  %v397 = vunpack.c.l.b16 %v107
  %v398 = vunpack.c.h.b16 %v107
  %v399 = vunpack.c.l.b16 %v108
  %v400 = vunpack.c.l.b16 %v109
  %v401 = vunpack.c.h.b16 %v109
  %v402 = vunpack.c.l.b16 %v110
  %v403 = vunpack.c.l.b16 %v111
  %v404 = vunpack.c.h.b16 %v111
  %v405 = vunpack.c.l.b16 %v112
  %v406 = vunpack.c.l.b16 %v113
  %v407 = vunpack.c.h.b16 %v113
  %v408 = vunpack.c.l.b16 %v114
  %v409 = vunpack.c.l.b16 %v115
  %v410 = vunpack.c.h.b16 %v115
  %v411 = vunpack.c.l.b16 %v116
  %v412 = vunpack.c.l.b16 %v117
  %v413 = vunpack.c.h.b16 %v117
  %v414 = vunpack.c.l.b16 %v118
  %v415 = vpack.c.b16 %v262, %v259
  %v416 = vpack.c.b16 %v263, %v260
  %v417 = vpack.c.b16 %v264, %v261
  %v418 = vpack.c.b16 %v268, %v265
  %v419 = vpack.c.b16 %v269, %v266
  %v420 = vpack.c.b16 %v270, %v267
  %v421 = vpack.c.b16 %v274, %v271
  %v422 = vpack.c.b16 %v275, %v272
  %v423 = vpack.c.b16 %v276, %v273
  %v424 = vpack.c.b16 %v280, %v277
  %v425 = vpack.c.b16 %v281, %v278
  %v426 = vpack.c.b16 %v282, %v279
  %v427 = vpack.c.b16 %v286, %v283
  %v428 = vpack.c.b16 %v287, %v284
  %v429 = vpack.c.b16 %v288, %v285
  %v430 = vpack.c.b16 %v292, %v289
  %v431 = vpack.c.b16 %v293, %v290
  %v432 = vpack.c.b16 %v294, %v291
  %v433 = vpack.c.b16 %v298, %v295
  %v434 = vpack.c.b16 %v299, %v296
  %v435 = vpack.c.b16 %v300, %v297
  %v436 = vpack.c.b16 %v304, %v301
  %v437 = vpack.c.b16 %v305, %v302
  %v438 = vpack.c.b16 %v306, %v303
  %v439 = vpack.c.b16 %v310, %v307
  %v440 = vpack.c.b16 %v311, %v308
  %v441 = vpack.c.b16 %v312, %v309
  %v442 = vpack.c.b16 %v316, %v313
  %v443 = vpack.c.b16 %v317, %v314
  %v444 = vpack.c.b16 %v318, %v315
  %v445 = vpack.c.b16 %v322, %v319
  %v446 = vpack.c.b16 %v323, %v320
  %v447 = vpack.c.b16 %v324, %v321
  %v448 = vpack.c.b16 %v328, %v325
  %v449 = vpack.c.b16 %v329, %v326
  %v450 = vpack.c.b16 %v330, %v327
  %v451 = vpack.c.b16 %v334, %v331
  %v452 = vpack.c.b16 %v335, %v332
  %v453 = vpack.c.b16 %v336, %v333
  %v454 = vpack.c.b16 %v340, %v337
  %v455 = vpack.c.b16 %v341, %v338
  %v456 = vpack.c.b16 %v342, %v339
  %v457 = vpack.c.b16 %v346, %v343
  %v458 = vpack.c.b16 %v347, %v344
  %v459 = vpack.c.b16 %v348, %v345
  %v460 = vpack.c.b16 %v352, %v349
  %v461 = vpack.c.b16 %v353, %v350
  %v462 = vpack.c.b16 %v354, %v351
  %v463 = vpack.c.b16 %v358, %v355
  %v464 = vpack.c.b16 %v359, %v356
  %v465 = vpack.c.b16 %v360, %v357
  %v466 = vpack.c.b16 %v364, %v361
  %v467 = vpack.c.b16 %v365, %v362
  %v468 = vpack.c.b16 %v366, %v363
  %v469 = vpack.c.b16 %v370, %v367
  %v470 = vpack.c.b16 %v371, %v368
  %v471 = vpack.c.b16 %v372, %v369
  %v472 = vpack.c.b16 %v376, %v373
  %v473 = vpack.c.b16 %v377, %v374
  %v474 = vpack.c.b16 %v378, %v375
  %v475 = vpack.c.b16 %v382, %v379
  %v476 = vpack.c.b16 %v383, %v380
  %v477 = vpack.c.b16 %v384, %v381
  %v478 = vpack.c.b16 %v388, %v385
  %v479 = vpack.c.b16 %v389, %v386
  %v480 = vpack.c.b16 %v390, %v387
  %v481 = vpack.c.b16 %v394, %v391
  %v482 = vpack.c.b16 %v395, %v392
  %v483 = vpack.c.b16 %v396, %v393
  %v484 = vpack.c.b16 %v400, %v397
  %v485 = vpack.c.b16 %v401, %v398
  %v486 = vpack.c.b16 %v402, %v399
  %v487 = vpack.c.b16 %v406, %v403
  %v488 = vpack.c.b16 %v407, %v404
  %v489 = vpack.c.b16 %v408, %v405
  %v490 = vpack.c.b16 %v412, %v409
  %v491 = vpack.c.b16 %v413, %v410
  %v492 = vpack.c.b16 %v414, %v411
  %v581 = vunpack.c.l.b16 %v119
  %v582 = vunpack.c.l.b16 %v120
  %v583 = vunpack.c.l.b16 %v121
  %v584 = vunpack.c.l.b16 %v122
  %v585 = vunpack.c.l.b16 %v123
  %v586 = vunpack.c.l.b16 %v124
  %v587 = vunpack.c.l.b16 %v125
  %v588 = vunpack.c.l.b16 %v126
  %v589 = vunpack.c.l.b16 %v127
  %v590 = vunpack.c.l.b16 %v128
  %v591 = vunpack.c.l.b16 %v129
  %v592 = vunpack.c.l.b16 %v130
  %v593 = vunpack.c.l.b16 %v131
  %v594 = vunpack.c.l.b16 %v132
  %v595 = vunpack.c.l.b16 %v133
  %v596 = vunpack.c.l.b16 %v134
  %v597 = vunpack.c.l.b16 %v135
  %v598 = vunpack.c.l.b16 %v136
  %v599 = vunpack.c.l.b16 %v137
  %v600 = vunpack.c.l.b16 %v138
  %v601 = vunpack.c.l.b16 %v139
  %v602 = vunpack.c.l.b16 %v140
  %v603 = vunpack.c.l.b16 %v141
  %v604 = vunpack.c.l.b16 %v142
  %v605 = vunpack.c.l.b16 %v143
  %v606 = vunpack.c.l.b16 %v144
  %v607 = vunpack.c.l.b16 %v145
  %v608 = vunpack.c.l.b16 %v146
  %v609 = vunpack.c.l.b16 %v147
  %v610 = vunpack.c.l.b16 %v148
  %v611 = vunpack.c.l.b16 %v149
  %v612 = vunpack.c.l.b16 %v150
  %v613 = vunpack.c.l.b16 %v151
  %v614 = vunpack.c.l.b16 %v152
  %v615 = vunpack.c.l.b16 %v153
  %v616 = vunpack.c.l.b16 %v154
  %v617 = vpack.c.b16 %v582, %v581
  %v618 = vpack.c.b16 %v584, %v583
  %v619 = vpack.c.b16 %v586, %v585
  %v620 = vpack.c.b16 %v588, %v587
  %v621 = vpack.c.b16 %v590, %v589
  %v622 = vpack.c.b16 %v592, %v591
  %v623 = vpack.c.b16 %v594, %v593
  %v624 = vpack.c.b16 %v596, %v595
  %v625 = vpack.c.b16 %v598, %v597
  %v626 = vpack.c.b16 %v600, %v599
  %v627 = vpack.c.b16 %v602, %v601
  %v628 = vpack.c.b16 %v604, %v603
  %v629 = vpack.c.b16 %v606, %v605
  %v630 = vpack.c.b16 %v608, %v607
  %v631 = vpack.c.b16 %v610, %v609
  %v632 = vpack.c.b16 %v612, %v611
  %v633 = vpack.c.b16 %v614, %v613
  %v634 = vpack.c.b16 %v616, %v615
  %vm653 = vcmask 261120
  %v655 = vsel %vm653, %v417, 0
  %v658 = vsel %vm653, %v420, 0
  %v661 = vsel %vm653, %v423, 0
  %v664 = vsel %vm653, %v426, 0
  %v667 = vsel %vm653, %v429, 0
  %v670 = vsel %vm653, %v432, 0
  %v673 = vsel %vm653, %v435, 0
  %v676 = vsel %vm653, %v438, 0
  %v679 = vsel %vm653, %v441, 0
  %v682 = vsel %vm653, %v444, 0
  %v685 = vsel %vm653, %v447, 0
  %v688 = vsel %vm653, %v450, 0
  %v691 = vsel %vm653, %v453, 0
  %v694 = vsel %vm653, %v456, 0
  %v697 = vsel %vm653, %v459, 0
  %v700 = vsel %vm653, %v462, 0
  %v703 = vsel %vm653, %v465, 0
  %v706 = vsel %vm653, %v468, 0
  %v709 = vsel %vm653, %v471, 0
  %v712 = vsel %vm653, %v474, 0
  %v715 = vsel %vm653, %v477, 0
  %v718 = vsel %vm653, %v480, 0
  %v721 = vsel %vm653, %v483, 0
  %v724 = vsel %vm653, %v486, 0
  %v727 = vsel %vm653, %v489, 0
  %v730 = vsel %vm653, %v492, 0
  %732 = vmatprep.subr.bf16.mxu0 0
  %733 = vmatpush1.bf16.msra.mxu0 %v617
  %734 = vmatprep.subr.bf16.mxu0 0
  %735 = vmatpush1.bf16.msra.mxu0 %v618
  %736 = vmatprep.subr.bf16.mxu0 0
  %737 = vmatpush1.bf16.msra.mxu0 %v619
  %738 = vmatprep.subr.bf16.mxu0 0
  %739 = vmatpush1.bf16.msra.mxu0 %v620
  %740 = vmatprep.subr.bf16.mxu0 0
  %741 = vmatpush1.bf16.msra.mxu0 %v621
  %742 = vmatprep.subr.bf16.mxu0 0
  %743 = vmatpush1.bf16.msra.mxu0 %v622
  %744 = vmatprep.subr.bf16.mxu0 0
  %745 = vmatpush1.bf16.msra.mxu0 %v623
  %746 = vmatprep.subr.bf16.mxu0 0
  %747 = vmatpush1.bf16.msra.mxu0 %v624
  %748 = vmatprep.subr.bf16.mxu0 0
  %749 = vmatpush1.bf16.msra.mxu0 %v625
  %750 = vmatprep.subr.bf16.mxu0 0
  %751 = vmatpush1.bf16.msra.mxu0 %v626
  %752 = vmatprep.subr.bf16.mxu0 0
  %753 = vmatpush1.bf16.msra.mxu0 %v627
  %754 = vmatprep.subr.bf16.mxu0 0
  %755 = vmatpush1.bf16.msra.mxu0 %v628
  %756 = vmatprep.subr.bf16.mxu0 0
  %757 = vmatpush1.bf16.msra.mxu0 %v629
  %758 = vmatprep.subr.bf16.mxu0 0
  %759 = vmatpush1.bf16.msra.mxu0 %v630
  %760 = vmatprep.subr.bf16.mxu0 0
  %761 = vmatpush1.bf16.msra.mxu0 %v631
  %762 = vmatprep.subr.bf16.mxu0 0
  %763 = vmatpush1.bf16.msra.mxu0 %v632
  %764 = vmatprep.mubr.bf16.mxu0 %v416
  %765 = vmatmul.mubr.bf16.gmra.mrb[0].mxu0 %v415
  %v766 = vpop.f32.mrb[0].mxu0
  %v767 = vadd.f32 0.0, %v766
  %v768 = vpop.f32.mrb[0].mxu0
  %v769 = vpop.f32.mrb[0].mxu0
  %v770 = vadd.f32 0.0, %v769
  %v771 = vpop.f32.mrb[0].mxu0
  %772 = vmatprep.mubr.bf16.mxu0 %v419
  %773 = vmatmul.mubr.bf16.gmra.mrb[0].mxu0 %v418
  %v774 = vpop.f32.mrb[0].mxu0
  %v775 = vadd.f32 0.0, %v774
  %v776 = vpop.f32.mrb[0].mxu0
  %v777 = vpop.f32.mrb[0].mxu0
  %v778 = vadd.f32 0.0, %v777
  %v779 = vpop.f32.mrb[0].mxu0
  %780 = vmatprep.mubr.bf16.mxu0 %v422
  %781 = vmatmul.mubr.bf16.gmra.mrb[0].mxu0 %v421
  %v782 = vpop.f32.mrb[0].mxu0
  %v783 = vadd.f32 0.0, %v782
  %v784 = vpop.f32.mrb[0].mxu0
  %v785 = vpop.f32.mrb[0].mxu0
  %v786 = vadd.f32 0.0, %v785
  %v787 = vpop.f32.mrb[0].mxu0
  %788 = vmatprep.mubr.bf16.mxu0 %v425
  %789 = vmatmul.mubr.bf16.gmra.mrb[0].mxu0 %v424
  %v790 = vpop.f32.mrb[0].mxu0
  %v791 = vadd.f32 0.0, %v790
  %v792 = vpop.f32.mrb[0].mxu0
  %v793 = vpop.f32.mrb[0].mxu0
  %v794 = vadd.f32 0.0, %v793
  %v795 = vpop.f32.mrb[0].mxu0
  %796 = vmatprep.mubr.bf16.mxu0 %v428
  %797 = vmatmul.mubr.bf16.gmra.mrb[0].mxu0 %v427
  %v798 = vpop.f32.mrb[0].mxu0
  %v799 = vadd.f32 0.0, %v798
  %v800 = vpop.f32.mrb[0].mxu0
  %v801 = vpop.f32.mrb[0].mxu0
  %v802 = vadd.f32 0.0, %v801
  %v803 = vpop.f32.mrb[0].mxu0
  %804 = vmatprep.mubr.bf16.mxu0 %v431
  %805 = vmatmul.mubr.bf16.gmra.mrb[0].mxu0 %v430
  %v806 = vpop.f32.mrb[0].mxu0
  %v807 = vadd.f32 0.0, %v806
  %v808 = vpop.f32.mrb[0].mxu0
  %v809 = vpop.f32.mrb[0].mxu0
  %v810 = vadd.f32 0.0, %v809
  %v811 = vpop.f32.mrb[0].mxu0
  %812 = vmatprep.mubr.bf16.mxu0 %v434
  %813 = vmatmul.mubr.bf16.gmra.mrb[0].mxu0 %v433
  %v814 = vpop.f32.mrb[0].mxu0
  %v815 = vadd.f32 0.0, %v814
  %v816 = vpop.f32.mrb[0].mxu0
  %v817 = vpop.f32.mrb[0].mxu0
  %v818 = vadd.f32 0.0, %v817
  %v819 = vpop.f32.mrb[0].mxu0
  %820 = vmatprep.mubr.bf16.mxu0 %v437
  %821 = vmatmul.mubr.bf16.gmra.mrb[0].mxu0 %v436
  %v822 = vpop.f32.mrb[0].mxu0
  %v823 = vadd.f32 0.0, %v822
  %v824 = vpop.f32.mrb[0].mxu0
  %v825 = vpop.f32.mrb[0].mxu0
  %v826 = vadd.f32 0.0, %v825
  %v827 = vpop.f32.mrb[0].mxu0
  %828 = vmatprep.mubr.bf16.mxu0 %v440
  %829 = vmatmul.mubr.bf16.gmra.mrb[0].mxu0 %v439
  %v830 = vpop.f32.mrb[0].mxu0
  %v831 = vadd.f32 0.0, %v830
  %v832 = vpop.f32.mrb[0].mxu0
  %v833 = vpop.f32.mrb[0].mxu0
  %v834 = vadd.f32 0.0, %v833
  %v835 = vpop.f32.mrb[0].mxu0
  %836 = vmatprep.mubr.bf16.mxu0 %v443
  %837 = vmatmul.mubr.bf16.gmra.mrb[0].mxu0 %v442
  %v838 = vpop.f32.mrb[0].mxu0
  %v839 = vadd.f32 0.0, %v838
  %v840 = vpop.f32.mrb[0].mxu0
  %v841 = vpop.f32.mrb[0].mxu0
  %v842 = vadd.f32 0.0, %v841
  %v843 = vpop.f32.mrb[0].mxu0
  %844 = vmatprep.mubr.bf16.mxu0 %v446
  %845 = vmatmul.mubr.bf16.gmra.mrb[0].mxu0 %v445
  %v846 = vpop.f32.mrb[0].mxu0
  %v847 = vadd.f32 0.0, %v846
  %v848 = vpop.f32.mrb[0].mxu0
  %v849 = vpop.f32.mrb[0].mxu0
  %v850 = vadd.f32 0.0, %v849
  %v851 = vpop.f32.mrb[0].mxu0
  %852 = vmatprep.mubr.bf16.mxu0 %v449
  %853 = vmatmul.mubr.bf16.gmra.mrb[0].mxu0 %v448
  %v854 = vpop.f32.mrb[0].mxu0
  %v855 = vadd.f32 0.0, %v854
  %v856 = vpop.f32.mrb[0].mxu0
  %v857 = vpop.f32.mrb[0].mxu0
  %v858 = vadd.f32 0.0, %v857
  %v859 = vpop.f32.mrb[0].mxu0
  %860 = vmatprep.mubr.bf16.mxu0 %v452
  %861 = vmatmul.mubr.bf16.gmra.mrb[0].mxu0 %v451
  %v862 = vpop.f32.mrb[0].mxu0
  %v863 = vadd.f32 0.0, %v862
  %v864 = vpop.f32.mrb[0].mxu0
  %v865 = vpop.f32.mrb[0].mxu0
  %v866 = vadd.f32 0.0, %v865
  %v867 = vpop.f32.mrb[0].mxu0
  %868 = vmatprep.mubr.bf16.mxu0 %v455
  %869 = vmatmul.mubr.bf16.gmra.mrb[0].mxu0 %v454
  %v870 = vpop.f32.mrb[0].mxu0
  %v871 = vadd.f32 0.0, %v870
  %v872 = vpop.f32.mrb[0].mxu0
  %v873 = vpop.f32.mrb[0].mxu0
  %v874 = vadd.f32 0.0, %v873
  %v875 = vpop.f32.mrb[0].mxu0
  %876 = vmatprep.mubr.bf16.mxu0 %v458
  %877 = vmatmul.mubr.bf16.gmra.mrb[0].mxu0 %v457
  %v878 = vpop.f32.mrb[0].mxu0
  %v879 = vadd.f32 0.0, %v878
  %v880 = vpop.f32.mrb[0].mxu0
  %v881 = vpop.f32.mrb[0].mxu0
  %v882 = vadd.f32 0.0, %v881
  %v883 = vpop.f32.mrb[0].mxu0
  %884 = vmatprep.mubr.bf16.mxu0 %v461
  %885 = vmatmul.mubr.bf16.gmra.mrb[0].mxu0 %v460
  %v886 = vpop.f32.mrb[0].mxu0
  %v887 = vadd.f32 0.0, %v886
  %v888 = vpop.f32.mrb[0].mxu0
  %v889 = vpop.f32.mrb[0].mxu0
  %v890 = vadd.f32 0.0, %v889
  %v891 = vpop.f32.mrb[0].mxu0
  %892 = vmatprep.mubr.bf16.mxu0 %v464
  %893 = vmatmul.mubr.bf16.gmra.mrb[0].mxu0 %v463
  %v894 = vpop.f32.mrb[0].mxu0
  %v895 = vadd.f32 0.0, %v894
  %v896 = vpop.f32.mrb[0].mxu0
  %v897 = vpop.f32.mrb[0].mxu0
  %v898 = vadd.f32 0.0, %v897
  %v899 = vpop.f32.mrb[0].mxu0
  %900 = vmatprep.mubr.bf16.mxu0 %v467
  %901 = vmatmul.mubr.bf16.gmra.mrb[0].mxu0 %v466
  %v902 = vpop.f32.mrb[0].mxu0
  %v903 = vadd.f32 0.0, %v902
  %v904 = vpop.f32.mrb[0].mxu0
  %v905 = vpop.f32.mrb[0].mxu0
  %v906 = vadd.f32 0.0, %v905
  %v907 = vpop.f32.mrb[0].mxu0
  %908 = vmatprep.mubr.bf16.mxu0 %v470
  %909 = vmatmul.mubr.bf16.gmra.mrb[0].mxu0 %v469
  %v910 = vpop.f32.mrb[0].mxu0
  %v911 = vadd.f32 0.0, %v910
  %v912 = vpop.f32.mrb[0].mxu0
  %v913 = vpop.f32.mrb[0].mxu0
  %v914 = vadd.f32 0.0, %v913
  %v915 = vpop.f32.mrb[0].mxu0
  %916 = vmatprep.mubr.bf16.mxu0 %v473
  %917 = vmatmul.mubr.bf16.gmra.mrb[0].mxu0 %v472
  %v918 = vpop.f32.mrb[0].mxu0
  %v919 = vadd.f32 0.0, %v918
  %v920 = vpop.f32.mrb[0].mxu0
  %v921 = vpop.f32.mrb[0].mxu0
  %v922 = vadd.f32 0.0, %v921
  %v923 = vpop.f32.mrb[0].mxu0
  %924 = vmatprep.mubr.bf16.mxu0 %v476
  %925 = vmatmul.mubr.bf16.gmra.mrb[0].mxu0 %v475
  %v926 = vpop.f32.mrb[0].mxu0
  %v927 = vadd.f32 0.0, %v926
  %v928 = vpop.f32.mrb[0].mxu0
  %v929 = vpop.f32.mrb[0].mxu0
  %v930 = vadd.f32 0.0, %v929
  %v931 = vpop.f32.mrb[0].mxu0
  %932 = vmatprep.mubr.bf16.mxu0 %v479
  %933 = vmatmul.mubr.bf16.gmra.mrb[0].mxu0 %v478
  %v934 = vpop.f32.mrb[0].mxu0
  %v935 = vadd.f32 0.0, %v934
  %v936 = vpop.f32.mrb[0].mxu0
  %v937 = vpop.f32.mrb[0].mxu0
  %v938 = vadd.f32 0.0, %v937
  %v939 = vpop.f32.mrb[0].mxu0
  %940 = vmatprep.mubr.bf16.mxu0 %v482
  %941 = vmatmul.mubr.bf16.gmra.mrb[0].mxu0 %v481
  %v942 = vpop.f32.mrb[0].mxu0
  %v943 = vadd.f32 0.0, %v942
  %v944 = vpop.f32.mrb[0].mxu0
  %v945 = vpop.f32.mrb[0].mxu0
  %v946 = vadd.f32 0.0, %v945
  %v947 = vpop.f32.mrb[0].mxu0
  %948 = vmatprep.mubr.bf16.mxu0 %v485
  %949 = vmatmul.mubr.bf16.gmra.mrb[0].mxu0 %v484
  %v950 = vpop.f32.mrb[0].mxu0
  %v951 = vadd.f32 0.0, %v950
  %v952 = vpop.f32.mrb[0].mxu0
  %v953 = vpop.f32.mrb[0].mxu0
  %v954 = vadd.f32 0.0, %v953
  %v955 = vpop.f32.mrb[0].mxu0
  %956 = vmatprep.mubr.bf16.mxu0 %v488
  %957 = vmatmul.mubr.bf16.gmra.mrb[0].mxu0 %v487
  %v958 = vpop.f32.mrb[0].mxu0
  %v959 = vadd.f32 0.0, %v958
  %v960 = vpop.f32.mrb[0].mxu0
  %v961 = vpop.f32.mrb[0].mxu0
  %v962 = vadd.f32 0.0, %v961
  %v963 = vpop.f32.mrb[0].mxu0
  %964 = vmatprep.mubr.bf16.mxu0 %v491
  %965 = vmatmul.mubr.bf16.gmra.mrb[0].mxu0 %v490
  %v966 = vpop.f32.mrb[0].mxu0
  %v967 = vadd.f32 0.0, %v966
  %v968 = vpop.f32.mrb[0].mxu0
  %v969 = vpop.f32.mrb[0].mxu0
  %v970 = vadd.f32 0.0, %v969
  %v971 = vpop.f32.mrb[0].mxu0
  %972 = vdwg.mxu0
  %973 = vmatprep.subr.bf16.mxu0 0
  %974 = vmatpush1.bf16.msra.mxu0 %v633
  %975 = vmatprep.subr.bf16.mxu0 0
  %976 = vmatpush1.bf16.msra.mxu0 %v634
  %977 = vmatprep.subr.bf16.mxu0 0
  %978 = vmatpush1.bf16.msra.mxu0 0
  %979 = vmatprep.subr.bf16.mxu0 0
  %980 = vmatpush1.bf16.msra.mxu0 0
  %981 = vmatprep.subr.bf16.mxu0 0
  %982 = vmatpush1.bf16.msra.mxu0 0
  %983 = vmatprep.subr.bf16.mxu0 0
  %984 = vmatpush1.bf16.msra.mxu0 0
  %985 = vmatprep.subr.bf16.mxu0 0
  %986 = vmatpush1.bf16.msra.mxu0 0
  %987 = vmatprep.subr.bf16.mxu0 0
  %988 = vmatpush1.bf16.msra.mxu0 0
  %989 = vmatprep.subr.bf16.mxu0 0
  %990 = vmatpush1.bf16.msra.mxu0 0
  %991 = vmatprep.subr.bf16.mxu0 0
  %992 = vmatpush1.bf16.msra.mxu0 0
  %993 = vmatprep.subr.bf16.mxu0 0
  %994 = vmatpush1.bf16.msra.mxu0 0
  %995 = vmatprep.subr.bf16.mxu0 0
  %996 = vmatpush1.bf16.msra.mxu0 0
  %997 = vmatprep.subr.bf16.mxu0 0
  %998 = vmatpush1.bf16.msra.mxu0 0
  %999 = vmatprep.subr.bf16.mxu0 0
  %1000 = vmatpush1.bf16.msra.mxu0 0
  %1001 = vmatprep.subr.bf16.mxu0 0
  %1002 = vmatpush1.bf16.msra.mxu0 0
  %1003 = vmatprep.subr.bf16.mxu0 0
  %1004 = vmatpush1.bf16.msra.mxu0 0
  %1005 = vmatprep.mubr.bf16.mxu0 0
  %1006 = vmatmul.mubr.bf16.gmra.mrb[0].mxu0 %v655
  %v1007 = vpop.f32.mrb[0].mxu0
  %v1008 = vadd.f32 %v767, %v1007
  %v1009 = vpop.f32.mrb[0].mxu0
  %v1010 = vpop.f32.mrb[0].mxu0
  %v1011 = vadd.f32 %v770, %v1010
  %v1012 = vpop.f32.mrb[0].mxu0
  %1013 = vmatprep.mubr.bf16.mxu0 0
  %1014 = vmatmul.mubr.bf16.gmra.mrb[0].mxu0 %v658
  %v1015 = vpop.f32.mrb[0].mxu0
  %v1016 = vadd.f32 %v775, %v1015
  %v1017 = vpop.f32.mrb[0].mxu0
  %v1018 = vpop.f32.mrb[0].mxu0
  %v1019 = vadd.f32 %v778, %v1018
  %v1020 = vpop.f32.mrb[0].mxu0
  %1021 = vmatprep.mubr.bf16.mxu0 0
  %1022 = vmatmul.mubr.bf16.gmra.mrb[0].mxu0 %v661
  %v1023 = vpop.f32.mrb[0].mxu0
  %v1024 = vadd.f32 %v783, %v1023
  %v1025 = vpop.f32.mrb[0].mxu0
  %v1026 = vpop.f32.mrb[0].mxu0
  %v1027 = vadd.f32 %v786, %v1026
  %v1028 = vpop.f32.mrb[0].mxu0
  %1029 = vmatprep.mubr.bf16.mxu0 0
  %1030 = vmatmul.mubr.bf16.gmra.mrb[0].mxu0 %v664
  %v1031 = vpop.f32.mrb[0].mxu0
  %v1032 = vadd.f32 %v791, %v1031
  %v1033 = vpop.f32.mrb[0].mxu0
  %v1034 = vpop.f32.mrb[0].mxu0
  %v1035 = vadd.f32 %v794, %v1034
  %v1036 = vpop.f32.mrb[0].mxu0
  %1037 = vmatprep.mubr.bf16.mxu0 0
  %1038 = vmatmul.mubr.bf16.gmra.mrb[0].mxu0 %v667
  %v1039 = vpop.f32.mrb[0].mxu0
  %v1040 = vadd.f32 %v799, %v1039
  %v1041 = vpop.f32.mrb[0].mxu0
  %v1042 = vpop.f32.mrb[0].mxu0
  %v1043 = vadd.f32 %v802, %v1042
  %v1044 = vpop.f32.mrb[0].mxu0
  %1045 = vmatprep.mubr.bf16.mxu0 0
  %1046 = vmatmul.mubr.bf16.gmra.mrb[0].mxu0 %v670
  %v1047 = vpop.f32.mrb[0].mxu0
  %v1048 = vadd.f32 %v807, %v1047
  %v1049 = vpop.f32.mrb[0].mxu0
  %v1050 = vpop.f32.mrb[0].mxu0
  %v1051 = vadd.f32 %v810, %v1050
  %v1052 = vpop.f32.mrb[0].mxu0
  %1053 = vmatprep.mubr.bf16.mxu0 0
  %1054 = vmatmul.mubr.bf16.gmra.mrb[0].mxu0 %v673
  %v1055 = vpop.f32.mrb[0].mxu0
  %v1056 = vadd.f32 %v815, %v1055
  %v1057 = vpop.f32.mrb[0].mxu0
  %v1058 = vpop.f32.mrb[0].mxu0
  %v1059 = vadd.f32 %v818, %v1058
  %v1060 = vpop.f32.mrb[0].mxu0
  %1061 = vmatprep.mubr.bf16.mxu0 0
  %1062 = vmatmul.mubr.bf16.gmra.mrb[0].mxu0 %v676
  %v1063 = vpop.f32.mrb[0].mxu0
  %v1064 = vadd.f32 %v823, %v1063
  %v1065 = vpop.f32.mrb[0].mxu0
  %v1066 = vpop.f32.mrb[0].mxu0
  %v1067 = vadd.f32 %v826, %v1066
  %v1068 = vpop.f32.mrb[0].mxu0
  %1069 = vmatprep.mubr.bf16.mxu0 0
  %1070 = vmatmul.mubr.bf16.gmra.mrb[0].mxu0 %v679
  %v1071 = vpop.f32.mrb[0].mxu0
  %v1072 = vadd.f32 %v831, %v1071
  %v1073 = vpop.f32.mrb[0].mxu0
  %v1074 = vpop.f32.mrb[0].mxu0
  %v1075 = vadd.f32 %v834, %v1074
  %v1076 = vpop.f32.mrb[0].mxu0
  %1077 = vmatprep.mubr.bf16.mxu0 0
  %1078 = vmatmul.mubr.bf16.gmra.mrb[0].mxu0 %v682
  %v1079 = vpop.f32.mrb[0].mxu0
  %v1080 = vadd.f32 %v839, %v1079
  %v1081 = vpop.f32.mrb[0].mxu0
  %v1082 = vpop.f32.mrb[0].mxu0
  %v1083 = vadd.f32 %v842, %v1082
  %v1084 = vpop.f32.mrb[0].mxu0
  %1085 = vmatprep.mubr.bf16.mxu0 0
  %1086 = vmatmul.mubr.bf16.gmra.mrb[0].mxu0 %v685
  %v1087 = vpop.f32.mrb[0].mxu0
  %v1088 = vadd.f32 %v847, %v1087
  %v1089 = vpop.f32.mrb[0].mxu0
  %v1090 = vpop.f32.mrb[0].mxu0
  %v1091 = vadd.f32 %v850, %v1090
  %v1092 = vpop.f32.mrb[0].mxu0
  %1093 = vmatprep.mubr.bf16.mxu0 0
  %1094 = vmatmul.mubr.bf16.gmra.mrb[0].mxu0 %v688
  %v1095 = vpop.f32.mrb[0].mxu0
  %v1096 = vadd.f32 %v855, %v1095
  %v1097 = vpop.f32.mrb[0].mxu0
  %v1098 = vpop.f32.mrb[0].mxu0
  %v1099 = vadd.f32 %v858, %v1098
  %v1100 = vpop.f32.mrb[0].mxu0
  %1101 = vmatprep.mubr.bf16.mxu0 0
  %1102 = vmatmul.mubr.bf16.gmra.mrb[0].mxu0 %v691
  %v1103 = vpop.f32.mrb[0].mxu0
  %v1104 = vadd.f32 %v863, %v1103
  %v1105 = vpop.f32.mrb[0].mxu0
  %v1106 = vpop.f32.mrb[0].mxu0
  %v1107 = vadd.f32 %v866, %v1106
  %v1108 = vpop.f32.mrb[0].mxu0
  %1109 = vmatprep.mubr.bf16.mxu0 0
  %1110 = vmatmul.mubr.bf16.gmra.mrb[0].mxu0 %v694
  %v1111 = vpop.f32.mrb[0].mxu0
  %v1112 = vadd.f32 %v871, %v1111
  %v1113 = vpop.f32.mrb[0].mxu0
  %v1114 = vpop.f32.mrb[0].mxu0
  %v1115 = vadd.f32 %v874, %v1114
  %v1116 = vpop.f32.mrb[0].mxu0
  %1117 = vmatprep.mubr.bf16.mxu0 0
  %1118 = vmatmul.mubr.bf16.gmra.mrb[0].mxu0 %v697
  %v1119 = vpop.f32.mrb[0].mxu0
  %v1120 = vadd.f32 %v879, %v1119
  %v1121 = vpop.f32.mrb[0].mxu0
  %v1122 = vpop.f32.mrb[0].mxu0
  %v1123 = vadd.f32 %v882, %v1122
  %v1124 = vpop.f32.mrb[0].mxu0
  %1125 = vmatprep.mubr.bf16.mxu0 0
  %1126 = vmatmul.mubr.bf16.gmra.mrb[0].mxu0 %v700
  %v1127 = vpop.f32.mrb[0].mxu0
  %v1128 = vadd.f32 %v887, %v1127
  %v1129 = vpop.f32.mrb[0].mxu0
  %v1130 = vpop.f32.mrb[0].mxu0
  %v1131 = vadd.f32 %v890, %v1130
  %v1132 = vpop.f32.mrb[0].mxu0
  %1133 = vmatprep.mubr.bf16.mxu0 0
  %1134 = vmatmul.mubr.bf16.gmra.mrb[0].mxu0 %v703
  %v1135 = vpop.f32.mrb[0].mxu0
  %v1136 = vadd.f32 %v895, %v1135
  %v1137 = vpop.f32.mrb[0].mxu0
  %v1138 = vpop.f32.mrb[0].mxu0
  %v1139 = vadd.f32 %v898, %v1138
  %v1140 = vpop.f32.mrb[0].mxu0
  %1141 = vmatprep.mubr.bf16.mxu0 0
  %1142 = vmatmul.mubr.bf16.gmra.mrb[0].mxu0 %v706
  %v1143 = vpop.f32.mrb[0].mxu0
  %v1144 = vadd.f32 %v903, %v1143
  %v1145 = vpop.f32.mrb[0].mxu0
  %v1146 = vpop.f32.mrb[0].mxu0
  %v1147 = vadd.f32 %v906, %v1146
  %v1148 = vpop.f32.mrb[0].mxu0
  %1149 = vmatprep.mubr.bf16.mxu0 0
  %1150 = vmatmul.mubr.bf16.gmra.mrb[0].mxu0 %v709
  %v1151 = vpop.f32.mrb[0].mxu0
  %v1152 = vadd.f32 %v911, %v1151
  %v1153 = vpop.f32.mrb[0].mxu0
  %v1154 = vpop.f32.mrb[0].mxu0
  %v1155 = vadd.f32 %v914, %v1154
  %v1156 = vpop.f32.mrb[0].mxu0
  %1157 = vmatprep.mubr.bf16.mxu0 0
  %1158 = vmatmul.mubr.bf16.gmra.mrb[0].mxu0 %v712
  %v1159 = vpop.f32.mrb[0].mxu0
  %v1160 = vadd.f32 %v919, %v1159
  %v1161 = vpop.f32.mrb[0].mxu0
  %v1162 = vpop.f32.mrb[0].mxu0
  %v1163 = vadd.f32 %v922, %v1162
  %v1164 = vpop.f32.mrb[0].mxu0
  %1165 = vmatprep.mubr.bf16.mxu0 0
  %1166 = vmatmul.mubr.bf16.gmra.mrb[0].mxu0 %v715
  %v1167 = vpop.f32.mrb[0].mxu0
  %v1168 = vadd.f32 %v927, %v1167
  %v1169 = vpop.f32.mrb[0].mxu0
  %v1170 = vpop.f32.mrb[0].mxu0
  %v1171 = vadd.f32 %v930, %v1170
  %v1172 = vpop.f32.mrb[0].mxu0
  %1173 = vmatprep.mubr.bf16.mxu0 0
  %1174 = vmatmul.mubr.bf16.gmra.mrb[0].mxu0 %v718
  %v1175 = vpop.f32.mrb[0].mxu0
  %v1176 = vadd.f32 %v935, %v1175
  %v1177 = vpop.f32.mrb[0].mxu0
  %v1178 = vpop.f32.mrb[0].mxu0
  %v1179 = vadd.f32 %v938, %v1178
  %v1180 = vpop.f32.mrb[0].mxu0
  %1181 = vmatprep.mubr.bf16.mxu0 0
  %1182 = vmatmul.mubr.bf16.gmra.mrb[0].mxu0 %v721
  %v1183 = vpop.f32.mrb[0].mxu0
  %v1184 = vadd.f32 %v943, %v1183
  %v1185 = vpop.f32.mrb[0].mxu0
  %v1186 = vpop.f32.mrb[0].mxu0
  %v1187 = vadd.f32 %v946, %v1186
  %v1188 = vpop.f32.mrb[0].mxu0
  %1189 = vmatprep.mubr.bf16.mxu0 0
  %1190 = vmatmul.mubr.bf16.gmra.mrb[0].mxu0 %v724
  %v1191 = vpop.f32.mrb[0].mxu0
  %v1192 = vadd.f32 %v951, %v1191
  %v1193 = vpop.f32.mrb[0].mxu0
  %v1194 = vpop.f32.mrb[0].mxu0
  %v1195 = vadd.f32 %v954, %v1194
  %v1196 = vpop.f32.mrb[0].mxu0
  %1197 = vmatprep.mubr.bf16.mxu0 0
  %1198 = vmatmul.mubr.bf16.gmra.mrb[0].mxu0 %v727
  %v1199 = vpop.f32.mrb[0].mxu0
  %v1200 = vadd.f32 %v959, %v1199
  %v1201 = vpop.f32.mrb[0].mxu0
  %v1202 = vpop.f32.mrb[0].mxu0
  %v1203 = vadd.f32 %v962, %v1202
  %v1204 = vpop.f32.mrb[0].mxu0
  %1205 = vmatprep.mubr.bf16.mxu0 0
  %1206 = vmatmul.mubr.bf16.gmra.mrb[0].mxu0 %v730
  %v1207 = vpop.f32.mrb[0].mxu0
  %v1208 = vadd.f32 %v967, %v1207
  %v1209 = vpop.f32.mrb[0].mxu0
  %v1210 = vpop.f32.mrb[0].mxu0
  %v1211 = vadd.f32 %v970, %v1210
  %v1212 = vpop.f32.mrb[0].mxu0
  %1213 = vdwg.mxu0
  %v1214 = vmax.f32 %v1008, %v1059
  %v1215 = vmax.f32 %v1011, %v1064
  %v1216 = vmax.f32 %v1016, %v1067
  %v1217 = vmax.f32 %v1019, %v1072
  %v1218 = vmax.f32 %v1024, %v1075
  %v1219 = vmax.f32 %v1027, %v1080
  %v1220 = vmax.f32 %v1032, %v1083
  %v1221 = vmax.f32 %v1035, %v1088
  %v1222 = vmax.f32 %v1040, %v1091
  %v1223 = vmax.f32 %v1043, %v1096
  %v1224 = vmax.f32 %v1048, %v1099
  %v1225 = vmax.f32 %v1051, %v1104
  %v1226 = vmax.f32 %v1056, %v1107
  %v1227 = vmax.f32 %v1112, %v1163
  %v1228 = vmax.f32 %v1115, %v1168
  %v1229 = vmax.f32 %v1120, %v1171
  %v1230 = vmax.f32 %v1123, %v1176
  %v1231 = vmax.f32 %v1128, %v1179
  %v1232 = vmax.f32 %v1131, %v1184
  %v1233 = vmax.f32 %v1136, %v1187
  %v1234 = vmax.f32 %v1139, %v1192
  %v1235 = vmax.f32 %v1144, %v1195
  %v1236 = vmax.f32 %v1147, %v1200
  %v1237 = vmax.f32 %v1152, %v1203
  %v1238 = vmax.f32 %v1155, %v1208
  %v1239 = vmax.f32 %v1160, %v1211
  %v1240 = vmax.f32 %v1214, %v1227
  %v1241 = vmax.f32 %v1215, %v1228
  %v1242 = vmax.f32 %v1216, %v1229
  %v1243 = vmax.f32 %v1217, %v1230
  %v1244 = vmax.f32 %v1218, %v1231
  %v1245 = vmax.f32 %v1219, %v1232
  %v1246 = vmax.f32 %v1220, %v1233
  %v1247 = vmax.f32 %v1221, %v1234
  %v1248 = vmax.f32 %v1222, %v1235
  %v1249 = vmax.f32 %v1223, %v1236
  %v1250 = vmax.f32 %v1224, %v1237
  %v1251 = vmax.f32 %v1225, %v1238
  %v1252 = vmax.f32 %v1226, %v1239
  %v1253 = vld [vmem:[%s2] sm:$0x1]
  %v1255 = vlaneseq
  %v1256 = vshrl.u32 %v1255, 7
  %v1257 = vsub.s32 0, %v1256
  %v1258 = vrot.slane %v1253, %v1257
  %v1260 = vadd.f32 %v1240, %v1258
  %v1261 = vadd.f32 %v1241, %v1258
  %v1262 = vadd.f32 %v1242, %v1258
  %v1263 = vadd.f32 %v1243, %v1258
  %v1264 = vadd.f32 %v1244, %v1258
  %v1265 = vadd.f32 %v1245, %v1258
  %v1266 = vadd.f32 %v1246, %v1258
  %v1267 = vadd.f32 %v1247, %v1258
  %v1268 = vadd.f32 %v1248, %v1258
  %v1269 = vadd.f32 %v1249, %v1258
  %v1270 = vadd.f32 %v1250, %v1258
  %v1271 = vadd.f32 %v1251, %v1258
  %v1272 = vadd.f32 %v1252, %v1258
  %v1273 = vmax.f32 %v1260, 0.0
  %v1274 = vmax.f32 %v1261, 0.0
  %v1275 = vmax.f32 %v1262, 0.0
  %v1276 = vmax.f32 %v1263, 0.0
  %v1277 = vmax.f32 %v1264, 0.0
  %v1278 = vmax.f32 %v1265, 0.0
  %v1279 = vmax.f32 %v1266, 0.0
  %v1280 = vmax.f32 %v1267, 0.0
  %v1281 = vmax.f32 %v1268, 0.0
  %v1282 = vmax.f32 %v1269, 0.0
  %v1283 = vmax.f32 %v1270, 0.0
  %v1284 = vmax.f32 %v1271, 0.0
  %v1285 = vmax.f32 %v1272, 0.0
  %vm1286 = vcmask 523264
  %1287 = vst.msk [vmem:[%s3] sm:$0xff] %vm1286, %v1273
  %1288 = vst.msk [vmem:[%s3 + $0x8] sm:$0xff] %vm1286, %v1274
  %1289 = vst.msk [vmem:[%s3 + $0x10] sm:$0xff] %vm1286, %v1275
  %1290 = vst.msk [vmem:[%s3 + $0x18] sm:$0xff] %vm1286, %v1276
  %1291 = vst.msk [vmem:[%s3 + $0x20] sm:$0xff] %vm1286, %v1277
  %1292 = vst.msk [vmem:[%s3 + $0x28] sm:$0xff] %vm1286, %v1278
  %1293 = vst.msk [vmem:[%s3 + $0x30] sm:$0xff] %vm1286, %v1279
  %1294 = vst.msk [vmem:[%s3 + $0x38] sm:$0xff] %vm1286, %v1280
  %1295 = vst.msk [vmem:[%s3 + $0x40] sm:$0xff] %vm1286, %v1281
  %1296 = vst.msk [vmem:[%s3 + $0x48] sm:$0xff] %vm1286, %v1282
  %1297 = vst.msk [vmem:[%s3 + $0x50] sm:$0xff] %vm1286, %v1283
  %1298 = vst.msk [vmem:[%s3 + $0x58] sm:$0xff] %vm1286, %v1284
  %1299 = vst.msk [vmem:[%s3 + $0x60] sm:$0xff] %vm1286, %v1285
  // Predicated region
  $region14: #{cnn_forward.4} parent=0 // pred_check
    _
  $region15: #{cnn_forward.4} parent=0 // pred_check_branch
    %1301 = sbr.rel (0) target = $region17
  $region16: #{cnn_forward.4} parent=0 // pred_region
    _
  $region17: #{cnn_forward.4} parent=0 // pred_fallthru
    _
  // Predicated region
  $region18: #{cnn_forward.4} parent=0 // pred_check
    _
  $region19: #{cnn_forward.4} parent=0 // pred_check_branch
    %1303 = sbr.rel (0) target = $region21
  $region20: #{cnn_forward.4} parent=0 // pred_region
    _
  $region21: #{cnn_forward.4} parent=0 // pred_fallthru
    _

// kernel: cnn_forward.5
$region0: #{cnn_forward.5}
  #allocation0 [shape = 'u32[]', space=smem, size = 0x4, offset = 0x4, fixed_abs, tag = 'smem constant byte address 0x4 - core index']
  #allocation1 [shape = 'u32[144,128]{1,0:T(1,128)}', space=vmem, size = 0x12000, scoped, tag = 'internal scratch']
  %s0 = inlined_call_operand.vmem [shape: f32[8,3136], index: 0, kind: input, shape index: {}]
  %s1 = inlined_call_operand.vmem [shape: f32[3136,10], index: 1, kind: input, shape index: {}]
  %s2 = inlined_call_operand.vmem [shape: f32[1,10], index: 2, kind: input, shape index: {}]
  %s3 = inlined_call_operand.vmem [shape: f32[8,10], index: 3, kind: output, shape index: {}]
  %s4 = sld [smem:[#allocation0]]
  $region22: #{cnn_forward.5} parent=0
    _
  %s6 = ssub.s32 1, %s4
  %s7 = scalar_select 0, %s6, %s4
  // Predicated region
  $region2: #{cnn_forward.5} parent=0 // pred_check
    _
  $region3: #{cnn_forward.5} parent=0 // pred_check_branch
    %9 = sbr.rel (0) target = $region5
  $region4: #{cnn_forward.5} parent=0 // pred_region
    _
  $region5: #{cnn_forward.5} parent=0 // pred_fallthru
    _
  // Predicated region
  $region6: #{cnn_forward.5} parent=0 // pred_check
    _
  $region7: #{cnn_forward.5} parent=0 // pred_check_branch
    %11 = sbr.rel (0) target = $region9
  $region8: #{cnn_forward.5} parent=0 // pred_region
    _
  $region9: #{cnn_forward.5} parent=0 // pred_fallthru
    _
  // Predicated region
  $region10: #{cnn_forward.5} parent=0 // pred_check
    _
  $region11: #{cnn_forward.5} parent=0 // pred_check_branch
    %13 = sbr.rel (0) target = $region13
  $region12: #{cnn_forward.5} parent=0 // pred_region
    _
  $region13: #{cnn_forward.5} parent=0 // pred_fallthru
    _
  %v14 = vld [vmem:[%s0] sm:$0xff]
  %v15 = vld [vmem:[%s0 + $0x8] sm:$0xff]
  %v16 = vld [vmem:[%s0 + $0x10] sm:$0xff]
  %v17 = vld [vmem:[%s0 + $0x18] sm:$0xff]
  %v18 = vld [vmem:[%s0 + $0x20] sm:$0xff]
  %v19 = vld [vmem:[%s0 + $0x28] sm:$0xff]
  %v20 = vld [vmem:[%s0 + $0x30] sm:$0xff]
  %v21 = vld [vmem:[%s0 + $0x38] sm:$0xff]
  %v22 = vld [vmem:[%s0 + $0x40] sm:$0xff]
  %v23 = vld [vmem:[%s0 + $0x48] sm:$0xff]
  %v24 = vld [vmem:[%s0 + $0x50] sm:$0xff]
  %v25 = vld [vmem:[%s0 + $0x58] sm:$0xff]
  %v26 = vld [vmem:[%s0 + $0x60] sm:$0xff]
  %v27 = vld [vmem:[%s0 + $0x68] sm:$0xff]
  %v28 = vld [vmem:[%s0 + $0x70] sm:$0xff]
  %v29 = vld [vmem:[%s0 + $0x78] sm:$0xff]
  %v30 = vld [vmem:[%s0 + $0x80] sm:$0xff]
  %v31 = vld [vmem:[%s0 + $0x88] sm:$0xff]
  %v32 = vld [vmem:[%s0 + $0x90] sm:$0xff]
  %v33 = vld [vmem:[%s0 + $0x98] sm:$0xff]
  %v34 = vld [vmem:[%s0 + $0xa0] sm:$0xff]
  %v35 = vld [vmem:[%s0 + $0xa8] sm:$0xff]
  %v36 = vld [vmem:[%s0 + $0xb0] sm:$0xff]
  %v37 = vld [vmem:[%s0 + $0xb8] sm:$0xff]
  %v38 = vld [vmem:[%s0 + $0xc0] sm:$0xff]
  %v39 = vld [vmem:[%s1] sm:$0xff]
  %v40 = vld [vmem:[%s1 + $0x8] sm:$0xff]
  %v41 = vld [vmem:[%s1 + $0x10] sm:$0xff]
  %v42 = vld [vmem:[%s1 + $0x18] sm:$0xff]
  %v43 = vld [vmem:[%s1 + $0x20] sm:$0xff]
  %v44 = vld [vmem:[%s1 + $0x28] sm:$0xff]
  %v45 = vld [vmem:[%s1 + $0x30] sm:$0xff]
  %v46 = vld [vmem:[%s1 + $0x38] sm:$0xff]
  %v47 = vld [vmem:[%s1 + $0x40] sm:$0xff]
  %v48 = vld [vmem:[%s1 + $0x48] sm:$0xff]
  %v49 = vld [vmem:[%s1 + $0x50] sm:$0xff]
  %v50 = vld [vmem:[%s1 + $0x58] sm:$0xff]
  %v51 = vld [vmem:[%s1 + $0x60] sm:$0xff]
  %v52 = vld [vmem:[%s1 + $0x68] sm:$0xff]
  %v53 = vld [vmem:[%s1 + $0x70] sm:$0xff]
  %v54 = vld [vmem:[%s1 + $0x78] sm:$0xff]
  %v55 = vld [vmem:[%s1 + $0x80] sm:$0xff]
  %v56 = vld [vmem:[%s1 + $0x88] sm:$0xff]
  %v57 = vld [vmem:[%s1 + $0x90] sm:$0xff]
  %v58 = vld [vmem:[%s1 + $0x98] sm:$0xff]
  %v59 = vld [vmem:[%s1 + $0xa0] sm:$0xff]
  %v60 = vld [vmem:[%s1 + $0xa8] sm:$0xff]
  %v61 = vld [vmem:[%s1 + $0xb0] sm:$0xff]
  %v62 = vld [vmem:[%s1 + $0xb8] sm:$0xff]
  %v63 = vld [vmem:[%s1 + $0xc0] sm:$0xff]
  %v64 = vld [vmem:[%s1 + $0xc8] sm:$0xff]
  %v65 = vld [vmem:[%s1 + $0xd0] sm:$0xff]
  %v66 = vld [vmem:[%s1 + $0xd8] sm:$0xff]
  %v67 = vld [vmem:[%s1 + $0xe0] sm:$0xff]
  %v68 = vld [vmem:[%s1 + $0xe8] sm:$0xff]
  %v69 = vld [vmem:[%s1 + $0xf0] sm:$0xff]
  %v70 = vld [vmem:[%s1 + $0xf8] sm:$0xff]
  %v71 = vld [vmem:[%s1 + $0x100] sm:$0xff]
  %v72 = vld [vmem:[%s1 + $0x108] sm:$0xff]
  %v73 = vld [vmem:[%s1 + $0x110] sm:$0xff]
  %v74 = vld [vmem:[%s1 + $0x118] sm:$0xff]
  %v75 = vld [vmem:[%s1 + $0x120] sm:$0xff]
  %v76 = vld [vmem:[%s1 + $0x128] sm:$0xff]
  %v77 = vld [vmem:[%s1 + $0x130] sm:$0xff]
  %v78 = vld [vmem:[%s1 + $0x138] sm:$0xff]
  %v79 = vld [vmem:[%s1 + $0x140] sm:$0xff]
  %v80 = vld [vmem:[%s1 + $0x148] sm:$0xff]
  %v81 = vld [vmem:[%s1 + $0x150] sm:$0xff]
  %v82 = vld [vmem:[%s1 + $0x158] sm:$0xff]
  %v83 = vld [vmem:[%s1 + $0x160] sm:$0xff]
  %v84 = vld [vmem:[%s1 + $0x168] sm:$0xff]
  %v85 = vld [vmem:[%s1 + $0x170] sm:$0xff]
  %v86 = vld [vmem:[%s1 + $0x178] sm:$0xff]
  %v87 = vld [vmem:[%s1 + $0x180] sm:$0xff]
  %v88 = vld [vmem:[%s1 + $0x188] sm:$0xff]
  %v89 = vld [vmem:[%s1 + $0x190] sm:$0xff]
  %v90 = vld [vmem:[%s1 + $0x198] sm:$0xff]
  %v91 = vld [vmem:[%s1 + $0x1a0] sm:$0xff]
  %v92 = vld [vmem:[%s1 + $0x1a8] sm:$0xff]
  %v93 = vld [vmem:[%s1 + $0x1b0] sm:$0xff]
  %v94 = vld [vmem:[%s1 + $0x1b8] sm:$0xff]
  %v95 = vld [vmem:[%s1 + $0x1c0] sm:$0xff]
  %v96 = vld [vmem:[%s1 + $0x1c8] sm:$0xff]
  %v97 = vld [vmem:[%s1 + $0x1d0] sm:$0xff]
  %v98 = vld [vmem:[%s1 + $0x1d8] sm:$0xff]
  %v99 = vld [vmem:[%s1 + $0x1e0] sm:$0xff]
  %v100 = vld [vmem:[%s1 + $0x1e8] sm:$0xff]
  %v101 = vld [vmem:[%s1 + $0x1f0] sm:$0xff]
  %v102 = vld [vmem:[%s1 + $0x1f8] sm:$0xff]
  %v103 = vld [vmem:[%s1 + $0x200] sm:$0xff]
  %v104 = vld [vmem:[%s1 + $0x208] sm:$0xff]
  %v105 = vld [vmem:[%s1 + $0x210] sm:$0xff]
  %v106 = vld [vmem:[%s1 + $0x218] sm:$0xff]
  %v107 = vld [vmem:[%s1 + $0x220] sm:$0xff]
  %v108 = vld [vmem:[%s1 + $0x228] sm:$0xff]
  %v109 = vld [vmem:[%s1 + $0x230] sm:$0xff]
  %v110 = vld [vmem:[%s1 + $0x238] sm:$0xff]
  %v111 = vld [vmem:[%s1 + $0x240] sm:$0xff]
  %v112 = vld [vmem:[%s1 + $0x248] sm:$0xff]
  %v113 = vld [vmem:[%s1 + $0x250] sm:$0xff]
  %v114 = vld [vmem:[%s1 + $0x258] sm:$0xff]
  %v115 = vld [vmem:[%s1 + $0x260] sm:$0xff]
  %v116 = vld [vmem:[%s1 + $0x268] sm:$0xff]
  %v117 = vld [vmem:[%s1 + $0x270] sm:$0xff]
  %v118 = vld [vmem:[%s1 + $0x278] sm:$0xff]
  %v119 = vld [vmem:[%s1 + $0x280] sm:$0xff]
  %v120 = vld [vmem:[%s1 + $0x288] sm:$0xff]
  %v121 = vld [vmem:[%s1 + $0x290] sm:$0xff]
  %v122 = vld [vmem:[%s1 + $0x298] sm:$0xff]
  %v123 = vld [vmem:[%s1 + $0x2a0] sm:$0xff]
  %v124 = vld [vmem:[%s1 + $0x2a8] sm:$0xff]
  %v125 = vld [vmem:[%s1 + $0x2b0] sm:$0xff]
  %v126 = vld [vmem:[%s1 + $0x2b8] sm:$0xff]
  %v127 = vld [vmem:[%s1 + $0x2c0] sm:$0xff]
  %v128 = vld [vmem:[%s1 + $0x2c8] sm:$0xff]
  %v129 = vld [vmem:[%s1 + $0x2d0] sm:$0xff]
  %v130 = vld [vmem:[%s1 + $0x2d8] sm:$0xff]
  %v131 = vld [vmem:[%s1 + $0x2e0] sm:$0xff]
  %v132 = vld [vmem:[%s1 + $0x2e8] sm:$0xff]
  %v133 = vld [vmem:[%s1 + $0x2f0] sm:$0xff]
  %v134 = vld [vmem:[%s1 + $0x2f8] sm:$0xff]
  %v135 = vld [vmem:[%s1 + $0x300] sm:$0xff]
  %v136 = vld [vmem:[%s1 + $0x308] sm:$0xff]
  %v137 = vld [vmem:[%s1 + $0x310] sm:$0xff]
  %v138 = vld [vmem:[%s1 + $0x318] sm:$0xff]
  %v139 = vld [vmem:[%s1 + $0x320] sm:$0xff]
  %v140 = vld [vmem:[%s1 + $0x328] sm:$0xff]
  %v141 = vld [vmem:[%s1 + $0x330] sm:$0xff]
  %v142 = vld [vmem:[%s1 + $0x338] sm:$0xff]
  %v143 = vld [vmem:[%s1 + $0x340] sm:$0xff]
  %v144 = vld [vmem:[%s1 + $0x348] sm:$0xff]
  %v145 = vld [vmem:[%s1 + $0x350] sm:$0xff]
  %v146 = vld [vmem:[%s1 + $0x358] sm:$0xff]
  %v147 = vld [vmem:[%s1 + $0x360] sm:$0xff]
  %v148 = vld [vmem:[%s1 + $0x368] sm:$0xff]
  %v149 = vld [vmem:[%s1 + $0x370] sm:$0xff]
  %v150 = vld [vmem:[%s1 + $0x378] sm:$0xff]
  %v151 = vld [vmem:[%s1 + $0x380] sm:$0xff]
  %v152 = vld [vmem:[%s1 + $0x388] sm:$0xff]
  %v153 = vld [vmem:[%s1 + $0x390] sm:$0xff]
  %v154 = vld [vmem:[%s1 + $0x398] sm:$0xff]
  %v155 = vld [vmem:[%s1 + $0x3a0] sm:$0xff]
  %v156 = vld [vmem:[%s1 + $0x3a8] sm:$0xff]
  %v157 = vld [vmem:[%s1 + $0x3b0] sm:$0xff]
  %v158 = vld [vmem:[%s1 + $0x3b8] sm:$0xff]
  %v159 = vld [vmem:[%s1 + $0x3c0] sm:$0xff]
  %v160 = vld [vmem:[%s1 + $0x3c8] sm:$0xff]
  %v161 = vld [vmem:[%s1 + $0x3d0] sm:$0xff]
  %v162 = vld [vmem:[%s1 + $0x3d8] sm:$0xff]
  %v163 = vld [vmem:[%s1 + $0x3e0] sm:$0xff]
  %v164 = vld [vmem:[%s1 + $0x3e8] sm:$0xff]
  %v165 = vld [vmem:[%s1 + $0x3f0] sm:$0xff]
  %v166 = vld [vmem:[%s1 + $0x3f8] sm:$0xff]
  %v167 = vld [vmem:[%s1 + $0x400] sm:$0xff]
  %v168 = vld [vmem:[%s1 + $0x408] sm:$0xff]
  %v169 = vld [vmem:[%s1 + $0x410] sm:$0xff]
  %v170 = vld [vmem:[%s1 + $0x418] sm:$0xff]
  %v171 = vld [vmem:[%s1 + $0x420] sm:$0xff]
  %v172 = vld [vmem:[%s1 + $0x428] sm:$0xff]
  %v173 = vld [vmem:[%s1 + $0x430] sm:$0xff]
  %v174 = vld [vmem:[%s1 + $0x438] sm:$0xff]
  %v175 = vld [vmem:[%s1 + $0x440] sm:$0xff]
  %v176 = vld [vmem:[%s1 + $0x448] sm:$0xff]
  %v177 = vld [vmem:[%s1 + $0x450] sm:$0xff]
  %v178 = vld [vmem:[%s1 + $0x458] sm:$0xff]
  %v179 = vld [vmem:[%s1 + $0x460] sm:$0xff]
  %v180 = vld [vmem:[%s1 + $0x468] sm:$0xff]
  %v181 = vld [vmem:[%s1 + $0x470] sm:$0xff]
  %v182 = vld [vmem:[%s1 + $0x478] sm:$0xff]
  %v183 = vld [vmem:[%s1 + $0x480] sm:$0xff]
  %v184 = vld [vmem:[%s1 + $0x488] sm:$0xff]
  %v185 = vld [vmem:[%s1 + $0x490] sm:$0xff]
  %v186 = vld [vmem:[%s1 + $0x498] sm:$0xff]
  %v187 = vld [vmem:[%s1 + $0x4a0] sm:$0xff]
  %v188 = vld [vmem:[%s1 + $0x4a8] sm:$0xff]
  %v189 = vld [vmem:[%s1 + $0x4b0] sm:$0xff]
  %v190 = vld [vmem:[%s1 + $0x4b8] sm:$0xff]
  %v191 = vld [vmem:[%s1 + $0x4c0] sm:$0xff]
  %v192 = vld [vmem:[%s1 + $0x4c8] sm:$0xff]
  %v193 = vld [vmem:[%s1 + $0x4d0] sm:$0xff]
  %v194 = vld [vmem:[%s1 + $0x4d8] sm:$0xff]
  %v195 = vld [vmem:[%s1 + $0x4e0] sm:$0xff]
  %v196 = vld [vmem:[%s1 + $0x4e8] sm:$0xff]
  %v197 = vld [vmem:[%s1 + $0x4f0] sm:$0xff]
  %v198 = vld [vmem:[%s1 + $0x4f8] sm:$0xff]
  %v199 = vld [vmem:[%s1 + $0x500] sm:$0xff]
  %v200 = vld [vmem:[%s1 + $0x508] sm:$0xff]
  %v201 = vld [vmem:[%s1 + $0x510] sm:$0xff]
  %v202 = vld [vmem:[%s1 + $0x518] sm:$0xff]
  %v203 = vld [vmem:[%s1 + $0x520] sm:$0xff]
  %v204 = vld [vmem:[%s1 + $0x528] sm:$0xff]
  %v205 = vld [vmem:[%s1 + $0x530] sm:$0xff]
  %v206 = vld [vmem:[%s1 + $0x538] sm:$0xff]
  %v207 = vld [vmem:[%s1 + $0x540] sm:$0xff]
  %v208 = vld [vmem:[%s1 + $0x548] sm:$0xff]
  %v209 = vld [vmem:[%s1 + $0x550] sm:$0xff]
  %v210 = vld [vmem:[%s1 + $0x558] sm:$0xff]
  %v211 = vld [vmem:[%s1 + $0x560] sm:$0xff]
  %v212 = vld [vmem:[%s1 + $0x568] sm:$0xff]
  %v213 = vld [vmem:[%s1 + $0x570] sm:$0xff]
  %v214 = vld [vmem:[%s1 + $0x578] sm:$0xff]
  %v215 = vld [vmem:[%s1 + $0x580] sm:$0xff]
  %v216 = vld [vmem:[%s1 + $0x588] sm:$0xff]
  %v217 = vld [vmem:[%s1 + $0x590] sm:$0xff]
  %v218 = vld [vmem:[%s1 + $0x598] sm:$0xff]
  %v219 = vld [vmem:[%s1 + $0x5a0] sm:$0xff]
  %v220 = vld [vmem:[%s1 + $0x5a8] sm:$0xff]
  %v221 = vld [vmem:[%s1 + $0x5b0] sm:$0xff]
  %v222 = vld [vmem:[%s1 + $0x5b8] sm:$0xff]
  %v223 = vld [vmem:[%s1 + $0x5c0] sm:$0xff]
  %v224 = vld [vmem:[%s1 + $0x5c8] sm:$0xff]
  %v225 = vld [vmem:[%s1 + $0x5d0] sm:$0xff]
  %v226 = vld [vmem:[%s1 + $0x5d8] sm:$0xff]
  %v227 = vld [vmem:[%s1 + $0x5e0] sm:$0xff]
  %v228 = vld [vmem:[%s1 + $0x5e8] sm:$0xff]
  %v229 = vld [vmem:[%s1 + $0x5f0] sm:$0xff]
  %v230 = vld [vmem:[%s1 + $0x5f8] sm:$0xff]
  %v231 = vld [vmem:[%s1 + $0x600] sm:$0xff]
  %v232 = vld [vmem:[%s1 + $0x608] sm:$0xff]
  %v233 = vld [vmem:[%s1 + $0x610] sm:$0xff]
  %v234 = vld [vmem:[%s1 + $0x618] sm:$0xff]
  %v235 = vld [vmem:[%s1 + $0x620] sm:$0xff]
  %v236 = vld [vmem:[%s1 + $0x628] sm:$0xff]
  %v237 = vld [vmem:[%s1 + $0x630] sm:$0xff]
  %v238 = vld [vmem:[%s1 + $0x638] sm:$0xff]
  %v239 = vld [vmem:[%s1 + $0x640] sm:$0xff]
  %v240 = vld [vmem:[%s1 + $0x648] sm:$0xff]
  %v241 = vld [vmem:[%s1 + $0x650] sm:$0xff]
  %v242 = vld [vmem:[%s1 + $0x658] sm:$0xff]
  %v243 = vld [vmem:[%s1 + $0x660] sm:$0xff]
  %v244 = vld [vmem:[%s1 + $0x668] sm:$0xff]
  %v245 = vld [vmem:[%s1 + $0x670] sm:$0xff]
  %v246 = vld [vmem:[%s1 + $0x678] sm:$0xff]
  %v247 = vld [vmem:[%s1 + $0x680] sm:$0xff]
  %v248 = vld [vmem:[%s1 + $0x688] sm:$0xff]
  %v249 = vld [vmem:[%s1 + $0x690] sm:$0xff]
  %v250 = vld [vmem:[%s1 + $0x698] sm:$0xff]
  %v251 = vld [vmem:[%s1 + $0x6a0] sm:$0xff]
  %v252 = vld [vmem:[%s1 + $0x6a8] sm:$0xff]
  %v253 = vld [vmem:[%s1 + $0x6b0] sm:$0xff]
  %v254 = vld [vmem:[%s1 + $0x6b8] sm:$0xff]
  %v255 = vld [vmem:[%s1 + $0x6c0] sm:$0xff]
  %v256 = vld [vmem:[%s1 + $0x6c8] sm:$0xff]
  %v257 = vld [vmem:[%s1 + $0x6d0] sm:$0xff]
  %v258 = vld [vmem:[%s1 + $0x6d8] sm:$0xff]
  %v259 = vld [vmem:[%s1 + $0x6e0] sm:$0xff]
  %v260 = vld [vmem:[%s1 + $0x6e8] sm:$0xff]
  %v261 = vld [vmem:[%s1 + $0x6f0] sm:$0xff]
  %v262 = vld [vmem:[%s1 + $0x6f8] sm:$0xff]
  %v263 = vld [vmem:[%s1 + $0x700] sm:$0xff]
  %v264 = vld [vmem:[%s1 + $0x708] sm:$0xff]
  %v265 = vld [vmem:[%s1 + $0x710] sm:$0xff]
  %v266 = vld [vmem:[%s1 + $0x718] sm:$0xff]
  %v267 = vld [vmem:[%s1 + $0x720] sm:$0xff]
  %v268 = vld [vmem:[%s1 + $0x728] sm:$0xff]
  %v269 = vld [vmem:[%s1 + $0x730] sm:$0xff]
  %v270 = vld [vmem:[%s1 + $0x738] sm:$0xff]
  %v271 = vld [vmem:[%s1 + $0x740] sm:$0xff]
  %v272 = vld [vmem:[%s1 + $0x748] sm:$0xff]
  %v273 = vld [vmem:[%s1 + $0x750] sm:$0xff]
  %v274 = vld [vmem:[%s1 + $0x758] sm:$0xff]
  %v275 = vld [vmem:[%s1 + $0x760] sm:$0xff]
  %v276 = vld [vmem:[%s1 + $0x768] sm:$0xff]
  %v277 = vld [vmem:[%s1 + $0x770] sm:$0xff]
  %v278 = vld [vmem:[%s1 + $0x778] sm:$0xff]
  %v279 = vld [vmem:[%s1 + $0x780] sm:$0xff]
  %v280 = vld [vmem:[%s1 + $0x788] sm:$0xff]
  %v281 = vld [vmem:[%s1 + $0x790] sm:$0xff]
  %v282 = vld [vmem:[%s1 + $0x798] sm:$0xff]
  %v283 = vld [vmem:[%s1 + $0x7a0] sm:$0xff]
  %v284 = vld [vmem:[%s1 + $0x7a8] sm:$0xff]
  %v285 = vld [vmem:[%s1 + $0x7b0] sm:$0xff]
  %v286 = vld [vmem:[%s1 + $0x7b8] sm:$0xff]
  %v287 = vld [vmem:[%s1 + $0x7c0] sm:$0xff]
  %v288 = vld [vmem:[%s1 + $0x7c8] sm:$0xff]
  %v289 = vld [vmem:[%s1 + $0x7d0] sm:$0xff]
  %v290 = vld [vmem:[%s1 + $0x7d8] sm:$0xff]
  %v291 = vld [vmem:[%s1 + $0x7e0] sm:$0xff]
  %v292 = vld [vmem:[%s1 + $0x7e8] sm:$0xff]
  %v293 = vld [vmem:[%s1 + $0x7f0] sm:$0xff]
  %v294 = vld [vmem:[%s1 + $0x7f8] sm:$0xff]
  %v295 = vld [vmem:[%s1 + $0x800] sm:$0xff]
  %v296 = vld [vmem:[%s1 + $0x808] sm:$0xff]
  %v297 = vld [vmem:[%s1 + $0x810] sm:$0xff]
  %v298 = vld [vmem:[%s1 + $0x818] sm:$0xff]
  %v299 = vld [vmem:[%s1 + $0x820] sm:$0xff]
  %v300 = vld [vmem:[%s1 + $0x828] sm:$0xff]
  %v301 = vld [vmem:[%s1 + $0x830] sm:$0xff]
  %v302 = vld [vmem:[%s1 + $0x838] sm:$0xff]
  %v303 = vld [vmem:[%s1 + $0x840] sm:$0xff]
  %v304 = vld [vmem:[%s1 + $0x848] sm:$0xff]
  %v305 = vld [vmem:[%s1 + $0x850] sm:$0xff]
  %v306 = vld [vmem:[%s1 + $0x858] sm:$0xff]
  %v307 = vld [vmem:[%s1 + $0x860] sm:$0xff]
  %v308 = vld [vmem:[%s1 + $0x868] sm:$0xff]
  %v309 = vld [vmem:[%s1 + $0x870] sm:$0xff]
  %v310 = vld [vmem:[%s1 + $0x878] sm:$0xff]
  %v311 = vld [vmem:[%s1 + $0x880] sm:$0xff]
  %v312 = vld [vmem:[%s1 + $0x888] sm:$0xff]
  %v313 = vld [vmem:[%s1 + $0x890] sm:$0xff]
  %v314 = vld [vmem:[%s1 + $0x898] sm:$0xff]
  %v315 = vld [vmem:[%s1 + $0x8a0] sm:$0xff]
  %v316 = vld [vmem:[%s1 + $0x8a8] sm:$0xff]
  %v317 = vld [vmem:[%s1 + $0x8b0] sm:$0xff]
  %v318 = vld [vmem:[%s1 + $0x8b8] sm:$0xff]
  %v319 = vld [vmem:[%s1 + $0x8c0] sm:$0xff]
  %v320 = vld [vmem:[%s1 + $0x8c8] sm:$0xff]
  %v321 = vld [vmem:[%s1 + $0x8d0] sm:$0xff]
  %v322 = vld [vmem:[%s1 + $0x8d8] sm:$0xff]
  %v323 = vld [vmem:[%s1 + $0x8e0] sm:$0xff]
  %v324 = vld [vmem:[%s1 + $0x8e8] sm:$0xff]
  %v325 = vld [vmem:[%s1 + $0x8f0] sm:$0xff]
  %v326 = vld [vmem:[%s1 + $0x8f8] sm:$0xff]
  %v327 = vld [vmem:[%s1 + $0x900] sm:$0xff]
  %v328 = vld [vmem:[%s1 + $0x908] sm:$0xff]
  %v329 = vld [vmem:[%s1 + $0x910] sm:$0xff]
  %v330 = vld [vmem:[%s1 + $0x918] sm:$0xff]
  %v331 = vld [vmem:[%s1 + $0x920] sm:$0xff]
  %v332 = vld [vmem:[%s1 + $0x928] sm:$0xff]
  %v333 = vld [vmem:[%s1 + $0x930] sm:$0xff]
  %v334 = vld [vmem:[%s1 + $0x938] sm:$0xff]
  %v335 = vld [vmem:[%s1 + $0x940] sm:$0xff]
  %v336 = vld [vmem:[%s1 + $0x948] sm:$0xff]
  %v337 = vld [vmem:[%s1 + $0x950] sm:$0xff]
  %v338 = vld [vmem:[%s1 + $0x958] sm:$0xff]
  %v339 = vld [vmem:[%s1 + $0x960] sm:$0xff]
  %v340 = vld [vmem:[%s1 + $0x968] sm:$0xff]
  %v341 = vld [vmem:[%s1 + $0x970] sm:$0xff]
  %v342 = vld [vmem:[%s1 + $0x978] sm:$0xff]
  %v343 = vld [vmem:[%s1 + $0x980] sm:$0xff]
  %v344 = vld [vmem:[%s1 + $0x988] sm:$0xff]
  %v345 = vld [vmem:[%s1 + $0x990] sm:$0xff]
  %v346 = vld [vmem:[%s1 + $0x998] sm:$0xff]
  %v347 = vld [vmem:[%s1 + $0x9a0] sm:$0xff]
  %v348 = vld [vmem:[%s1 + $0x9a8] sm:$0xff]
  %v349 = vld [vmem:[%s1 + $0x9b0] sm:$0xff]
  %v350 = vld [vmem:[%s1 + $0x9b8] sm:$0xff]
  %v351 = vld [vmem:[%s1 + $0x9c0] sm:$0xff]
  %v352 = vld [vmem:[%s1 + $0x9c8] sm:$0xff]
  %v353 = vld [vmem:[%s1 + $0x9d0] sm:$0xff]
  %v354 = vld [vmem:[%s1 + $0x9d8] sm:$0xff]
  %v355 = vld [vmem:[%s1 + $0x9e0] sm:$0xff]
  %v356 = vld [vmem:[%s1 + $0x9e8] sm:$0xff]
  %v357 = vld [vmem:[%s1 + $0x9f0] sm:$0xff]
  %v358 = vld [vmem:[%s1 + $0x9f8] sm:$0xff]
  %v359 = vld [vmem:[%s1 + $0xa00] sm:$0xff]
  %v360 = vld [vmem:[%s1 + $0xa08] sm:$0xff]
  %v361 = vld [vmem:[%s1 + $0xa10] sm:$0xff]
  %v362 = vld [vmem:[%s1 + $0xa18] sm:$0xff]
  %v363 = vld [vmem:[%s1 + $0xa20] sm:$0xff]
  %v364 = vld [vmem:[%s1 + $0xa28] sm:$0xff]
  %v365 = vld [vmem:[%s1 + $0xa30] sm:$0xff]
  %v366 = vld [vmem:[%s1 + $0xa38] sm:$0xff]
  %v367 = vld [vmem:[%s1 + $0xa40] sm:$0xff]
  %v368 = vld [vmem:[%s1 + $0xa48] sm:$0xff]
  %v369 = vld [vmem:[%s1 + $0xa50] sm:$0xff]
  %v370 = vld [vmem:[%s1 + $0xa58] sm:$0xff]
  %v371 = vld [vmem:[%s1 + $0xa60] sm:$0xff]
  %v372 = vld [vmem:[%s1 + $0xa68] sm:$0xff]
  %v373 = vld [vmem:[%s1 + $0xa70] sm:$0xff]
  %v374 = vld [vmem:[%s1 + $0xa78] sm:$0xff]
  %v375 = vld [vmem:[%s1 + $0xa80] sm:$0xff]
  %v376 = vld [vmem:[%s1 + $0xa88] sm:$0xff]
  %v377 = vld [vmem:[%s1 + $0xa90] sm:$0xff]
  %v378 = vld [vmem:[%s1 + $0xa98] sm:$0xff]
  %v379 = vld [vmem:[%s1 + $0xaa0] sm:$0xff]
  %v380 = vld [vmem:[%s1 + $0xaa8] sm:$0xff]
  %v381 = vld [vmem:[%s1 + $0xab0] sm:$0xff]
  %v382 = vld [vmem:[%s1 + $0xab8] sm:$0xff]
  %v383 = vld [vmem:[%s1 + $0xac0] sm:$0xff]
  %v384 = vld [vmem:[%s1 + $0xac8] sm:$0xff]
  %v385 = vld [vmem:[%s1 + $0xad0] sm:$0xff]
  %v386 = vld [vmem:[%s1 + $0xad8] sm:$0xff]
  %v387 = vld [vmem:[%s1 + $0xae0] sm:$0xff]
  %v388 = vld [vmem:[%s1 + $0xae8] sm:$0xff]
  %v389 = vld [vmem:[%s1 + $0xaf0] sm:$0xff]
  %v390 = vld [vmem:[%s1 + $0xaf8] sm:$0xff]
  %v391 = vld [vmem:[%s1 + $0xb00] sm:$0xff]
  %v392 = vld [vmem:[%s1 + $0xb08] sm:$0xff]
  %v393 = vld [vmem:[%s1 + $0xb10] sm:$0xff]
  %v394 = vld [vmem:[%s1 + $0xb18] sm:$0xff]
  %v395 = vld [vmem:[%s1 + $0xb20] sm:$0xff]
  %v396 = vld [vmem:[%s1 + $0xb28] sm:$0xff]
  %v397 = vld [vmem:[%s1 + $0xb30] sm:$0xff]
  %v398 = vld [vmem:[%s1 + $0xb38] sm:$0xff]
  %v399 = vld [vmem:[%s1 + $0xb40] sm:$0xff]
  %v400 = vld [vmem:[%s1 + $0xb48] sm:$0xff]
  %v401 = vld [vmem:[%s1 + $0xb50] sm:$0xff]
  %v402 = vld [vmem:[%s1 + $0xb58] sm:$0xff]
  %v403 = vld [vmem:[%s1 + $0xb60] sm:$0xff]
  %v404 = vld [vmem:[%s1 + $0xb68] sm:$0xff]
  %v405 = vld [vmem:[%s1 + $0xb70] sm:$0xff]
  %v406 = vld [vmem:[%s1 + $0xb78] sm:$0xff]
  %v407 = vld [vmem:[%s1 + $0xb80] sm:$0xff]
  %v408 = vld [vmem:[%s1 + $0xb88] sm:$0xff]
  %v409 = vld [vmem:[%s1 + $0xb90] sm:$0xff]
  %v410 = vld [vmem:[%s1 + $0xb98] sm:$0xff]
  %v411 = vld [vmem:[%s1 + $0xba0] sm:$0xff]
  %v412 = vld [vmem:[%s1 + $0xba8] sm:$0xff]
  %v413 = vld [vmem:[%s1 + $0xbb0] sm:$0xff]
  %v414 = vld [vmem:[%s1 + $0xbb8] sm:$0xff]
  %v415 = vld [vmem:[%s1 + $0xbc0] sm:$0xff]
  %v416 = vld [vmem:[%s1 + $0xbc8] sm:$0xff]
  %v417 = vld [vmem:[%s1 + $0xbd0] sm:$0xff]
  %v418 = vld [vmem:[%s1 + $0xbd8] sm:$0xff]
  %v419 = vld [vmem:[%s1 + $0xbe0] sm:$0xff]
  %v420 = vld [vmem:[%s1 + $0xbe8] sm:$0xff]
  %v421 = vld [vmem:[%s1 + $0xbf0] sm:$0xff]
  %v422 = vld [vmem:[%s1 + $0xbf8] sm:$0xff]
  %v423 = vld [vmem:[%s1 + $0xc00] sm:$0xff]
  %v424 = vld [vmem:[%s1 + $0xc08] sm:$0xff]
  %v425 = vld [vmem:[%s1 + $0xc10] sm:$0xff]
  %v426 = vld [vmem:[%s1 + $0xc18] sm:$0xff]
  %v427 = vld [vmem:[%s1 + $0xc20] sm:$0xff]
  %v428 = vld [vmem:[%s1 + $0xc28] sm:$0xff]
  %v429 = vld [vmem:[%s1 + $0xc30] sm:$0xff]
  %v430 = vld [vmem:[%s1 + $0xc38] sm:$0xff]
  %v431 = vld [vmem:[%s2] sm:$0x1]
  %v433 = vlaneseq
  %v434 = vshrl.u32 %v433, 7
  %v435 = vsub.s32 0, %v434
  %v436 = vrot.slane %v431, %v435
  %vm438 = vcmask 523264
  %v440 = vsel %vm438, %v38, 0
  %442 = vmatprep.subr.mxu0 0.0
  %443 = vmatpush1.msra.mxu0 %v39
  %444 = vmatprep.subr.mxu0 0.0
  %445 = vmatpush1.msra.mxu0 %v40
  %446 = vmatprep.subr.mxu0 0.0
  %447 = vmatpush1.msra.mxu0 %v41
  %448 = vmatprep.subr.mxu0 0.0
  %449 = vmatpush1.msra.mxu0 %v42
  %450 = vmatprep.subr.mxu0 0.0
  %451 = vmatpush1.msra.mxu0 %v43
  %452 = vmatprep.subr.mxu0 0.0
  %453 = vmatpush1.msra.mxu0 %v44
  %454 = vmatprep.subr.mxu0 0.0
  %455 = vmatpush1.msra.mxu0 %v45
  %456 = vmatprep.subr.mxu0 0.0
  %457 = vmatpush1.msra.mxu0 %v46
  %458 = vmatprep.subr.mxu0 0.0
  %459 = vmatpush1.msra.mxu0 %v47
  %460 = vmatprep.subr.mxu0 0.0
  %461 = vmatpush1.msra.mxu0 %v48
  %462 = vmatprep.subr.mxu0 0.0
  %463 = vmatpush1.msra.mxu0 %v49
  %464 = vmatprep.subr.mxu0 0.0
  %465 = vmatpush1.msra.mxu0 %v50
  %466 = vmatprep.subr.mxu0 0.0
  %467 = vmatpush1.msra.mxu0 %v51
  %468 = vmatprep.subr.mxu0 0.0
  %469 = vmatpush1.msra.mxu0 %v52
  %470 = vmatprep.subr.mxu0 0.0
  %471 = vmatpush1.msra.mxu0 %v53
  %472 = vmatprep.subr.mxu0 0.0
  %473 = vmatpush1.msra.mxu0 %v54
  %474 = vmatprep.subr.mxu0 0.0
  %475 = vmatpush1.msra.mxu0 %v55
  %476 = vmatprep.subr.mxu0 0.0
  %477 = vmatpush1.msra.mxu0 %v56
  %478 = vmatprep.subr.mxu0 0.0
  %479 = vmatpush1.msra.mxu0 %v57
  %480 = vmatprep.subr.mxu0 0.0
  %481 = vmatpush1.msra.mxu0 %v58
  %482 = vmatprep.subr.mxu0 0.0
  %483 = vmatpush1.msra.mxu0 %v59
  %484 = vmatprep.subr.mxu0 0.0
  %485 = vmatpush1.msra.mxu0 %v60
  %486 = vmatprep.subr.mxu0 0.0
  %487 = vmatpush1.msra.mxu0 %v61
  %488 = vmatprep.subr.mxu0 0.0
  %489 = vmatpush1.msra.mxu0 %v62
  %490 = vmatprep.subr.mxu0 0.0
  %491 = vmatpush1.msra.mxu0 %v63
  %492 = vmatprep.subr.mxu0 0.0
  %493 = vmatpush1.msra.mxu0 %v64
  %494 = vmatprep.subr.mxu0 0.0
  %495 = vmatpush1.msra.mxu0 %v65
  %496 = vmatprep.subr.mxu0 0.0
  %497 = vmatpush1.msra.mxu0 %v66
  %498 = vmatprep.subr.mxu0 0.0
  %499 = vmatpush1.msra.mxu0 %v67
  %500 = vmatprep.subr.mxu0 0.0
  %501 = vmatpush1.msra.mxu0 %v68
  %502 = vmatprep.subr.mxu0 0.0
  %503 = vmatpush1.msra.mxu0 %v69
  %504 = vmatprep.subr.mxu0 0.0
  %505 = vmatpush1.msra.mxu0 %v70
  %506 = vmatprep.mubr.f32.mxu0 %v15
  %507 = vmatmul.mubr.f32.gmra.mrb[0].mxu0 %v14
  %v508 = vpop.f32.mrb[0].mxu0
  %v509 = vadd.f32 %v436, %v508
  %v510 = vpop.f32.mrb[0].mxu0
  %511 = vdwg.mxu0
  %512 = vmatprep.subr.mxu0 0.0
  %513 = vmatpush1.msra.mxu0 %v71
  %514 = vmatprep.subr.mxu0 0.0
  %515 = vmatpush1.msra.mxu0 %v72
  %516 = vmatprep.subr.mxu0 0.0
  %517 = vmatpush1.msra.mxu0 %v73
  %518 = vmatprep.subr.mxu0 0.0
  %519 = vmatpush1.msra.mxu0 %v74
  %520 = vmatprep.subr.mxu0 0.0
  %521 = vmatpush1.msra.mxu0 %v75
  %522 = vmatprep.subr.mxu0 0.0
  %523 = vmatpush1.msra.mxu0 %v76
  %524 = vmatprep.subr.mxu0 0.0
  %525 = vmatpush1.msra.mxu0 %v77
  %526 = vmatprep.subr.mxu0 0.0
  %527 = vmatpush1.msra.mxu0 %v78
  %528 = vmatprep.subr.mxu0 0.0
  %529 = vmatpush1.msra.mxu0 %v79
  %530 = vmatprep.subr.mxu0 0.0
  %531 = vmatpush1.msra.mxu0 %v80
  %532 = vmatprep.subr.mxu0 0.0
  %533 = vmatpush1.msra.mxu0 %v81
  %534 = vmatprep.subr.mxu0 0.0
  %535 = vmatpush1.msra.mxu0 %v82
  %536 = vmatprep.subr.mxu0 0.0
  %537 = vmatpush1.msra.mxu0 %v83
  %538 = vmatprep.subr.mxu0 0.0
  %539 = vmatpush1.msra.mxu0 %v84
  %540 = vmatprep.subr.mxu0 0.0
  %541 = vmatpush1.msra.mxu0 %v85
  %542 = vmatprep.subr.mxu0 0.0
  %543 = vmatpush1.msra.mxu0 %v86
  %544 = vmatprep.subr.mxu0 0.0
  %545 = vmatpush1.msra.mxu0 %v87
  %546 = vmatprep.subr.mxu0 0.0
  %547 = vmatpush1.msra.mxu0 %v88
  %548 = vmatprep.subr.mxu0 0.0
  %549 = vmatpush1.msra.mxu0 %v89
  %550 = vmatprep.subr.mxu0 0.0
  %551 = vmatpush1.msra.mxu0 %v90
  %552 = vmatprep.subr.mxu0 0.0
  %553 = vmatpush1.msra.mxu0 %v91
  %554 = vmatprep.subr.mxu0 0.0
  %555 = vmatpush1.msra.mxu0 %v92
  %556 = vmatprep.subr.mxu0 0.0
  %557 = vmatpush1.msra.mxu0 %v93
  %558 = vmatprep.subr.mxu0 0.0
  %559 = vmatpush1.msra.mxu0 %v94
  %560 = vmatprep.subr.mxu0 0.0
  %561 = vmatpush1.msra.mxu0 %v95
  %562 = vmatprep.subr.mxu0 0.0
  %563 = vmatpush1.msra.mxu0 %v96
  %564 = vmatprep.subr.mxu0 0.0
  %565 = vmatpush1.msra.mxu0 %v97
  %566 = vmatprep.subr.mxu0 0.0
  %567 = vmatpush1.msra.mxu0 %v98
  %568 = vmatprep.subr.mxu0 0.0
  %569 = vmatpush1.msra.mxu0 %v99
  %570 = vmatprep.subr.mxu0 0.0
  %571 = vmatpush1.msra.mxu0 %v100
  %572 = vmatprep.subr.mxu0 0.0
  %573 = vmatpush1.msra.mxu0 %v101
  %574 = vmatprep.subr.mxu0 0.0
  %575 = vmatpush1.msra.mxu0 %v102
  %576 = vmatprep.mubr.f32.mxu0 %v17
  %577 = vmatmul.mubr.f32.gmra.mrb[0].mxu0 %v16
  %v578 = vpop.f32.mrb[0].mxu0
  %v579 = vadd.f32 %v509, %v578
  %v580 = vpop.f32.mrb[0].mxu0
  %581 = vdwg.mxu0
  %582 = vmatprep.subr.mxu0 0.0
  %583 = vmatpush1.msra.mxu0 %v103
  %584 = vmatprep.subr.mxu0 0.0
  %585 = vmatpush1.msra.mxu0 %v104
  %586 = vmatprep.subr.mxu0 0.0
  %587 = vmatpush1.msra.mxu0 %v105
  %588 = vmatprep.subr.mxu0 0.0
  %589 = vmatpush1.msra.mxu0 %v106
  %590 = vmatprep.subr.mxu0 0.0
  %591 = vmatpush1.msra.mxu0 %v107
  %592 = vmatprep.subr.mxu0 0.0
  %593 = vmatpush1.msra.mxu0 %v108
  %594 = vmatprep.subr.mxu0 0.0
  %595 = vmatpush1.msra.mxu0 %v109
  %596 = vmatprep.subr.mxu0 0.0
  %597 = vmatpush1.msra.mxu0 %v110
  %598 = vmatprep.subr.mxu0 0.0
  %599 = vmatpush1.msra.mxu0 %v111
  %600 = vmatprep.subr.mxu0 0.0
  %601 = vmatpush1.msra.mxu0 %v112
  %602 = vmatprep.subr.mxu0 0.0
  %603 = vmatpush1.msra.mxu0 %v113
  %604 = vmatprep.subr.mxu0 0.0
  %605 = vmatpush1.msra.mxu0 %v114
  %606 = vmatprep.subr.mxu0 0.0
  %607 = vmatpush1.msra.mxu0 %v115
  %608 = vmatprep.subr.mxu0 0.0
  %609 = vmatpush1.msra.mxu0 %v116
  %610 = vmatprep.subr.mxu0 0.0
  %611 = vmatpush1.msra.mxu0 %v117
  %612 = vmatprep.subr.mxu0 0.0
  %613 = vmatpush1.msra.mxu0 %v118
  %614 = vmatprep.subr.mxu0 0.0
  %615 = vmatpush1.msra.mxu0 %v119
  %616 = vmatprep.subr.mxu0 0.0
  %617 = vmatpush1.msra.mxu0 %v120
  %618 = vmatprep.subr.mxu0 0.0
  %619 = vmatpush1.msra.mxu0 %v121
  %620 = vmatprep.subr.mxu0 0.0
  %621 = vmatpush1.msra.mxu0 %v122
  %622 = vmatprep.subr.mxu0 0.0
  %623 = vmatpush1.msra.mxu0 %v123
  %624 = vmatprep.subr.mxu0 0.0
  %625 = vmatpush1.msra.mxu0 %v124
  %626 = vmatprep.subr.mxu0 0.0
  %627 = vmatpush1.msra.mxu0 %v125
  %628 = vmatprep.subr.mxu0 0.0
  %629 = vmatpush1.msra.mxu0 %v126
  %630 = vmatprep.subr.mxu0 0.0
  %631 = vmatpush1.msra.mxu0 %v127
  %632 = vmatprep.subr.mxu0 0.0
  %633 = vmatpush1.msra.mxu0 %v128
  %634 = vmatprep.subr.mxu0 0.0
  %635 = vmatpush1.msra.mxu0 %v129
  %636 = vmatprep.subr.mxu0 0.0
  %637 = vmatpush1.msra.mxu0 %v130
  %638 = vmatprep.subr.mxu0 0.0
  %639 = vmatpush1.msra.mxu0 %v131
  %640 = vmatprep.subr.mxu0 0.0
  %641 = vmatpush1.msra.mxu0 %v132
  %642 = vmatprep.subr.mxu0 0.0
  %643 = vmatpush1.msra.mxu0 %v133
  %644 = vmatprep.subr.mxu0 0.0
  %645 = vmatpush1.msra.mxu0 %v134
  %646 = vmatprep.mubr.f32.mxu0 %v19
  %647 = vmatmul.mubr.f32.gmra.mrb[0].mxu0 %v18
  %v648 = vpop.f32.mrb[0].mxu0
  %v649 = vadd.f32 %v579, %v648
  %v650 = vpop.f32.mrb[0].mxu0
  %651 = vdwg.mxu0
  %652 = vmatprep.subr.mxu0 0.0
  %653 = vmatpush1.msra.mxu0 %v135
  %654 = vmatprep.subr.mxu0 0.0
  %655 = vmatpush1.msra.mxu0 %v136
  %656 = vmatprep.subr.mxu0 0.0
  %657 = vmatpush1.msra.mxu0 %v137
  %658 = vmatprep.subr.mxu0 0.0
  %659 = vmatpush1.msra.mxu0 %v138
  %660 = vmatprep.subr.mxu0 0.0
  %661 = vmatpush1.msra.mxu0 %v139
  %662 = vmatprep.subr.mxu0 0.0
  %663 = vmatpush1.msra.mxu0 %v140
  %664 = vmatprep.subr.mxu0 0.0
  %665 = vmatpush1.msra.mxu0 %v141
  %666 = vmatprep.subr.mxu0 0.0
  %667 = vmatpush1.msra.mxu0 %v142
  %668 = vmatprep.subr.mxu0 0.0
  %669 = vmatpush1.msra.mxu0 %v143
  %670 = vmatprep.subr.mxu0 0.0
  %671 = vmatpush1.msra.mxu0 %v144
  %672 = vmatprep.subr.mxu0 0.0
  %673 = vmatpush1.msra.mxu0 %v145
  %674 = vmatprep.subr.mxu0 0.0
  %675 = vmatpush1.msra.mxu0 %v146
  %676 = vmatprep.subr.mxu0 0.0
  %677 = vmatpush1.msra.mxu0 %v147
  %678 = vmatprep.subr.mxu0 0.0
  %679 = vmatpush1.msra.mxu0 %v148
  %680 = vmatprep.subr.mxu0 0.0
  %681 = vmatpush1.msra.mxu0 %v149
  %682 = vmatprep.subr.mxu0 0.0
  %683 = vmatpush1.msra.mxu0 %v150
  %684 = vmatprep.subr.mxu0 0.0
  %685 = vmatpush1.msra.mxu0 %v151
  %686 = vmatprep.subr.mxu0 0.0
  %687 = vmatpush1.msra.mxu0 %v152
  %688 = vmatprep.subr.mxu0 0.0
  %689 = vmatpush1.msra.mxu0 %v153
  %690 = vmatprep.subr.mxu0 0.0
  %691 = vmatpush1.msra.mxu0 %v154
  %692 = vmatprep.subr.mxu0 0.0
  %693 = vmatpush1.msra.mxu0 %v155
  %694 = vmatprep.subr.mxu0 0.0
  %695 = vmatpush1.msra.mxu0 %v156
  %696 = vmatprep.subr.mxu0 0.0
  %697 = vmatpush1.msra.mxu0 %v157
  %698 = vmatprep.subr.mxu0 0.0
  %699 = vmatpush1.msra.mxu0 %v158
  %700 = vmatprep.subr.mxu0 0.0
  %701 = vmatpush1.msra.mxu0 %v159
  %702 = vmatprep.subr.mxu0 0.0
  %703 = vmatpush1.msra.mxu0 %v160
  %704 = vmatprep.subr.mxu0 0.0
  %705 = vmatpush1.msra.mxu0 %v161
  %706 = vmatprep.subr.mxu0 0.0
  %707 = vmatpush1.msra.mxu0 %v162
  %708 = vmatprep.subr.mxu0 0.0
  %709 = vmatpush1.msra.mxu0 %v163
  %710 = vmatprep.subr.mxu0 0.0
  %711 = vmatpush1.msra.mxu0 %v164
  %712 = vmatprep.subr.mxu0 0.0
  %713 = vmatpush1.msra.mxu0 %v165
  %714 = vmatprep.subr.mxu0 0.0
  %715 = vmatpush1.msra.mxu0 %v166
  %716 = vmatprep.mubr.f32.mxu0 %v21
  %717 = vmatmul.mubr.f32.gmra.mrb[0].mxu0 %v20
  %v718 = vpop.f32.mrb[0].mxu0
  %v719 = vadd.f32 %v649, %v718
  %v720 = vpop.f32.mrb[0].mxu0
  %721 = vdwg.mxu0
  %722 = vmatprep.subr.mxu0 0.0
  %723 = vmatpush1.msra.mxu0 %v167
  %724 = vmatprep.subr.mxu0 0.0
  %725 = vmatpush1.msra.mxu0 %v168
  %726 = vmatprep.subr.mxu0 0.0
  %727 = vmatpush1.msra.mxu0 %v169
  %728 = vmatprep.subr.mxu0 0.0
  %729 = vmatpush1.msra.mxu0 %v170
  %730 = vmatprep.subr.mxu0 0.0
  %731 = vmatpush1.msra.mxu0 %v171
  %732 = vmatprep.subr.mxu0 0.0
  %733 = vmatpush1.msra.mxu0 %v172
  %734 = vmatprep.subr.mxu0 0.0
  %735 = vmatpush1.msra.mxu0 %v173
  %736 = vmatprep.subr.mxu0 0.0
  %737 = vmatpush1.msra.mxu0 %v174
  %738 = vmatprep.subr.mxu0 0.0
  %739 = vmatpush1.msra.mxu0 %v175
  %740 = vmatprep.subr.mxu0 0.0
  %741 = vmatpush1.msra.mxu0 %v176
  %742 = vmatprep.subr.mxu0 0.0
  %743 = vmatpush1.msra.mxu0 %v177
  %744 = vmatprep.subr.mxu0 0.0
  %745 = vmatpush1.msra.mxu0 %v178
  %746 = vmatprep.subr.mxu0 0.0
  %747 = vmatpush1.msra.mxu0 %v179
  %748 = vmatprep.subr.mxu0 0.0
  %749 = vmatpush1.msra.mxu0 %v180
  %750 = vmatprep.subr.mxu0 0.0
  %751 = vmatpush1.msra.mxu0 %v181
  %752 = vmatprep.subr.mxu0 0.0
  %753 = vmatpush1.msra.mxu0 %v182
  %754 = vmatprep.subr.mxu0 0.0
  %755 = vmatpush1.msra.mxu0 %v183
  %756 = vmatprep.subr.mxu0 0.0
  %757 = vmatpush1.msra.mxu0 %v184
  %758 = vmatprep.subr.mxu0 0.0
  %759 = vmatpush1.msra.mxu0 %v185
  %760 = vmatprep.subr.mxu0 0.0
  %761 = vmatpush1.msra.mxu0 %v186
  %762 = vmatprep.subr.mxu0 0.0
  %763 = vmatpush1.msra.mxu0 %v187
  %764 = vmatprep.subr.mxu0 0.0
  %765 = vmatpush1.msra.mxu0 %v188
  %766 = vmatprep.subr.mxu0 0.0
  %767 = vmatpush1.msra.mxu0 %v189
  %768 = vmatprep.subr.mxu0 0.0
  %769 = vmatpush1.msra.mxu0 %v190
  %770 = vmatprep.subr.mxu0 0.0
  %771 = vmatpush1.msra.mxu0 %v191
  %772 = vmatprep.subr.mxu0 0.0
  %773 = vmatpush1.msra.mxu0 %v192
  %774 = vmatprep.subr.mxu0 0.0
  %775 = vmatpush1.msra.mxu0 %v193
  %776 = vmatprep.subr.mxu0 0.0
  %777 = vmatpush1.msra.mxu0 %v194
  %778 = vmatprep.subr.mxu0 0.0
  %779 = vmatpush1.msra.mxu0 %v195
  %780 = vmatprep.subr.mxu0 0.0
  %781 = vmatpush1.msra.mxu0 %v196
  %782 = vmatprep.subr.mxu0 0.0
  %783 = vmatpush1.msra.mxu0 %v197
  %784 = vmatprep.subr.mxu0 0.0
  %785 = vmatpush1.msra.mxu0 %v198
  %786 = vmatprep.mubr.f32.mxu0 %v23
  %787 = vmatmul.mubr.f32.gmra.mrb[0].mxu0 %v22
  %v788 = vpop.f32.mrb[0].mxu0
  %v789 = vadd.f32 %v719, %v788
  %v790 = vpop.f32.mrb[0].mxu0
  %791 = vdwg.mxu0
  %792 = vmatprep.subr.mxu0 0.0
  %793 = vmatpush1.msra.mxu0 %v199
  %794 = vmatprep.subr.mxu0 0.0
  %795 = vmatpush1.msra.mxu0 %v200
  %796 = vmatprep.subr.mxu0 0.0
  %797 = vmatpush1.msra.mxu0 %v201
  %798 = vmatprep.subr.mxu0 0.0
  %799 = vmatpush1.msra.mxu0 %v202
  %800 = vmatprep.subr.mxu0 0.0
  %801 = vmatpush1.msra.mxu0 %v203
  %802 = vmatprep.subr.mxu0 0.0
  %803 = vmatpush1.msra.mxu0 %v204
  %804 = vmatprep.subr.mxu0 0.0
  %805 = vmatpush1.msra.mxu0 %v205
  %806 = vmatprep.subr.mxu0 0.0
  %807 = vmatpush1.msra.mxu0 %v206
  %808 = vmatprep.subr.mxu0 0.0
  %809 = vmatpush1.msra.mxu0 %v207
  %810 = vmatprep.subr.mxu0 0.0
  %811 = vmatpush1.msra.mxu0 %v208
  %812 = vmatprep.subr.mxu0 0.0
  %813 = vmatpush1.msra.mxu0 %v209
  %814 = vmatprep.subr.mxu0 0.0
  %815 = vmatpush1.msra.mxu0 %v210
  %816 = vmatprep.subr.mxu0 0.0
  %817 = vmatpush1.msra.mxu0 %v211
  %818 = vmatprep.subr.mxu0 0.0
  %819 = vmatpush1.msra.mxu0 %v212
  %820 = vmatprep.subr.mxu0 0.0
  %821 = vmatpush1.msra.mxu0 %v213
  %822 = vmatprep.subr.mxu0 0.0
  %823 = vmatpush1.msra.mxu0 %v214
  %824 = vmatprep.subr.mxu0 0.0
  %825 = vmatpush1.msra.mxu0 %v215
  %826 = vmatprep.subr.mxu0 0.0
  %827 = vmatpush1.msra.mxu0 %v216
  %828 = vmatprep.subr.mxu0 0.0
  %829 = vmatpush1.msra.mxu0 %v217
  %830 = vmatprep.subr.mxu0 0.0
  %831 = vmatpush1.msra.mxu0 %v218
  %832 = vmatprep.subr.mxu0 0.0
  %833 = vmatpush1.msra.mxu0 %v219
  %834 = vmatprep.subr.mxu0 0.0
  %835 = vmatpush1.msra.mxu0 %v220
  %836 = vmatprep.subr.mxu0 0.0
  %837 = vmatpush1.msra.mxu0 %v221
  %838 = vmatprep.subr.mxu0 0.0
  %839 = vmatpush1.msra.mxu0 %v222
  %840 = vmatprep.subr.mxu0 0.0
  %841 = vmatpush1.msra.mxu0 %v223
  %842 = vmatprep.subr.mxu0 0.0
  %843 = vmatpush1.msra.mxu0 %v224
  %844 = vmatprep.subr.mxu0 0.0
  %845 = vmatpush1.msra.mxu0 %v225
  %846 = vmatprep.subr.mxu0 0.0
  %847 = vmatpush1.msra.mxu0 %v226
  %848 = vmatprep.subr.mxu0 0.0
  %849 = vmatpush1.msra.mxu0 %v227
  %850 = vmatprep.subr.mxu0 0.0
  %851 = vmatpush1.msra.mxu0 %v228
  %852 = vmatprep.subr.mxu0 0.0
  %853 = vmatpush1.msra.mxu0 %v229
  %854 = vmatprep.subr.mxu0 0.0
  %855 = vmatpush1.msra.mxu0 %v230
  %856 = vmatprep.mubr.f32.mxu0 %v25
  %857 = vmatmul.mubr.f32.gmra.mrb[0].mxu0 %v24
  %v858 = vpop.f32.mrb[0].mxu0
  %v859 = vadd.f32 %v789, %v858
  %v860 = vpop.f32.mrb[0].mxu0
  %861 = vdwg.mxu0
  %862 = vmatprep.subr.mxu0 0.0
  %863 = vmatpush1.msra.mxu0 %v231
  %864 = vmatprep.subr.mxu0 0.0
  %865 = vmatpush1.msra.mxu0 %v232
  %866 = vmatprep.subr.mxu0 0.0
  %867 = vmatpush1.msra.mxu0 %v233
  %868 = vmatprep.subr.mxu0 0.0
  %869 = vmatpush1.msra.mxu0 %v234
  %870 = vmatprep.subr.mxu0 0.0
  %871 = vmatpush1.msra.mxu0 %v235
  %872 = vmatprep.subr.mxu0 0.0
  %873 = vmatpush1.msra.mxu0 %v236
  %874 = vmatprep.subr.mxu0 0.0
  %875 = vmatpush1.msra.mxu0 %v237
  %876 = vmatprep.subr.mxu0 0.0
  %877 = vmatpush1.msra.mxu0 %v238
  %878 = vmatprep.subr.mxu0 0.0
  %879 = vmatpush1.msra.mxu0 %v239
  %880 = vmatprep.subr.mxu0 0.0
  %881 = vmatpush1.msra.mxu0 %v240
  %882 = vmatprep.subr.mxu0 0.0
  %883 = vmatpush1.msra.mxu0 %v241
  %884 = vmatprep.subr.mxu0 0.0
  %885 = vmatpush1.msra.mxu0 %v242
  %886 = vmatprep.subr.mxu0 0.0
  %887 = vmatpush1.msra.mxu0 %v243
  %888 = vmatprep.subr.mxu0 0.0
  %889 = vmatpush1.msra.mxu0 %v244
  %890 = vmatprep.subr.mxu0 0.0
  %891 = vmatpush1.msra.mxu0 %v245
  %892 = vmatprep.subr.mxu0 0.0
  %893 = vmatpush1.msra.mxu0 %v246
  %894 = vmatprep.subr.mxu0 0.0
  %895 = vmatpush1.msra.mxu0 %v247
  %896 = vmatprep.subr.mxu0 0.0
  %897 = vmatpush1.msra.mxu0 %v248
  %898 = vmatprep.subr.mxu0 0.0
  %899 = vmatpush1.msra.mxu0 %v249
  %900 = vmatprep.subr.mxu0 0.0
  %901 = vmatpush1.msra.mxu0 %v250
  %902 = vmatprep.subr.mxu0 0.0
  %903 = vmatpush1.msra.mxu0 %v251
  %904 = vmatprep.subr.mxu0 0.0
  %905 = vmatpush1.msra.mxu0 %v252
  %906 = vmatprep.subr.mxu0 0.0
  %907 = vmatpush1.msra.mxu0 %v253
  %908 = vmatprep.subr.mxu0 0.0
  %909 = vmatpush1.msra.mxu0 %v254
  %910 = vmatprep.subr.mxu0 0.0
  %911 = vmatpush1.msra.mxu0 %v255
  %912 = vmatprep.subr.mxu0 0.0
  %913 = vmatpush1.msra.mxu0 %v256
  %914 = vmatprep.subr.mxu0 0.0
  %915 = vmatpush1.msra.mxu0 %v257
  %916 = vmatprep.subr.mxu0 0.0
  %917 = vmatpush1.msra.mxu0 %v258
  %918 = vmatprep.subr.mxu0 0.0
  %919 = vmatpush1.msra.mxu0 %v259
  %920 = vmatprep.subr.mxu0 0.0
  %921 = vmatpush1.msra.mxu0 %v260
  %922 = vmatprep.subr.mxu0 0.0
  %923 = vmatpush1.msra.mxu0 %v261
  %924 = vmatprep.subr.mxu0 0.0
  %925 = vmatpush1.msra.mxu0 %v262
  %926 = vmatprep.mubr.f32.mxu0 %v27
  %927 = vmatmul.mubr.f32.gmra.mrb[0].mxu0 %v26
  %v928 = vpop.f32.mrb[0].mxu0
  %v929 = vadd.f32 %v859, %v928
  %v930 = vpop.f32.mrb[0].mxu0
  %931 = vdwg.mxu0
  %932 = vmatprep.subr.mxu0 0.0
  %933 = vmatpush1.msra.mxu0 %v263
  %934 = vmatprep.subr.mxu0 0.0
  %935 = vmatpush1.msra.mxu0 %v264
  %936 = vmatprep.subr.mxu0 0.0
  %937 = vmatpush1.msra.mxu0 %v265
  %938 = vmatprep.subr.mxu0 0.0
  %939 = vmatpush1.msra.mxu0 %v266
  %940 = vmatprep.subr.mxu0 0.0
  %941 = vmatpush1.msra.mxu0 %v267
  %942 = vmatprep.subr.mxu0 0.0
  %943 = vmatpush1.msra.mxu0 %v268
  %944 = vmatprep.subr.mxu0 0.0
  %945 = vmatpush1.msra.mxu0 %v269
  %946 = vmatprep.subr.mxu0 0.0
  %947 = vmatpush1.msra.mxu0 %v270
  %948 = vmatprep.subr.mxu0 0.0
  %949 = vmatpush1.msra.mxu0 %v271
  %950 = vmatprep.subr.mxu0 0.0
  %951 = vmatpush1.msra.mxu0 %v272
  %952 = vmatprep.subr.mxu0 0.0
  %953 = vmatpush1.msra.mxu0 %v273
  %954 = vmatprep.subr.mxu0 0.0
  %955 = vmatpush1.msra.mxu0 %v274
  %956 = vmatprep.subr.mxu0 0.0
  %957 = vmatpush1.msra.mxu0 %v275
  %958 = vmatprep.subr.mxu0 0.0
  %959 = vmatpush1.msra.mxu0 %v276
  %960 = vmatprep.subr.mxu0 0.0
  %961 = vmatpush1.msra.mxu0 %v277
  %962 = vmatprep.subr.mxu0 0.0
  %963 = vmatpush1.msra.mxu0 %v278
  %964 = vmatprep.subr.mxu0 0.0
  %965 = vmatpush1.msra.mxu0 %v279
  %966 = vmatprep.subr.mxu0 0.0
  %967 = vmatpush1.msra.mxu0 %v280
  %968 = vmatprep.subr.mxu0 0.0
  %969 = vmatpush1.msra.mxu0 %v281
  %970 = vmatprep.subr.mxu0 0.0
  %971 = vmatpush1.msra.mxu0 %v282
  %972 = vmatprep.subr.mxu0 0.0
  %973 = vmatpush1.msra.mxu0 %v283
  %974 = vmatprep.subr.mxu0 0.0
  %975 = vmatpush1.msra.mxu0 %v284
  %976 = vmatprep.subr.mxu0 0.0
  %977 = vmatpush1.msra.mxu0 %v285
  %978 = vmatprep.subr.mxu0 0.0
  %979 = vmatpush1.msra.mxu0 %v286
  %980 = vmatprep.subr.mxu0 0.0
  %981 = vmatpush1.msra.mxu0 %v287
  %982 = vmatprep.subr.mxu0 0.0
  %983 = vmatpush1.msra.mxu0 %v288
  %984 = vmatprep.subr.mxu0 0.0
  %985 = vmatpush1.msra.mxu0 %v289
  %986 = vmatprep.subr.mxu0 0.0
  %987 = vmatpush1.msra.mxu0 %v290
  %988 = vmatprep.subr.mxu0 0.0
  %989 = vmatpush1.msra.mxu0 %v291
  %990 = vmatprep.subr.mxu0 0.0
  %991 = vmatpush1.msra.mxu0 %v292
  %992 = vmatprep.subr.mxu0 0.0
  %993 = vmatpush1.msra.mxu0 %v293
  %994 = vmatprep.subr.mxu0 0.0
  %995 = vmatpush1.msra.mxu0 %v294
  %996 = vmatprep.mubr.f32.mxu0 %v29
  %997 = vmatmul.mubr.f32.gmra.mrb[0].mxu0 %v28
  %v998 = vpop.f32.mrb[0].mxu0
  %v999 = vadd.f32 %v929, %v998
  %v1000 = vpop.f32.mrb[0].mxu0
  %1001 = vdwg.mxu0
  %1002 = vmatprep.subr.mxu0 0.0
  %1003 = vmatpush1.msra.mxu0 %v295
  %1004 = vmatprep.subr.mxu0 0.0
  %1005 = vmatpush1.msra.mxu0 %v296
  %1006 = vmatprep.subr.mxu0 0.0
  %1007 = vmatpush1.msra.mxu0 %v297
  %1008 = vmatprep.subr.mxu0 0.0
  %1009 = vmatpush1.msra.mxu0 %v298
  %1010 = vmatprep.subr.mxu0 0.0
  %1011 = vmatpush1.msra.mxu0 %v299
  %1012 = vmatprep.subr.mxu0 0.0
  %1013 = vmatpush1.msra.mxu0 %v300
  %1014 = vmatprep.subr.mxu0 0.0
  %1015 = vmatpush1.msra.mxu0 %v301
  %1016 = vmatprep.subr.mxu0 0.0
  %1017 = vmatpush1.msra.mxu0 %v302
  %1018 = vmatprep.subr.mxu0 0.0
  %1019 = vmatpush1.msra.mxu0 %v303
  %1020 = vmatprep.subr.mxu0 0.0
  %1021 = vmatpush1.msra.mxu0 %v304
  %1022 = vmatprep.subr.mxu0 0.0
  %1023 = vmatpush1.msra.mxu0 %v305
  %1024 = vmatprep.subr.mxu0 0.0
  %1025 = vmatpush1.msra.mxu0 %v306
  %1026 = vmatprep.subr.mxu0 0.0
  %1027 = vmatpush1.msra.mxu0 %v307
  %1028 = vmatprep.subr.mxu0 0.0
  %1029 = vmatpush1.msra.mxu0 %v308
  %1030 = vmatprep.subr.mxu0 0.0
  %1031 = vmatpush1.msra.mxu0 %v309
  %1032 = vmatprep.subr.mxu0 0.0
  %1033 = vmatpush1.msra.mxu0 %v310
  %1034 = vmatprep.subr.mxu0 0.0
  %1035 = vmatpush1.msra.mxu0 %v311
  %1036 = vmatprep.subr.mxu0 0.0
  %1037 = vmatpush1.msra.mxu0 %v312
  %1038 = vmatprep.subr.mxu0 0.0
  %1039 = vmatpush1.msra.mxu0 %v313
  %1040 = vmatprep.subr.mxu0 0.0
  %1041 = vmatpush1.msra.mxu0 %v314
  %1042 = vmatprep.subr.mxu0 0.0
  %1043 = vmatpush1.msra.mxu0 %v315
  %1044 = vmatprep.subr.mxu0 0.0
  %1045 = vmatpush1.msra.mxu0 %v316
  %1046 = vmatprep.subr.mxu0 0.0
  %1047 = vmatpush1.msra.mxu0 %v317
  %1048 = vmatprep.subr.mxu0 0.0
  %1049 = vmatpush1.msra.mxu0 %v318
  %1050 = vmatprep.subr.mxu0 0.0
  %1051 = vmatpush1.msra.mxu0 %v319
  %1052 = vmatprep.subr.mxu0 0.0
  %1053 = vmatpush1.msra.mxu0 %v320
  %1054 = vmatprep.subr.mxu0 0.0
  %1055 = vmatpush1.msra.mxu0 %v321
  %1056 = vmatprep.subr.mxu0 0.0
  %1057 = vmatpush1.msra.mxu0 %v322
  %1058 = vmatprep.subr.mxu0 0.0
  %1059 = vmatpush1.msra.mxu0 %v323
  %1060 = vmatprep.subr.mxu0 0.0
  %1061 = vmatpush1.msra.mxu0 %v324
  %1062 = vmatprep.subr.mxu0 0.0
  %1063 = vmatpush1.msra.mxu0 %v325
  %1064 = vmatprep.subr.mxu0 0.0
  %1065 = vmatpush1.msra.mxu0 %v326
  %1066 = vmatprep.mubr.f32.mxu0 %v31
  %1067 = vmatmul.mubr.f32.gmra.mrb[0].mxu0 %v30
  %v1068 = vpop.f32.mrb[0].mxu0
  %v1069 = vadd.f32 %v999, %v1068
  %v1070 = vpop.f32.mrb[0].mxu0
  %1071 = vdwg.mxu0
  %1072 = vmatprep.subr.mxu0 0.0
  %1073 = vmatpush1.msra.mxu0 %v327
  %1074 = vmatprep.subr.mxu0 0.0
  %1075 = vmatpush1.msra.mxu0 %v328
  %1076 = vmatprep.subr.mxu0 0.0
  %1077 = vmatpush1.msra.mxu0 %v329
  %1078 = vmatprep.subr.mxu0 0.0
  %1079 = vmatpush1.msra.mxu0 %v330
  %1080 = vmatprep.subr.mxu0 0.0
  %1081 = vmatpush1.msra.mxu0 %v331
  %1082 = vmatprep.subr.mxu0 0.0
  %1083 = vmatpush1.msra.mxu0 %v332
  %1084 = vmatprep.subr.mxu0 0.0
  %1085 = vmatpush1.msra.mxu0 %v333
  %1086 = vmatprep.subr.mxu0 0.0
  %1087 = vmatpush1.msra.mxu0 %v334
  %1088 = vmatprep.subr.mxu0 0.0
  %1089 = vmatpush1.msra.mxu0 %v335
  %1090 = vmatprep.subr.mxu0 0.0
  %1091 = vmatpush1.msra.mxu0 %v336
  %1092 = vmatprep.subr.mxu0 0.0
  %1093 = vmatpush1.msra.mxu0 %v337
  %1094 = vmatprep.subr.mxu0 0.0
  %1095 = vmatpush1.msra.mxu0 %v338
  %1096 = vmatprep.subr.mxu0 0.0
  %1097 = vmatpush1.msra.mxu0 %v339
  %1098 = vmatprep.subr.mxu0 0.0
  %1099 = vmatpush1.msra.mxu0 %v340
  %1100 = vmatprep.subr.mxu0 0.0
  %1101 = vmatpush1.msra.mxu0 %v341
  %1102 = vmatprep.subr.mxu0 0.0
  %1103 = vmatpush1.msra.mxu0 %v342
  %1104 = vmatprep.subr.mxu0 0.0
  %1105 = vmatpush1.msra.mxu0 %v343
  %1106 = vmatprep.subr.mxu0 0.0
  %1107 = vmatpush1.msra.mxu0 %v344
  %1108 = vmatprep.subr.mxu0 0.0
  %1109 = vmatpush1.msra.mxu0 %v345
  %1110 = vmatprep.subr.mxu0 0.0
  %1111 = vmatpush1.msra.mxu0 %v346
  %1112 = vmatprep.subr.mxu0 0.0
  %1113 = vmatpush1.msra.mxu0 %v347
  %1114 = vmatprep.subr.mxu0 0.0
  %1115 = vmatpush1.msra.mxu0 %v348
  %1116 = vmatprep.subr.mxu0 0.0
  %1117 = vmatpush1.msra.mxu0 %v349
  %1118 = vmatprep.subr.mxu0 0.0
  %1119 = vmatpush1.msra.mxu0 %v350
  %1120 = vmatprep.subr.mxu0 0.0
  %1121 = vmatpush1.msra.mxu0 %v351
  %1122 = vmatprep.subr.mxu0 0.0
  %1123 = vmatpush1.msra.mxu0 %v352
  %1124 = vmatprep.subr.mxu0 0.0
  %1125 = vmatpush1.msra.mxu0 %v353
  %1126 = vmatprep.subr.mxu0 0.0
  %1127 = vmatpush1.msra.mxu0 %v354
  %1128 = vmatprep.subr.mxu0 0.0
  %1129 = vmatpush1.msra.mxu0 %v355
  %1130 = vmatprep.subr.mxu0 0.0
  %1131 = vmatpush1.msra.mxu0 %v356
  %1132 = vmatprep.subr.mxu0 0.0
  %1133 = vmatpush1.msra.mxu0 %v357
  %1134 = vmatprep.subr.mxu0 0.0
  %1135 = vmatpush1.msra.mxu0 %v358
  %1136 = vmatprep.mubr.f32.mxu0 %v33
  %1137 = vmatmul.mubr.f32.gmra.mrb[0].mxu0 %v32
  %v1138 = vpop.f32.mrb[0].mxu0
  %v1139 = vadd.f32 %v1069, %v1138
  %v1140 = vpop.f32.mrb[0].mxu0
  %1141 = vdwg.mxu0
  %1142 = vmatprep.subr.mxu0 0.0
  %1143 = vmatpush1.msra.mxu0 %v359
  %1144 = vmatprep.subr.mxu0 0.0
  %1145 = vmatpush1.msra.mxu0 %v360
  %1146 = vmatprep.subr.mxu0 0.0
  %1147 = vmatpush1.msra.mxu0 %v361
  %1148 = vmatprep.subr.mxu0 0.0
  %1149 = vmatpush1.msra.mxu0 %v362
  %1150 = vmatprep.subr.mxu0 0.0
  %1151 = vmatpush1.msra.mxu0 %v363
  %1152 = vmatprep.subr.mxu0 0.0
  %1153 = vmatpush1.msra.mxu0 %v364
  %1154 = vmatprep.subr.mxu0 0.0
  %1155 = vmatpush1.msra.mxu0 %v365
  %1156 = vmatprep.subr.mxu0 0.0
  %1157 = vmatpush1.msra.mxu0 %v366
  %1158 = vmatprep.subr.mxu0 0.0
  %1159 = vmatpush1.msra.mxu0 %v367
  %1160 = vmatprep.subr.mxu0 0.0
  %1161 = vmatpush1.msra.mxu0 %v368
  %1162 = vmatprep.subr.mxu0 0.0
  %1163 = vmatpush1.msra.mxu0 %v369
  %1164 = vmatprep.subr.mxu0 0.0
  %1165 = vmatpush1.msra.mxu0 %v370
  %1166 = vmatprep.subr.mxu0 0.0
  %1167 = vmatpush1.msra.mxu0 %v371
  %1168 = vmatprep.subr.mxu0 0.0
  %1169 = vmatpush1.msra.mxu0 %v372
  %1170 = vmatprep.subr.mxu0 0.0
  %1171 = vmatpush1.msra.mxu0 %v373
  %1172 = vmatprep.subr.mxu0 0.0
  %1173 = vmatpush1.msra.mxu0 %v374
  %1174 = vmatprep.subr.mxu0 0.0
  %1175 = vmatpush1.msra.mxu0 %v375
  %1176 = vmatprep.subr.mxu0 0.0
  %1177 = vmatpush1.msra.mxu0 %v376
  %1178 = vmatprep.subr.mxu0 0.0
  %1179 = vmatpush1.msra.mxu0 %v377
  %1180 = vmatprep.subr.mxu0 0.0
  %1181 = vmatpush1.msra.mxu0 %v378
  %1182 = vmatprep.subr.mxu0 0.0
  %1183 = vmatpush1.msra.mxu0 %v379
  %1184 = vmatprep.subr.mxu0 0.0
  %1185 = vmatpush1.msra.mxu0 %v380
  %1186 = vmatprep.subr.mxu0 0.0
  %1187 = vmatpush1.msra.mxu0 %v381
  %1188 = vmatprep.subr.mxu0 0.0
  %1189 = vmatpush1.msra.mxu0 %v382
  %1190 = vmatprep.subr.mxu0 0.0
  %1191 = vmatpush1.msra.mxu0 %v383
  %1192 = vmatprep.subr.mxu0 0.0
  %1193 = vmatpush1.msra.mxu0 %v384
  %1194 = vmatprep.subr.mxu0 0.0
  %1195 = vmatpush1.msra.mxu0 %v385
  %1196 = vmatprep.subr.mxu0 0.0
  %1197 = vmatpush1.msra.mxu0 %v386
  %1198 = vmatprep.subr.mxu0 0.0
  %1199 = vmatpush1.msra.mxu0 %v387
  %1200 = vmatprep.subr.mxu0 0.0
  %1201 = vmatpush1.msra.mxu0 %v388
  %1202 = vmatprep.subr.mxu0 0.0
  %1203 = vmatpush1.msra.mxu0 %v389
  %1204 = vmatprep.subr.mxu0 0.0
  %1205 = vmatpush1.msra.mxu0 %v390
  %1206 = vmatprep.mubr.f32.mxu0 %v35
  %1207 = vmatmul.mubr.f32.gmra.mrb[0].mxu0 %v34
  %v1208 = vpop.f32.mrb[0].mxu0
  %v1209 = vadd.f32 %v1139, %v1208
  %v1210 = vpop.f32.mrb[0].mxu0
  %1211 = vdwg.mxu0
  %1212 = vmatprep.subr.mxu0 0.0
  %1213 = vmatpush1.msra.mxu0 %v391
  %1214 = vmatprep.subr.mxu0 0.0
  %1215 = vmatpush1.msra.mxu0 %v392
  %1216 = vmatprep.subr.mxu0 0.0
  %1217 = vmatpush1.msra.mxu0 %v393
  %1218 = vmatprep.subr.mxu0 0.0
  %1219 = vmatpush1.msra.mxu0 %v394
  %1220 = vmatprep.subr.mxu0 0.0
  %1221 = vmatpush1.msra.mxu0 %v395
  %1222 = vmatprep.subr.mxu0 0.0
  %1223 = vmatpush1.msra.mxu0 %v396
  %1224 = vmatprep.subr.mxu0 0.0
  %1225 = vmatpush1.msra.mxu0 %v397
  %1226 = vmatprep.subr.mxu0 0.0
  %1227 = vmatpush1.msra.mxu0 %v398
  %1228 = vmatprep.subr.mxu0 0.0
  %1229 = vmatpush1.msra.mxu0 %v399
  %1230 = vmatprep.subr.mxu0 0.0
  %1231 = vmatpush1.msra.mxu0 %v400
  %1232 = vmatprep.subr.mxu0 0.0
  %1233 = vmatpush1.msra.mxu0 %v401
  %1234 = vmatprep.subr.mxu0 0.0
  %1235 = vmatpush1.msra.mxu0 %v402
  %1236 = vmatprep.subr.mxu0 0.0
  %1237 = vmatpush1.msra.mxu0 %v403
  %1238 = vmatprep.subr.mxu0 0.0
  %1239 = vmatpush1.msra.mxu0 %v404
  %1240 = vmatprep.subr.mxu0 0.0
  %1241 = vmatpush1.msra.mxu0 %v405
  %1242 = vmatprep.subr.mxu0 0.0
  %1243 = vmatpush1.msra.mxu0 %v406
  %1244 = vmatprep.subr.mxu0 0.0
  %1245 = vmatpush1.msra.mxu0 %v407
  %1246 = vmatprep.subr.mxu0 0.0
  %1247 = vmatpush1.msra.mxu0 %v408
  %1248 = vmatprep.subr.mxu0 0.0
  %1249 = vmatpush1.msra.mxu0 %v409
  %1250 = vmatprep.subr.mxu0 0.0
  %1251 = vmatpush1.msra.mxu0 %v410
  %1252 = vmatprep.subr.mxu0 0.0
  %1253 = vmatpush1.msra.mxu0 %v411
  %1254 = vmatprep.subr.mxu0 0.0
  %1255 = vmatpush1.msra.mxu0 %v412
  %1256 = vmatprep.subr.mxu0 0.0
  %1257 = vmatpush1.msra.mxu0 %v413
  %1258 = vmatprep.subr.mxu0 0.0
  %1259 = vmatpush1.msra.mxu0 %v414
  %1260 = vmatprep.subr.mxu0 0.0
  %1261 = vmatpush1.msra.mxu0 %v415
  %1262 = vmatprep.subr.mxu0 0.0
  %1263 = vmatpush1.msra.mxu0 %v416
  %1264 = vmatprep.subr.mxu0 0.0
  %1265 = vmatpush1.msra.mxu0 %v417
  %1266 = vmatprep.subr.mxu0 0.0
  %1267 = vmatpush1.msra.mxu0 %v418
  %1268 = vmatprep.subr.mxu0 0.0
  %1269 = vmatpush1.msra.mxu0 %v419
  %1270 = vmatprep.subr.mxu0 0.0
  %1271 = vmatpush1.msra.mxu0 %v420
  %1272 = vmatprep.subr.mxu0 0.0
  %1273 = vmatpush1.msra.mxu0 %v421
  %1274 = vmatprep.subr.mxu0 0.0
  %1275 = vmatpush1.msra.mxu0 %v422
  %1276 = vmatprep.mubr.f32.mxu0 %v37
  %1277 = vmatmul.mubr.f32.gmra.mrb[0].mxu0 %v36
  %v1278 = vpop.f32.mrb[0].mxu0
  %v1279 = vadd.f32 %v1209, %v1278
  %v1280 = vpop.f32.mrb[0].mxu0
  %1281 = vdwg.mxu0
  %1282 = vmatprep.subr.mxu0 0.0
  %1283 = vmatpush1.msra.mxu0 %v423
  %1284 = vmatprep.subr.mxu0 0.0
  %1285 = vmatpush1.msra.mxu0 %v424
  %1286 = vmatprep.subr.mxu0 0.0
  %1287 = vmatpush1.msra.mxu0 %v425
  %1288 = vmatprep.subr.mxu0 0.0
  %1289 = vmatpush1.msra.mxu0 %v426
  %1290 = vmatprep.subr.mxu0 0.0
  %1291 = vmatpush1.msra.mxu0 %v427
  %1292 = vmatprep.subr.mxu0 0.0
  %1293 = vmatpush1.msra.mxu0 %v428
  %1294 = vmatprep.subr.mxu0 0.0
  %1295 = vmatpush1.msra.mxu0 %v429
  %1296 = vmatprep.subr.mxu0 0.0
  %1297 = vmatpush1.msra.mxu0 %v430
  %1298 = vmatprep.subr.mxu0 0.0
  %1299 = vmatpush1.msra.mxu0 0.0
  %1300 = vmatprep.subr.mxu0 0.0
  %1301 = vmatpush1.msra.mxu0 0.0
  %1302 = vmatprep.subr.mxu0 0.0
  %1303 = vmatpush1.msra.mxu0 0.0
  %1304 = vmatprep.subr.mxu0 0.0
  %1305 = vmatpush1.msra.mxu0 0.0
  %1306 = vmatprep.subr.mxu0 0.0
  %1307 = vmatpush1.msra.mxu0 0.0
  %1308 = vmatprep.subr.mxu0 0.0
  %1309 = vmatpush1.msra.mxu0 0.0
  %1310 = vmatprep.subr.mxu0 0.0
  %1311 = vmatpush1.msra.mxu0 0.0
  %1312 = vmatprep.subr.mxu0 0.0
  %1313 = vmatpush1.msra.mxu0 0.0
  %1314 = vmatprep.subr.mxu0 0.0
  %1315 = vmatpush1.msra.mxu0 0.0
  %1316 = vmatprep.subr.mxu0 0.0
  %1317 = vmatpush1.msra.mxu0 0.0
  %1318 = vmatprep.subr.mxu0 0.0
  %1319 = vmatpush1.msra.mxu0 0.0
  %1320 = vmatprep.subr.mxu0 0.0
  %1321 = vmatpush1.msra.mxu0 0.0
  %1322 = vmatprep.subr.mxu0 0.0
  %1323 = vmatpush1.msra.mxu0 0.0
  %1324 = vmatprep.subr.mxu0 0.0
  %1325 = vmatpush1.msra.mxu0 0.0
  %1326 = vmatprep.subr.mxu0 0.0
  %1327 = vmatpush1.msra.mxu0 0.0
  %1328 = vmatprep.subr.mxu0 0.0
  %1329 = vmatpush1.msra.mxu0 0.0
  %1330 = vmatprep.subr.mxu0 0.0
  %1331 = vmatpush1.msra.mxu0 0.0
  %1332 = vmatprep.subr.mxu0 0.0
  %1333 = vmatpush1.msra.mxu0 0.0
  %1334 = vmatprep.subr.mxu0 0.0
  %1335 = vmatpush1.msra.mxu0 0.0
  %1336 = vmatprep.subr.mxu0 0.0
  %1337 = vmatpush1.msra.mxu0 0.0
  %1338 = vmatprep.subr.mxu0 0.0
  %1339 = vmatpush1.msra.mxu0 0.0
  %1340 = vmatprep.subr.mxu0 0.0
  %1341 = vmatpush1.msra.mxu0 0.0
  %1342 = vmatprep.subr.mxu0 0.0
  %1343 = vmatpush1.msra.mxu0 0.0
  %1344 = vmatprep.subr.mxu0 0.0
  %1345 = vmatpush1.msra.mxu0 0.0
  %1346 = vmatprep.mubr.f32.mxu0 0.0
  %1347 = vmatmul.mubr.f32.gmra.mrb[0].mxu0 %v440
  %v1348 = vpop.f32.mrb[0].mxu0
  %v1349 = vadd.f32 %v1279, %v1348
  %v1350 = vpop.f32.mrb[0].mxu0
  %1351 = vdwg.mxu0
  %vm1352 = vcmask 80896
  %1353 = vst.msk [vmem:[%s3] sm:$0xff] %vm1352, %v1349
  // Predicated region
  $region14: #{cnn_forward.5} parent=0 // pred_check
    _
  $region15: #{cnn_forward.5} parent=0 // pred_check_branch
    %1355 = sbr.rel (0) target = $region17
  $region16: #{cnn_forward.5} parent=0 // pred_region
    _
  $region17: #{cnn_forward.5} parent=0 // pred_fallthru
    _
  // Predicated region
  $region18: #{cnn_forward.5} parent=0 // pred_check
    _
  $region19: #{cnn_forward.5} parent=0 // pred_check_branch
    %1357 = sbr.rel (0) target = $region21
  $region20: #{cnn_forward.5} parent=0 // pred_region
    _
  $region21: #{cnn_forward.5} parent=0 // pred_fallthru
    _

</llo_original>
